<compile_context>
chip_gen: v6e
topology: v6e:2x2x1
jax: 0.10.0
libtpu: 0.0.40
codegen_flags: <defaults>
</compile_context>

<pallas_src>
import functools

import numpy as np
import jax
import jax.numpy as jnp
from jax.experimental import pallas as pl
from jax.experimental.pallas import tpu as pltpu


# ----------------------------- kernel helpers --------------------------------
def _gn_lrelu(y, gmat, gamma, beta, cnt, eps, slope):
    """GroupNorm (affine) + LeakyReLU on one image's (P, C) f32 tile.

    Rows are reduced first; the per-group combine + broadcast back to channels
    is then a tiny (1,C)x(C,C) matmul with the block-diagonal ones matrix
    `gmat` (no Python loop over groups)."""
    s1 = jnp.sum(y, axis=0, keepdims=True)                        # (1, C)
    s2 = jnp.sum(y * y, axis=0, keepdims=True)                    # (1, C)
    gs1 = jnp.dot(s1, gmat, preferred_element_type=jnp.float32)   # group sums
    gs2 = jnp.dot(s2, gmat, preferred_element_type=jnp.float32)   # group sumsq
    inv = 1.0 / cnt
    mean = gs1 * inv
    var = gs2 * inv - mean * mean
    scale = jax.lax.rsqrt(var + eps) * gamma                      # (1, C)
    shift = beta - mean * scale                                    # (1, C)
    z = y * scale + shift
    return jnp.where(z >= 0, z, slope * z)                         # LeakyReLU(0.01)


def _conv3x3_acc(pad_ref, w_ref, bb, Ho, Wo, Ci):
    """3x3 'SAME' conv over the zero-padded (bb, Ho+2, Wo+2, Ci) VMEM scratch.

    At small channel counts the im2col packing stores cost more than the
    matmuls, so the conv is 9 accumulated shifted matmuls: each tap is a
    (bb*Ho*Wo, Ci) x (Ci, Cout) MXU push accumulated in f32."""
    acc = None
    for ky in range(3):
        for kx in range(3):
            t = ky * 3 + kx
            patch = pad_ref[:, ky:ky + Ho, kx:kx + Wo, :].reshape(bb * Ho * Wo, Ci)
            d = jnp.dot(patch, w_ref[t * Ci:(t + 1) * Ci, :],
                        preferred_element_type=jnp.float32)
            acc = d if acc is None else acc + d
    return acc                                                     # (bb*Ho*Wo, Cout)


def _zero_border(p_ref, bb, Ho, Wo, C):
    """Zero only the 1-element pad border; the interior is rewritten each step."""
    Hp, Wp = Ho + 2, Wo + 2
    p_ref[:, 0:1, :, :] = jnp.zeros((bb, 1, Wp, C), jnp.float32)
    p_ref[:, Hp - 1:Hp, :, :] = jnp.zeros((bb, 1, Wp, C), jnp.float32)
    p_ref[:, :, 0:1, :] = jnp.zeros((bb, Hp, 1, C), jnp.float32)
    p_ref[:, :, Wp - 1:Wp, :] = jnp.zeros((bb, Hp, 1, C), jnp.float32)


def _to_lane_dense(z, Ho, Wo, C):
    """(Ho*Wo, C) -> (Ho, Wo*C) via lane-axis concatenation.

    Avoids a minor-dim-changing reshape; the concat is a supported Mosaic op and
    yields full-width (Wo*C-lane) rows for unmasked stores / dense output DMA."""
    z3 = z.reshape(Ho, Wo, C)                                      # leading-dim split only
    return jnp.concatenate([z3[:, w, :] for w in range(Wo)], axis=-1)


# ------------------------------ fused kernel ---------------------------------
def _down_kernel(x_ref, w1_ref, g1_ref, b1_ref, gm1_ref,
                 w2_ref, g2_ref, b2_ref, gm2_ref,
                 o_ref, p1_ref, p2_ref,
                 *, bb, Ho, Wo, Cin, Cmid, Cout, groups, eps, slope):
    P = Ho * Wo

    # ---- MaxPool2d(2): x_ref is (bb, Ho, 2, Wo, 2*Cin) (free wrapper reshape) ----
    xh = jnp.maximum(x_ref[:, :, 0, :, :], x_ref[:, :, 1, :, :])   # pool H
    pooled = jnp.maximum(xh[..., :Cin], xh[..., Cin:])             # pool W -> (bb,Ho,Wo,Cin)
    pooled = pooled.astype(jnp.float32)

    # ---- zero-pad (pad=1): border-only fill, then interior write ----
    _zero_border(p1_ref, bb, Ho, Wo, Cin)
    p1_ref[:, 1:Ho + 1, 1:Wo + 1, :] = pooled

    # ---- conv1: 9 accumulated shifted matmuls (M = bb*Ho*Wo) ----
    y1 = _conv3x3_acc(p1_ref, w1_ref, bb, Ho, Wo, Cin)             # (bb*P, Cmid) f32

    # ---- GroupNorm1 + LeakyReLU (per image) -> padded scratch for conv2 ----
    _zero_border(p2_ref, bb, Ho, Wo, Cmid)
    cnt1 = float(P * (Cmid // groups))
    g1, b1, gm1 = g1_ref[...], b1_ref[...], gm1_ref[...]
    for b in range(bb):
        z1b = _gn_lrelu(y1[b * P:(b + 1) * P], gm1, g1, b1, cnt1, eps, slope)
        p2_ref[b:b + 1, 1:Ho + 1, 1:Wo + 1, :] = z1b.reshape(1, Ho, Wo, Cmid)

    # ---- conv2 + GroupNorm2 + LeakyReLU; lane-dense (Ho, Wo*Cout) output slab ----
    y2 = _conv3x3_acc(p2_ref, w2_ref, bb, Ho, Wo, Cmid)            # (bb*P, Cout) f32
    cnt2 = float(P * (Cout // groups))
    g2, b2, gm2 = g2_ref[...], b2_ref[...], gm2_ref[...]
    for b in range(bb):
        z2b = _gn_lrelu(y2[b * P:(b + 1) * P], gm2, g2, b2, cnt2, eps, slope)
        dense = _to_lane_dense(z2b, Ho, Wo, Cout)                  # (Ho, Wo*Cout)
        o_ref[b:b + 1, :, :] = dense[None, :, :].astype(o_ref.dtype)


# ------------------------------ public wrapper --------------------------------
def _group_mat(C, groups):
    gid = np.arange(C) // (C // groups)
    return jnp.asarray((gid[:, None] == gid[None, :]).astype(np.float32))


def _pick_batch_block(N, P, target_m=256, max_bb=8):
    """Largest divisor of N such that M = bb*P <= target_m, keeping >=2 grid
    steps whenever N >= 2 (so the 'parallel' axis spans both TCs on v7x)."""
    best = 1
    for d in range(1, min(N, max_bb) + 1):
        if N % d:
            continue
        if d > 1 and d * P > target_m:
            continue
        if N >= 2 and N // d < 2:
            continue
        best = d
    return best


@functools.partial(jax.jit, static_argnames=("groups", "eps", "slope"))
def down_forward(x_nchw, params, *, groups=8, eps=1e-5, slope=0.01):
    """Down(in_ch, out_ch): MaxPool2d(2) + DoubleConv. NCHW in, NCHW out."""
    N, Cin, H, W = x_nchw.shape
    Ho, Wo = H // 2, W // 2
    w1, w2 = params["w1"], params["w2"]
    Cmid, Cout = w1.shape[-1], w2.shape[-1]
    bb = _pick_batch_block(N, Ho * Wo)

    # NCHW -> NHWC, then a *free* contiguous reshape exposing the 2x2 pooling
    # window (h split into (Ho,2); the w-pair packed into the lane dim).
    x = jnp.transpose(x_nchw, (0, 2, 3, 1)).reshape(N, Ho, 2, Wo, 2 * Cin)

    # Conv weights as tap-major matrices: HWIO (3,3,Ci,Co) -> (9*Ci, Co).
    w1m = w1.astype(jnp.float32).reshape(9 * Cin, Cmid)
    w2m = w2.astype(jnp.float32).reshape(9 * Cmid, Cout)
    g1 = params["g1"].astype(jnp.float32).reshape(1, Cmid)
    b1 = params["b1"].astype(jnp.float32).reshape(1, Cmid)
    g2 = params["g2"].astype(jnp.float32).reshape(1, Cout)
    b2 = params["b2"].astype(jnp.float32).reshape(1, Cout)
    gm1 = _group_mat(Cmid, groups)
    gm2 = _group_mat(Cout, groups)

    kernel = functools.partial(
        _down_kernel, bb=bb, Ho=Ho, Wo=Wo, Cin=Cin, Cmid=Cmid, Cout=Cout,
        groups=groups, eps=eps, slope=slope)

    out = pl.pallas_call(
        kernel,
        # Lane-dense output layout: (N, Ho, Wo*Cout); a free reshape below
        # recovers NHWC before the final transpose.
        out_shape=jax.ShapeDtypeStruct((N, Ho, Wo * Cout), x_nchw.dtype),
        grid=(N // bb,),
        in_specs=[
            pl.BlockSpec((bb, Ho, 2, Wo, 2 * Cin), lambda n: (n, 0, 0, 0, 0)),
            pl.BlockSpec((9 * Cin, Cmid), lambda n: (0, 0)),
            pl.BlockSpec((1, Cmid), lambda n: (0, 0)),
            pl.BlockSpec((1, Cmid), lambda n: (0, 0)),
            pl.BlockSpec((Cmid, Cmid), lambda n: (0, 0)),
            pl.BlockSpec((9 * Cmid, Cout), lambda n: (0, 0)),
            pl.BlockSpec((1, Cout), lambda n: (0, 0)),
            pl.BlockSpec((1, Cout), lambda n: (0, 0)),
            pl.BlockSpec((Cout, Cout), lambda n: (0, 0)),
        ],
        out_specs=pl.BlockSpec((bb, Ho, Wo * Cout), lambda n: (n, 0, 0)),
        scratch_shapes=[
            pltpu.VMEM((bb, Ho + 2, Wo + 2, Cin), jnp.float32),    # padded pooled input
            pltpu.VMEM((bb, Ho + 2, Wo + 2, Cmid), jnp.float32),   # padded conv1 output
        ],
        compiler_params=pltpu.CompilerParams(
            dimension_semantics=("parallel",),       # batch axis -> both TCs on v7x
            vmem_limit_bytes=48 * 1024 * 1024),      # explicit, < v7x 64 MiB physical
    )(x, w1m, g1, b1, gm1, w2m, g2, b2, gm2)

    # Free reshape back to NHWC, then NCHW.
    return jnp.transpose(out.reshape(N, Ho, Wo, Cout), (0, 3, 1, 2))


# --------------------------- pure-JAX reference -------------------------------
def _ref_gn_lrelu(x, gamma, beta, groups=8, eps=1e-5, slope=0.01):
    N, H, W, C = x.shape
    g = C // groups
    xg = x.reshape(N, H, W, groups, g)
    mean = xg.mean(axis=(1, 2, 4), keepdims=True)
    var = ((xg - mean) ** 2).mean(axis=(1, 2, 4), keepdims=True)
    xn = ((xg - mean) / jnp.sqrt(var + eps)).reshape(N, H, W, C)
    xn = xn * gamma + beta
    return jnp.where(xn >= 0, xn, slope * xn)


def _ref_down(x_nchw, p):
    x = jnp.transpose(x_nchw, (0, 2, 3, 1))
    N, H, W, C = x.shape
    x = x.reshape(N, H // 2, 2, W // 2, 2, C).max(axis=(2, 4))
    conv = lambda a, w: jax.lax.conv_general_dilated(
        a, w, window_strides=(1, 1), padding="SAME",
        dimension_numbers=("NHWC", "HWIO", "NHWC"),
        precision=jax.lax.Precision.HIGHEST)
    x = _ref_gn_lrelu(conv(x, p["w1"]), p["g1"], p["b1"])
    x = _ref_gn_lrelu(conv(x, p["w2"]), p["g2"], p["b2"])
    return jnp.transpose(x, (0, 3, 1, 2))


if __name__ == "__main__":
    key = jax.random.PRNGKey(0)
    # N=4 exercises the batch-folding path (bb=2 -> grid of 2 steps).
    N, Cin, Cout, H, W = 4, 8, 16, 16, 16                          # mid = out = 16
    ks = jax.random.split(key, 7)
    x = jax.random.normal(ks[0], (N, Cin, H, W), jnp.float32)
    params = {
        "w1": 0.1 * jax.random.normal(ks[1], (3, 3, Cin, Cout), jnp.float32),
        "g1": 1.0 + 0.1 * jax.random.normal(ks[2], (Cout,), jnp.float32),
        "b1": 0.1 * jax.random.normal(ks[3], (Cout,), jnp.float32),
        "w2": 0.1 * jax.random.normal(ks[4], (3, 3, Cout, Cout), jnp.float32),
        "g2": 1.0 + 0.1 * jax.random.normal(ks[5], (Cout,), jnp.float32),
        "b2": 0.1 * jax.random.normal(ks[6], (Cout,), jnp.float32),
    }

    out = jax.block_until_ready(down_forward(x, params))
    ref = jax.block_until_ready(_ref_down(x, params))

    assert out.shape == (N, Cout, H // 2, W // 2), out.shape
    err = float(jnp.max(jnp.abs(out - ref)))
    assert jnp.allclose(out, ref, atol=1e-3, rtol=1e-3), f"max abs err {err}"
    print("KERNEL_OK")
</pallas_src>

<mosaic_0001>
module attributes {stable_mosaic.version = 11 : i64} {
  func.func @_down_kernel(%arg0: i32, %arg1: memref<2x8x2x8x16xf32, #tpu.memory_space<vmem>>, %arg2: memref<72x16xf32, #tpu.memory_space<vmem>>, %arg3: memref<1x16xf32, #tpu.memory_space<vmem>>, %arg4: memref<1x16xf32, #tpu.memory_space<vmem>>, %arg5: memref<16x16xf32, #tpu.memory_space<vmem>>, %arg6: memref<144x16xf32, #tpu.memory_space<vmem>>, %arg7: memref<1x16xf32, #tpu.memory_space<vmem>>, %arg8: memref<1x16xf32, #tpu.memory_space<vmem>>, %arg9: memref<16x16xf32, #tpu.memory_space<vmem>>, %arg10: memref<2x8x128xf32, #tpu.memory_space<vmem>>, %arg11: memref<2x10x10x8xf32, #tpu.memory_space<vmem>>, %arg12: memref<2x10x10x16xf32, #tpu.memory_space<vmem>>) attributes {dimension_semantics = [#tpu.dimension_semantics<parallel>], iteration_bounds = array<i64: 2>, scalar_prefetch = 0 : i64, scratch_operands = 2 : i64, tpu.core_type = #tpu.core_type<tc>, window_params = [{transform_indices = @transform_0, window_bounds = array<i64: 2, 8, 2, 8, 16>}, {pipeline_mode = #tpu.pipeline_mode<synchronous>, transform_indices = @transform_1, window_bounds = array<i64: 72, 16>}, {pipeline_mode = #tpu.pipeline_mode<synchronous>, transform_indices = @transform_2, window_bounds = array<i64: 1, 16>}, {pipeline_mode = #tpu.pipeline_mode<synchronous>, transform_indices = @transform_3, window_bounds = array<i64: 1, 16>}, {pipeline_mode = #tpu.pipeline_mode<synchronous>, transform_indices = @transform_4, window_bounds = array<i64: 16, 16>}, {pipeline_mode = #tpu.pipeline_mode<synchronous>, transform_indices = @transform_5, window_bounds = array<i64: 144, 16>}, {pipeline_mode = #tpu.pipeline_mode<synchronous>, transform_indices = @transform_6, window_bounds = array<i64: 1, 16>}, {pipeline_mode = #tpu.pipeline_mode<synchronous>, transform_indices = @transform_7, window_bounds = array<i64: 1, 16>}, {pipeline_mode = #tpu.pipeline_mode<synchronous>, transform_indices = @transform_8, window_bounds = array<i64: 16, 16>}, {transform_indices = @transform_9, window_bounds = array<i64: 2, 8, 128>}]} {
    %c0 = arith.constant 0 : index
    %c0_0 = arith.constant 0 : index
    %c0_1 = arith.constant 0 : index
    %c0_2 = arith.constant 0 : index
    %c0_3 = arith.constant 0 : index
    %0 = vector.load %arg1[%c0, %c0_0, %c0_1, %c0_2, %c0_3] : memref<2x8x2x8x16xf32, #tpu.memory_space<vmem>>, vector<2x8x1x8x16xf32>
    %1 = vector.shape_cast %0 : vector<2x8x1x8x16xf32> to vector<2x8x8x16xf32>
    %c0_4 = arith.constant 0 : index
    %c0_5 = arith.constant 0 : index
    %c1 = arith.constant 1 : index
    %c0_6 = arith.constant 0 : index
    %c0_7 = arith.constant 0 : index
    %2 = vector.load %arg1[%c0_4, %c0_5, %c1, %c0_6, %c0_7] : memref<2x8x2x8x16xf32, #tpu.memory_space<vmem>>, vector<2x8x1x8x16xf32>
    %3 = vector.shape_cast %2 : vector<2x8x1x8x16xf32> to vector<2x8x8x16xf32>
    %4 = arith.maximumf %1, %3 : vector<2x8x8x16xf32>
    %5 = vector.extract_strided_slice %4 {offsets = [0, 0, 0, 0], sizes = [2, 8, 8, 8], strides = [1, 1, 1, 1]} : vector<2x8x8x16xf32> to vector<2x8x8x8xf32>
    %6 = vector.extract_strided_slice %4 {offsets = [0, 0, 0, 8], sizes = [2, 8, 8, 8], strides = [1, 1, 1, 1]} : vector<2x8x8x16xf32> to vector<2x8x8x8xf32>
    %7 = arith.maximumf %5, %6 : vector<2x8x8x8xf32>
    %cst = arith.constant 0.000000e+00 : f32
    %8 = vector.broadcast %cst : f32 to vector<2x1x10x8xf32>
    %c0_8 = arith.constant 0 : index
    %c0_9 = arith.constant 0 : index
    %c0_10 = arith.constant 0 : index
    %c0_11 = arith.constant 0 : index
    %9 = vector.load %arg11[%c0_8, %c0_9, %c0_10, %c0_11] : memref<2x10x10x8xf32, #tpu.memory_space<vmem>>, vector<2x1x10x8xf32>
    tpu.vector_store %arg11[%c0_8, %c0_9, %c0_10, %c0_11], %8 {strides = array<i32>} : memref<2x10x10x8xf32, #tpu.memory_space<vmem>>, vector<2x1x10x8xf32>,
    %cst_12 = arith.constant 0.000000e+00 : f32
    %10 = vector.broadcast %cst_12 : f32 to vector<2x1x10x8xf32>
    %c0_13 = arith.constant 0 : index
    %c9 = arith.constant 9 : index
    %c0_14 = arith.constant 0 : index
    %c0_15 = arith.constant 0 : index
    %11 = vector.load %arg11[%c0_13, %c9, %c0_14, %c0_15] : memref<2x10x10x8xf32, #tpu.memory_space<vmem>>, vector<2x1x10x8xf32>
    tpu.vector_store %arg11[%c0_13, %c9, %c0_14, %c0_15], %10 {strides = array<i32>} : memref<2x10x10x8xf32, #tpu.memory_space<vmem>>, vector<2x1x10x8xf32>,
    %cst_16 = arith.constant 0.000000e+00 : f32
    %12 = vector.broadcast %cst_16 : f32 to vector<2x10x1x8xf32>
    %c0_17 = arith.constant 0 : index
    %c0_18 = arith.constant 0 : index
    %c0_19 = arith.constant 0 : index
    %c0_20 = arith.constant 0 : index
    %13 = vector.load %arg11[%c0_17, %c0_18, %c0_19, %c0_20] : memref<2x10x10x8xf32, #tpu.memory_space<vmem>>, vector<2x10x1x8xf32>
    tpu.vector_store %arg11[%c0_17, %c0_18, %c0_19, %c0_20], %12 {strides = array<i32>} : memref<2x10x10x8xf32, #tpu.memory_space<vmem>>, vector<2x10x1x8xf32>,
    %cst_21 = arith.constant 0.000000e+00 : f32
    %14 = vector.broadcast %cst_21 : f32 to vector<2x10x1x8xf32>
    %c0_22 = arith.constant 0 : index
    %c0_23 = arith.constant 0 : index
    %c9_24 = arith.constant 9 : index
    %c0_25 = arith.constant 0 : index
    %15 = vector.load %arg11[%c0_22, %c0_23, %c9_24, %c0_25] : memref<2x10x10x8xf32, #tpu.memory_space<vmem>>, vector<2x10x1x8xf32>
    tpu.vector_store %arg11[%c0_22, %c0_23, %c9_24, %c0_25], %14 {strides = array<i32>} : memref<2x10x10x8xf32, #tpu.memory_space<vmem>>, vector<2x10x1x8xf32>,
    %c0_26 = arith.constant 0 : index
    %c1_27 = arith.constant 1 : index
    %c1_28 = arith.constant 1 : index
    %c0_29 = arith.constant 0 : index
    %16 = vector.load %arg11[%c0_26, %c1_27, %c1_28, %c0_29] : memref<2x10x10x8xf32, #tpu.memory_space<vmem>>, vector<2x8x8x8xf32>
    tpu.vector_store %arg11[%c0_26, %c1_27, %c1_28, %c0_29], %7 {strides = array<i32>} : memref<2x10x10x8xf32, #tpu.memory_space<vmem>>, vector<2x8x8x8xf32>,
    %c0_30 = arith.constant 0 : index
    %c0_31 = arith.constant 0 : index
    %c0_32 = arith.constant 0 : index
    %c0_33 = arith.constant 0 : index
    %17 = vector.load %arg11[%c0_30, %c0_31, %c0_32, %c0_33] : memref<2x10x10x8xf32, #tpu.memory_space<vmem>>, vector<2x8x8x8xf32>
    %18 = vector.shape_cast %17 : vector<2x8x8x8xf32> to vector<128x8xf32>
    %c0_34 = arith.constant 0 : index
    %c0_35 = arith.constant 0 : index
    %19 = vector.load %arg2[%c0_34, %c0_35] : memref<72x16xf32, #tpu.memory_space<vmem>>, vector<8x16xf32>
    %cst_36 = arith.constant dense<0.000000e+00> : vector<128x16xf32>
    %20 = tpu.matmul %18, %19, %cst_36 {dimension_numbers = #tpu.dot_dimension_numbers<[1], [0], [0], [1], [0, 0, 1, 1], [], []>} : vector<128x8xf32>, vector<8x16xf32>, vector<128x16xf32> -> vector<128x16xf32>
    %c0_37 = arith.constant 0 : index
    %c0_38 = arith.constant 0 : index
    %c1_39 = arith.constant 1 : index
    %c0_40 = arith.constant 0 : index
    %21 = vector.load %arg11[%c0_37, %c0_38, %c1_39, %c0_40] : memref<2x10x10x8xf32, #tpu.memory_space<vmem>>, vector<2x8x8x8xf32>
    %22 = vector.shape_cast %21 : vector<2x8x8x8xf32> to vector<128x8xf32>
    %c8 = arith.constant 8 : index
    %c0_41 = arith.constant 0 : index
    %23 = vector.load %arg2[%c8, %c0_41] : memref<72x16xf32, #tpu.memory_space<vmem>>, vector<8x16xf32>
    %cst_42 = arith.constant dense<0.000000e+00> : vector<128x16xf32>
    %24 = tpu.matmul %22, %23, %cst_42 {dimension_numbers = #tpu.dot_dimension_numbers<[1], [0], [0], [1], [0, 0, 1, 1], [], []>} : vector<128x8xf32>, vector<8x16xf32>, vector<128x16xf32> -> vector<128x16xf32>
    %25 = arith.addf %20, %24 : vector<128x16xf32>
    %c0_43 = arith.constant 0 : index
    %c0_44 = arith.constant 0 : index
    %c2 = arith.constant 2 : index
    %c0_45 = arith.constant 0 : index
    %26 = vector.load %arg11[%c0_43, %c0_44, %c2, %c0_45] : memref<2x10x10x8xf32, #tpu.memory_space<vmem>>, vector<2x8x8x8xf32>
    %27 = vector.shape_cast %26 : vector<2x8x8x8xf32> to vector<128x8xf32>
    %c16 = arith.constant 16 : index
    %c0_46 = arith.constant 0 : index
    %28 = vector.load %arg2[%c16, %c0_46] : memref<72x16xf32, #tpu.memory_space<vmem>>, vector<8x16xf32>
    %cst_47 = arith.constant dense<0.000000e+00> : vector<128x16xf32>
    %29 = tpu.matmul %27, %28, %cst_47 {dimension_numbers = #tpu.dot_dimension_numbers<[1], [0], [0], [1], [0, 0, 1, 1], [], []>} : vector<128x8xf32>, vector<8x16xf32>, vector<128x16xf32> -> vector<128x16xf32>
    %30 = arith.addf %25, %29 : vector<128x16xf32>
    %c0_48 = arith.constant 0 : index
    %c1_49 = arith.constant 1 : index
    %c0_50 = arith.constant 0 : index
    %c0_51 = arith.constant 0 : index
    %31 = vector.load %arg11[%c0_48, %c1_49, %c0_50, %c0_51] : memref<2x10x10x8xf32, #tpu.memory_space<vmem>>, vector<2x8x8x8xf32>
    %32 = vector.shape_cast %31 : vector<2x8x8x8xf32> to vector<128x8xf32>
    %c24 = arith.constant 24 : index
    %c0_52 = arith.constant 0 : index
    %33 = vector.load %arg2[%c24, %c0_52] : memref<72x16xf32, #tpu.memory_space<vmem>>, vector<8x16xf32>
    %cst_53 = arith.constant dense<0.000000e+00> : vector<128x16xf32>
    %34 = tpu.matmul %32, %33, %cst_53 {dimension_numbers = #tpu.dot_dimension_numbers<[1], [0], [0], [1], [0, 0, 1, 1], [], []>} : vector<128x8xf32>, vector<8x16xf32>, vector<128x16xf32> -> vector<128x16xf32>
    %35 = arith.addf %30, %34 : vector<128x16xf32>
    %c0_54 = arith.constant 0 : index
    %c1_55 = arith.constant 1 : index
    %c1_56 = arith.constant 1 : index
    %c0_57 = arith.constant 0 : index
    %36 = vector.load %arg11[%c0_54, %c1_55, %c1_56, %c0_57] : memref<2x10x10x8xf32, #tpu.memory_space<vmem>>, vector<2x8x8x8xf32>
    %37 = vector.shape_cast %36 : vector<2x8x8x8xf32> to vector<128x8xf32>
    %c32 = arith.constant 32 : index
    %c0_58 = arith.constant 0 : index
    %38 = vector.load %arg2[%c32, %c0_58] : memref<72x16xf32, #tpu.memory_space<vmem>>, vector<8x16xf32>
    %cst_59 = arith.constant dense<0.000000e+00> : vector<128x16xf32>
    %39 = tpu.matmul %37, %38, %cst_59 {dimension_numbers = #tpu.dot_dimension_numbers<[1], [0], [0], [1], [0, 0, 1, 1], [], []>} : vector<128x8xf32>, vector<8x16xf32>, vector<128x16xf32> -> vector<128x16xf32>
    %40 = arith.addf %35, %39 : vector<128x16xf32>
    %c0_60 = arith.constant 0 : index
    %c1_61 = arith.constant 1 : index
    %c2_62 = arith.constant 2 : index
    %c0_63 = arith.constant 0 : index
    %41 = vector.load %arg11[%c0_60, %c1_61, %c2_62, %c0_63] : memref<2x10x10x8xf32, #tpu.memory_space<vmem>>, vector<2x8x8x8xf32>
    %42 = vector.shape_cast %41 : vector<2x8x8x8xf32> to vector<128x8xf32>
    %c40 = arith.constant 40 : index
    %c0_64 = arith.constant 0 : index
    %43 = vector.load %arg2[%c40, %c0_64] : memref<72x16xf32, #tpu.memory_space<vmem>>, vector<8x16xf32>
    %cst_65 = arith.constant dense<0.000000e+00> : vector<128x16xf32>
    %44 = tpu.matmul %42, %43, %cst_65 {dimension_numbers = #tpu.dot_dimension_numbers<[1], [0], [0], [1], [0, 0, 1, 1], [], []>} : vector<128x8xf32>, vector<8x16xf32>, vector<128x16xf32> -> vector<128x16xf32>
    %45 = arith.addf %40, %44 : vector<128x16xf32>
    %c0_66 = arith.constant 0 : index
    %c2_67 = arith.constant 2 : index
    %c0_68 = arith.constant 0 : index
    %c0_69 = arith.constant 0 : index
    %46 = vector.load %arg11[%c0_66, %c2_67, %c0_68, %c0_69] : memref<2x10x10x8xf32, #tpu.memory_space<vmem>>, vector<2x8x8x8xf32>
    %47 = vector.shape_cast %46 : vector<2x8x8x8xf32> to vector<128x8xf32>
    %c48 = arith.constant 48 : index
    %c0_70 = arith.constant 0 : index
    %48 = vector.load %arg2[%c48, %c0_70] : memref<72x16xf32, #tpu.memory_space<vmem>>, vector<8x16xf32>
    %cst_71 = arith.constant dense<0.000000e+00> : vector<128x16xf32>
    %49 = tpu.matmul %47, %48, %cst_71 {dimension_numbers = #tpu.dot_dimension_numbers<[1], [0], [0], [1], [0, 0, 1, 1], [], []>} : vector<128x8xf32>, vector<8x16xf32>, vector<128x16xf32> -> vector<128x16xf32>
    %50 = arith.addf %45, %49 : vector<128x16xf32>
    %c0_72 = arith.constant 0 : index
    %c2_73 = arith.constant 2 : index
    %c1_74 = arith.constant 1 : index
    %c0_75 = arith.constant 0 : index
    %51 = vector.load %arg11[%c0_72, %c2_73, %c1_74, %c0_75] : memref<2x10x10x8xf32, #tpu.memory_space<vmem>>, vector<2x8x8x8xf32>
    %52 = vector.shape_cast %51 : vector<2x8x8x8xf32> to vector<128x8xf32>
    %c56 = arith.constant 56 : index
    %c0_76 = arith.constant 0 : index
    %53 = vector.load %arg2[%c56, %c0_76] : memref<72x16xf32, #tpu.memory_space<vmem>>, vector<8x16xf32>
    %cst_77 = arith.constant dense<0.000000e+00> : vector<128x16xf32>
    %54 = tpu.matmul %52, %53, %cst_77 {dimension_numbers = #tpu.dot_dimension_numbers<[1], [0], [0], [1], [0, 0, 1, 1], [], []>} : vector<128x8xf32>, vector<8x16xf32>, vector<128x16xf32> -> vector<128x16xf32>
    %55 = arith.addf %50, %54 : vector<128x16xf32>
    %c0_78 = arith.constant 0 : index
    %c2_79 = arith.constant 2 : index
    %c2_80 = arith.constant 2 : index
    %c0_81 = arith.constant 0 : index
    %56 = vector.load %arg11[%c0_78, %c2_79, %c2_80, %c0_81] : memref<2x10x10x8xf32, #tpu.memory_space<vmem>>, vector<2x8x8x8xf32>
    %57 = vector.shape_cast %56 : vector<2x8x8x8xf32> to vector<128x8xf32>
    %c64 = arith.constant 64 : index
    %c0_82 = arith.constant 0 : index
    %58 = vector.load %arg2[%c64, %c0_82] : memref<72x16xf32, #tpu.memory_space<vmem>>, vector<8x16xf32>
    %cst_83 = arith.constant dense<0.000000e+00> : vector<128x16xf32>
    %59 = tpu.matmul %57, %58, %cst_83 {dimension_numbers = #tpu.dot_dimension_numbers<[1], [0], [0], [1], [0, 0, 1, 1], [], []>} : vector<128x8xf32>, vector<8x16xf32>, vector<128x16xf32> -> vector<128x16xf32>
    %60 = arith.addf %55, %59 : vector<128x16xf32>
    %cst_84 = arith.constant 0.000000e+00 : f32
    %61 = vector.broadcast %cst_84 : f32 to vector<2x1x10x16xf32>
    %c0_85 = arith.constant 0 : index
    %c0_86 = arith.constant 0 : index
    %c0_87 = arith.constant 0 : index
    %c0_88 = arith.constant 0 : index
    %62 = vector.load %arg12[%c0_85, %c0_86, %c0_87, %c0_88] : memref<2x10x10x16xf32, #tpu.memory_space<vmem>>, vector<2x1x10x16xf32>
    tpu.vector_store %arg12[%c0_85, %c0_86, %c0_87, %c0_88], %61 {strides = array<i32>} : memref<2x10x10x16xf32, #tpu.memory_space<vmem>>, vector<2x1x10x16xf32>,
    %cst_89 = arith.constant 0.000000e+00 : f32
    %63 = vector.broadcast %cst_89 : f32 to vector<2x1x10x16xf32>
    %c0_90 = arith.constant 0 : index
    %c9_91 = arith.constant 9 : index
    %c0_92 = arith.constant 0 : index
    %c0_93 = arith.constant 0 : index
    %64 = vector.load %arg12[%c0_90, %c9_91, %c0_92, %c0_93] : memref<2x10x10x16xf32, #tpu.memory_space<vmem>>, vector<2x1x10x16xf32>
    tpu.vector_store %arg12[%c0_90, %c9_91, %c0_92, %c0_93], %63 {strides = array<i32>} : memref<2x10x10x16xf32, #tpu.memory_space<vmem>>, vector<2x1x10x16xf32>,
    %cst_94 = arith.constant 0.000000e+00 : f32
    %65 = vector.broadcast %cst_94 : f32 to vector<2x10x1x16xf32>
    %c0_95 = arith.constant 0 : index
    %c0_96 = arith.constant 0 : index
    %c0_97 = arith.constant 0 : index
    %c0_98 = arith.constant 0 : index
    %66 = vector.load %arg12[%c0_95, %c0_96, %c0_97, %c0_98] : memref<2x10x10x16xf32, #tpu.memory_space<vmem>>, vector<2x10x1x16xf32>
    tpu.vector_store %arg12[%c0_95, %c0_96, %c0_97, %c0_98], %65 {strides = array<i32>} : memref<2x10x10x16xf32, #tpu.memory_space<vmem>>, vector<2x10x1x16xf32>,
    %cst_99 = arith.constant 0.000000e+00 : f32
    %67 = vector.broadcast %cst_99 : f32 to vector<2x10x1x16xf32>
    %c0_100 = arith.constant 0 : index
    %c0_101 = arith.constant 0 : index
    %c9_102 = arith.constant 9 : index
    %c0_103 = arith.constant 0 : index
    %68 = vector.load %arg12[%c0_100, %c0_101, %c9_102, %c0_103] : memref<2x10x10x16xf32, #tpu.memory_space<vmem>>, vector<2x10x1x16xf32>
    tpu.vector_store %arg12[%c0_100, %c0_101, %c9_102, %c0_103], %67 {strides = array<i32>} : memref<2x10x10x16xf32, #tpu.memory_space<vmem>>, vector<2x10x1x16xf32>,
    %c0_104 = arith.constant 0 : index
    %c0_105 = arith.constant 0 : index
    %69 = vector.load %arg3[%c0_104, %c0_105] : memref<1x16xf32, #tpu.memory_space<vmem>>, vector<1x16xf32>
    %c0_106 = arith.constant 0 : index
    %c0_107 = arith.constant 0 : index
    %70 = vector.load %arg4[%c0_106, %c0_107] : memref<1x16xf32, #tpu.memory_space<vmem>>, vector<1x16xf32>
    %c0_108 = arith.constant 0 : index
    %c0_109 = arith.constant 0 : index
    %71 = vector.load %arg5[%c0_108, %c0_109] : memref<16x16xf32, #tpu.memory_space<vmem>>, vector<16x16xf32>
    %72 = vector.extract_strided_slice %60 {offsets = [0, 0], sizes = [64, 16], strides = [1, 1]} : vector<128x16xf32> to vector<64x16xf32>
    %cst_110 = arith.constant dense<0.000000e+00> : vector<16xf32>
    %73 = vector.multi_reduction <add>, %72, %cst_110 [0] : vector<64x16xf32> to vector<16xf32>
    %74 = vector.shape_cast %73 : vector<16xf32> to vector<1x16xf32>
    %75 = arith.mulf %72, %72 : vector<64x16xf32>
    %cst_111 = arith.constant dense<0.000000e+00> : vector<16xf32>
    %76 = vector.multi_reduction <add>, %75, %cst_111 [0] : vector<64x16xf32> to vector<16xf32>
    %77 = vector.shape_cast %76 : vector<16xf32> to vector<1x16xf32>
    %cst_112 = arith.constant dense<0.000000e+00> : vector<1x16xf32>
    %78 = tpu.matmul %74, %71, %cst_112 {dimension_numbers = #tpu.dot_dimension_numbers<[1], [0], [0], [1], [0, 0, 1, 1], [], []>} : vector<1x16xf32>, vector<16x16xf32>, vector<1x16xf32> -> vector<1x16xf32>
    %cst_113 = arith.constant dense<0.000000e+00> : vector<1x16xf32>
    %79 = tpu.matmul %77, %71, %cst_113 {dimension_numbers = #tpu.dot_dimension_numbers<[1], [0], [0], [1], [0, 0, 1, 1], [], []>} : vector<1x16xf32>, vector<16x16xf32>, vector<1x16xf32> -> vector<1x16xf32>
    %cst_114 = arith.constant 7.812500e-03 : f32
    %80 = vector.broadcast %cst_114 : f32 to vector<1x16xf32>
    %81 = arith.mulf %78, %80 : vector<1x16xf32>
    %cst_115 = arith.constant 7.812500e-03 : f32
    %82 = vector.broadcast %cst_115 : f32 to vector<1x16xf32>
    %83 = arith.mulf %79, %82 : vector<1x16xf32>
    %84 = arith.mulf %81, %81 : vector<1x16xf32>
    %85 = arith.subf %83, %84 : vector<1x16xf32>
    %cst_116 = arith.constant 9.99999974E-6 : f32
    %86 = vector.broadcast %cst_116 : f32 to vector<1x16xf32>
    %87 = arith.addf %85, %86 : vector<1x16xf32>
    %88 = math.rsqrt %87 : vector<1x16xf32>
    %89 = arith.mulf %88, %69 : vector<1x16xf32>
    %90 = arith.mulf %81, %89 : vector<1x16xf32>
    %91 = arith.subf %70, %90 : vector<1x16xf32>
    %92 = vector.broadcast %89 : vector<1x16xf32> to vector<64x16xf32>
    %93 = arith.mulf %72, %92 : vector<64x16xf32>
    %94 = vector.broadcast %91 : vector<1x16xf32> to vector<64x16xf32>
    %95 = arith.addf %93, %94 : vector<64x16xf32>
    %cst_117 = arith.constant 0.000000e+00 : f32
    %96 = vector.broadcast %cst_117 : f32 to vector<64x16xf32>
    %97 = arith.cmpf oge, %95, %96 : vector<64x16xf32>
    %cst_118 = arith.constant 0.00999999977 : f32
    %98 = vector.broadcast %cst_118 : f32 to vector<64x16xf32>
    %99 = arith.mulf %98, %95 : vector<64x16xf32>
    %100 = arith.select %97, %95, %99 : vector<64x16xi1>, vector<64x16xf32>
    %101 = vector.shape_cast %100 : vector<64x16xf32> to vector<1x8x8x16xf32>
    %c0_119 = arith.constant 0 : index
    %c1_120 = arith.constant 1 : index
    %c1_121 = arith.constant 1 : index
    %c0_122 = arith.constant 0 : index
    %102 = vector.load %arg12[%c0_119, %c1_120, %c1_121, %c0_122] : memref<2x10x10x16xf32, #tpu.memory_space<vmem>>, vector<1x8x8x16xf32>
    tpu.vector_store %arg12[%c0_119, %c1_120, %c1_121, %c0_122], %101 {strides = array<i32>} : memref<2x10x10x16xf32, #tpu.memory_space<vmem>>, vector<1x8x8x16xf32>,
    %103 = vector.extract_strided_slice %60 {offsets = [64, 0], sizes = [64, 16], strides = [1, 1]} : vector<128x16xf32> to vector<64x16xf32>
    %cst_123 = arith.constant dense<0.000000e+00> : vector<16xf32>
    %104 = vector.multi_reduction <add>, %103, %cst_123 [0] : vector<64x16xf32> to vector<16xf32>
    %105 = vector.shape_cast %104 : vector<16xf32> to vector<1x16xf32>
    %106 = arith.mulf %103, %103 : vector<64x16xf32>
    %cst_124 = arith.constant dense<0.000000e+00> : vector<16xf32>
    %107 = vector.multi_reduction <add>, %106, %cst_124 [0] : vector<64x16xf32> to vector<16xf32>
    %108 = vector.shape_cast %107 : vector<16xf32> to vector<1x16xf32>
    %cst_125 = arith.constant dense<0.000000e+00> : vector<1x16xf32>
    %109 = tpu.matmul %105, %71, %cst_125 {dimension_numbers = #tpu.dot_dimension_numbers<[1], [0], [0], [1], [0, 0, 1, 1], [], []>} : vector<1x16xf32>, vector<16x16xf32>, vector<1x16xf32> -> vector<1x16xf32>
    %cst_126 = arith.constant dense<0.000000e+00> : vector<1x16xf32>
    %110 = tpu.matmul %108, %71, %cst_126 {dimension_numbers = #tpu.dot_dimension_numbers<[1], [0], [0], [1], [0, 0, 1, 1], [], []>} : vector<1x16xf32>, vector<16x16xf32>, vector<1x16xf32> -> vector<1x16xf32>
    %cst_127 = arith.constant 7.812500e-03 : f32
    %111 = vector.broadcast %cst_127 : f32 to vector<1x16xf32>
    %112 = arith.mulf %109, %111 : vector<1x16xf32>
    %cst_128 = arith.constant 7.812500e-03 : f32
    %113 = vector.broadcast %cst_128 : f32 to vector<1x16xf32>
    %114 = arith.mulf %110, %113 : vector<1x16xf32>
    %115 = arith.mulf %112, %112 : vector<1x16xf32>
    %116 = arith.subf %114, %115 : vector<1x16xf32>
    %cst_129 = arith.constant 9.99999974E-6 : f32
    %117 = vector.broadcast %cst_129 : f32 to vector<1x16xf32>
    %118 = arith.addf %116, %117 : vector<1x16xf32>
    %119 = math.rsqrt %118 : vector<1x16xf32>
    %120 = arith.mulf %119, %69 : vector<1x16xf32>
    %121 = arith.mulf %112, %120 : vector<1x16xf32>
    %122 = arith.subf %70, %121 : vector<1x16xf32>
    %123 = vector.broadcast %120 : vector<1x16xf32> to vector<64x16xf32>
    %124 = arith.mulf %103, %123 : vector<64x16xf32>
    %125 = vector.broadcast %122 : vector<1x16xf32> to vector<64x16xf32>
    %126 = arith.addf %124, %125 : vector<64x16xf32>
    %cst_130 = arith.constant 0.000000e+00 : f32
    %127 = vector.broadcast %cst_130 : f32 to vector<64x16xf32>
    %128 = arith.cmpf oge, %126, %127 : vector<64x16xf32>
    %cst_131 = arith.constant 0.00999999977 : f32
    %129 = vector.broadcast %cst_131 : f32 to vector<64x16xf32>
    %130 = arith.mulf %129, %126 : vector<64x16xf32>
    %131 = arith.select %128, %126, %130 : vector<64x16xi1>, vector<64x16xf32>
    %132 = vector.shape_cast %131 : vector<64x16xf32> to vector<1x8x8x16xf32>
    %c1_132 = arith.constant 1 : index
    %c1_133 = arith.constant 1 : index
    %c1_134 = arith.constant 1 : index
    %c0_135 = arith.constant 0 : index
    %133 = vector.load %arg12[%c1_132, %c1_133, %c1_134, %c0_135] : memref<2x10x10x16xf32, #tpu.memory_space<vmem>>, vector<1x8x8x16xf32>
    tpu.vector_store %arg12[%c1_132, %c1_133, %c1_134, %c0_135], %132 {strides = array<i32>} : memref<2x10x10x16xf32, #tpu.memory_space<vmem>>, vector<1x8x8x16xf32>,
    %c0_136 = arith.constant 0 : index
    %c0_137 = arith.constant 0 : index
    %c0_138 = arith.constant 0 : index
    %c0_139 = arith.constant 0 : index
    %134 = vector.load %arg12[%c0_136, %c0_137, %c0_138, %c0_139] : memref<2x10x10x16xf32, #tpu.memory_space<vmem>>, vector<2x8x8x16xf32>
    %135 = vector.shape_cast %134 : vector<2x8x8x16xf32> to vector<128x16xf32>
    %c0_140 = arith.constant 0 : index
    %c0_141 = arith.constant 0 : index
    %136 = vector.load %arg6[%c0_140, %c0_141] : memref<144x16xf32, #tpu.memory_space<vmem>>, vector<16x16xf32>
    %cst_142 = arith.constant dense<0.000000e+00> : vector<128x16xf32>
    %137 = tpu.matmul %135, %136, %cst_142 {dimension_numbers = #tpu.dot_dimension_numbers<[1], [0], [0], [1], [0, 0, 1, 1], [], []>} : vector<128x16xf32>, vector<16x16xf32>, vector<128x16xf32> -> vector<128x16xf32>
    %c0_143 = arith.constant 0 : index
    %c0_144 = arith.constant 0 : index
    %c1_145 = arith.constant 1 : index
    %c0_146 = arith.constant 0 : index
    %138 = vector.load %arg12[%c0_143, %c0_144, %c1_145, %c0_146] : memref<2x10x10x16xf32, #tpu.memory_space<vmem>>, vector<2x8x8x16xf32>
    %139 = vector.shape_cast %138 : vector<2x8x8x16xf32> to vector<128x16xf32>
    %c16_147 = arith.constant 16 : index
    %c0_148 = arith.constant 0 : index
    %140 = vector.load %arg6[%c16_147, %c0_148] : memref<144x16xf32, #tpu.memory_space<vmem>>, vector<16x16xf32>
    %cst_149 = arith.constant dense<0.000000e+00> : vector<128x16xf32>
    %141 = tpu.matmul %139, %140, %cst_149 {dimension_numbers = #tpu.dot_dimension_numbers<[1], [0], [0], [1], [0, 0, 1, 1], [], []>} : vector<128x16xf32>, vector<16x16xf32>, vector<128x16xf32> -> vector<128x16xf32>
    %142 = arith.addf %137, %141 : vector<128x16xf32>
    %c0_150 = arith.constant 0 : index
    %c0_151 = arith.constant 0 : index
    %c2_152 = arith.constant 2 : index
    %c0_153 = arith.constant 0 : index
    %143 = vector.load %arg12[%c0_150, %c0_151, %c2_152, %c0_153] : memref<2x10x10x16xf32, #tpu.memory_space<vmem>>, vector<2x8x8x16xf32>
    %144 = vector.shape_cast %143 : vector<2x8x8x16xf32> to vector<128x16xf32>
    %c32_154 = arith.constant 32 : index
    %c0_155 = arith.constant 0 : index
    %145 = vector.load %arg6[%c32_154, %c0_155] : memref<144x16xf32, #tpu.memory_space<vmem>>, vector<16x16xf32>
    %cst_156 = arith.constant dense<0.000000e+00> : vector<128x16xf32>
    %146 = tpu.matmul %144, %145, %cst_156 {dimension_numbers = #tpu.dot_dimension_numbers<[1], [0], [0], [1], [0, 0, 1, 1], [], []>} : vector<128x16xf32>, vector<16x16xf32>, vector<128x16xf32> -> vector<128x16xf32>
    %147 = arith.addf %142, %146 : vector<128x16xf32>
    %c0_157 = arith.constant 0 : index
    %c1_158 = arith.constant 1 : index
    %c0_159 = arith.constant 0 : index
    %c0_160 = arith.constant 0 : index
    %148 = vector.load %arg12[%c0_157, %c1_158, %c0_159, %c0_160] : memref<2x10x10x16xf32, #tpu.memory_space<vmem>>, vector<2x8x8x16xf32>
    %149 = vector.shape_cast %148 : vector<2x8x8x16xf32> to vector<128x16xf32>
    %c48_161 = arith.constant 48 : index
    %c0_162 = arith.constant 0 : index
    %150 = vector.load %arg6[%c48_161, %c0_162] : memref<144x16xf32, #tpu.memory_space<vmem>>, vector<16x16xf32>
    %cst_163 = arith.constant dense<0.000000e+00> : vector<128x16xf32>
    %151 = tpu.matmul %149, %150, %cst_163 {dimension_numbers = #tpu.dot_dimension_numbers<[1], [0], [0], [1], [0, 0, 1, 1], [], []>} : vector<128x16xf32>, vector<16x16xf32>, vector<128x16xf32> -> vector<128x16xf32>
    %152 = arith.addf %147, %151 : vector<128x16xf32>
    %c0_164 = arith.constant 0 : index
    %c1_165 = arith.constant 1 : index
    %c1_166 = arith.constant 1 : index
    %c0_167 = arith.constant 0 : index
    %153 = vector.load %arg12[%c0_164, %c1_165, %c1_166, %c0_167] : memref<2x10x10x16xf32, #tpu.memory_space<vmem>>, vector<2x8x8x16xf32>
    %154 = vector.shape_cast %153 : vector<2x8x8x16xf32> to vector<128x16xf32>
    %c64_168 = arith.constant 64 : index
    %c0_169 = arith.constant 0 : index
    %155 = vector.load %arg6[%c64_168, %c0_169] : memref<144x16xf32, #tpu.memory_space<vmem>>, vector<16x16xf32>
    %cst_170 = arith.constant dense<0.000000e+00> : vector<128x16xf32>
    %156 = tpu.matmul %154, %155, %cst_170 {dimension_numbers = #tpu.dot_dimension_numbers<[1], [0], [0], [1], [0, 0, 1, 1], [], []>} : vector<128x16xf32>, vector<16x16xf32>, vector<128x16xf32> -> vector<128x16xf32>
    %157 = arith.addf %152, %156 : vector<128x16xf32>
    %c0_171 = arith.constant 0 : index
    %c1_172 = arith.constant 1 : index
    %c2_173 = arith.constant 2 : index
    %c0_174 = arith.constant 0 : index
    %158 = vector.load %arg12[%c0_171, %c1_172, %c2_173, %c0_174] : memref<2x10x10x16xf32, #tpu.memory_space<vmem>>, vector<2x8x8x16xf32>
    %159 = vector.shape_cast %158 : vector<2x8x8x16xf32> to vector<128x16xf32>
    %c80 = arith.constant 80 : index
    %c0_175 = arith.constant 0 : index
    %160 = vector.load %arg6[%c80, %c0_175] : memref<144x16xf32, #tpu.memory_space<vmem>>, vector<16x16xf32>
    %cst_176 = arith.constant dense<0.000000e+00> : vector<128x16xf32>
    %161 = tpu.matmul %159, %160, %cst_176 {dimension_numbers = #tpu.dot_dimension_numbers<[1], [0], [0], [1], [0, 0, 1, 1], [], []>} : vector<128x16xf32>, vector<16x16xf32>, vector<128x16xf32> -> vector<128x16xf32>
    %162 = arith.addf %157, %161 : vector<128x16xf32>
    %c0_177 = arith.constant 0 : index
    %c2_178 = arith.constant 2 : index
    %c0_179 = arith.constant 0 : index
    %c0_180 = arith.constant 0 : index
    %163 = vector.load %arg12[%c0_177, %c2_178, %c0_179, %c0_180] : memref<2x10x10x16xf32, #tpu.memory_space<vmem>>, vector<2x8x8x16xf32>
    %164 = vector.shape_cast %163 : vector<2x8x8x16xf32> to vector<128x16xf32>
    %c96 = arith.constant 96 : index
    %c0_181 = arith.constant 0 : index
    %165 = vector.load %arg6[%c96, %c0_181] : memref<144x16xf32, #tpu.memory_space<vmem>>, vector<16x16xf32>
    %cst_182 = arith.constant dense<0.000000e+00> : vector<128x16xf32>
    %166 = tpu.matmul %164, %165, %cst_182 {dimension_numbers = #tpu.dot_dimension_numbers<[1], [0], [0], [1], [0, 0, 1, 1], [], []>} : vector<128x16xf32>, vector<16x16xf32>, vector<128x16xf32> -> vector<128x16xf32>
    %167 = arith.addf %162, %166 : vector<128x16xf32>
    %c0_183 = arith.constant 0 : index
    %c2_184 = arith.constant 2 : index
    %c1_185 = arith.constant 1 : index
    %c0_186 = arith.constant 0 : index
    %168 = vector.load %arg12[%c0_183, %c2_184, %c1_185, %c0_186] : memref<2x10x10x16xf32, #tpu.memory_space<vmem>>, vector<2x8x8x16xf32>
    %169 = vector.shape_cast %168 : vector<2x8x8x16xf32> to vector<128x16xf32>
    %c112 = arith.constant 112 : index
    %c0_187 = arith.constant 0 : index
    %170 = vector.load %arg6[%c112, %c0_187] : memref<144x16xf32, #tpu.memory_space<vmem>>, vector<16x16xf32>
    %cst_188 = arith.constant dense<0.000000e+00> : vector<128x16xf32>
    %171 = tpu.matmul %169, %170, %cst_188 {dimension_numbers = #tpu.dot_dimension_numbers<[1], [0], [0], [1], [0, 0, 1, 1], [], []>} : vector<128x16xf32>, vector<16x16xf32>, vector<128x16xf32> -> vector<128x16xf32>
    %172 = arith.addf %167, %171 : vector<128x16xf32>
    %c0_189 = arith.constant 0 : index
    %c2_190 = arith.constant 2 : index
    %c2_191 = arith.constant 2 : index
    %c0_192 = arith.constant 0 : index
    %173 = vector.load %arg12[%c0_189, %c2_190, %c2_191, %c0_192] : memref<2x10x10x16xf32, #tpu.memory_space<vmem>>, vector<2x8x8x16xf32>
    %174 = vector.shape_cast %173 : vector<2x8x8x16xf32> to vector<128x16xf32>
    %c128 = arith.constant 128 : index
    %c0_193 = arith.constant 0 : index
    %175 = vector.load %arg6[%c128, %c0_193] : memref<144x16xf32, #tpu.memory_space<vmem>>, vector<16x16xf32>
    %cst_194 = arith.constant dense<0.000000e+00> : vector<128x16xf32>
    %176 = tpu.matmul %174, %175, %cst_194 {dimension_numbers = #tpu.dot_dimension_numbers<[1], [0], [0], [1], [0, 0, 1, 1], [], []>} : vector<128x16xf32>, vector<16x16xf32>, vector<128x16xf32> -> vector<128x16xf32>
    %177 = arith.addf %172, %176 : vector<128x16xf32>
    %c0_195 = arith.constant 0 : index
    %c0_196 = arith.constant 0 : index
    %178 = vector.load %arg7[%c0_195, %c0_196] : memref<1x16xf32, #tpu.memory_space<vmem>>, vector<1x16xf32>
    %c0_197 = arith.constant 0 : index
    %c0_198 = arith.constant 0 : index
    %179 = vector.load %arg8[%c0_197, %c0_198] : memref<1x16xf32, #tpu.memory_space<vmem>>, vector<1x16xf32>
    %c0_199 = arith.constant 0 : index
    %c0_200 = arith.constant 0 : index
    %180 = vector.load %arg9[%c0_199, %c0_200] : memref<16x16xf32, #tpu.memory_space<vmem>>, vector<16x16xf32>
    %181 = vector.extract_strided_slice %177 {offsets = [0, 0], sizes = [64, 16], strides = [1, 1]} : vector<128x16xf32> to vector<64x16xf32>
    %cst_201 = arith.constant dense<0.000000e+00> : vector<16xf32>
    %182 = vector.multi_reduction <add>, %181, %cst_201 [0] : vector<64x16xf32> to vector<16xf32>
    %183 = vector.shape_cast %182 : vector<16xf32> to vector<1x16xf32>
    %184 = arith.mulf %181, %181 : vector<64x16xf32>
    %cst_202 = arith.constant dense<0.000000e+00> : vector<16xf32>
    %185 = vector.multi_reduction <add>, %184, %cst_202 [0] : vector<64x16xf32> to vector<16xf32>
    %186 = vector.shape_cast %185 : vector<16xf32> to vector<1x16xf32>
    %cst_203 = arith.constant dense<0.000000e+00> : vector<1x16xf32>
    %187 = tpu.matmul %183, %180, %cst_203 {dimension_numbers = #tpu.dot_dimension_numbers<[1], [0], [0], [1], [0, 0, 1, 1], [], []>} : vector<1x16xf32>, vector<16x16xf32>, vector<1x16xf32> -> vector<1x16xf32>
    %cst_204 = arith.constant dense<0.000000e+00> : vector<1x16xf32>
    %188 = tpu.matmul %186, %180, %cst_204 {dimension_numbers = #tpu.dot_dimension_numbers<[1], [0], [0], [1], [0, 0, 1, 1], [], []>} : vector<1x16xf32>, vector<16x16xf32>, vector<1x16xf32> -> vector<1x16xf32>
    %cst_205 = arith.constant 7.812500e-03 : f32
    %189 = vector.broadcast %cst_205 : f32 to vector<1x16xf32>
    %190 = arith.mulf %187, %189 : vector<1x16xf32>
    %cst_206 = arith.constant 7.812500e-03 : f32
    %191 = vector.broadcast %cst_206 : f32 to vector<1x16xf32>
    %192 = arith.mulf %188, %191 : vector<1x16xf32>
    %193 = arith.mulf %190, %190 : vector<1x16xf32>
    %194 = arith.subf %192, %193 : vector<1x16xf32>
    %cst_207 = arith.constant 9.99999974E-6 : f32
    %195 = vector.broadcast %cst_207 : f32 to vector<1x16xf32>
    %196 = arith.addf %194, %195 : vector<1x16xf32>
    %197 = math.rsqrt %196 : vector<1x16xf32>
    %198 = arith.mulf %197, %178 : vector<1x16xf32>
    %199 = arith.mulf %190, %198 : vector<1x16xf32>
    %200 = arith.subf %179, %199 : vector<1x16xf32>
    %201 = vector.broadcast %198 : vector<1x16xf32> to vector<64x16xf32>
    %202 = arith.mulf %181, %201 : vector<64x16xf32>
    %203 = vector.broadcast %200 : vector<1x16xf32> to vector<64x16xf32>
    %204 = arith.addf %202, %203 : vector<64x16xf32>
    %cst_208 = arith.constant 0.000000e+00 : f32
    %205 = vector.broadcast %cst_208 : f32 to vector<64x16xf32>
    %206 = arith.cmpf oge, %204, %205 : vector<64x16xf32>
    %cst_209 = arith.constant 0.00999999977 : f32
    %207 = vector.broadcast %cst_209 : f32 to vector<64x16xf32>
    %208 = arith.mulf %207, %204 : vector<64x16xf32>
    %209 = arith.select %206, %204, %208 : vector<64x16xi1>, vector<64x16xf32>
    %210 = vector.shape_cast %209 : vector<64x16xf32> to vector<8x8x16xf32>
    %211 = vector.extract_strided_slice %210 {offsets = [0, 0, 0], sizes = [8, 1, 16], strides = [1, 1, 1]} : vector<8x8x16xf32> to vector<8x1x16xf32>
    %212 = vector.shape_cast %211 : vector<8x1x16xf32> to vector<8x16xf32>
    %213 = vector.extract_strided_slice %210 {offsets = [0, 1, 0], sizes = [8, 1, 16], strides = [1, 1, 1]} : vector<8x8x16xf32> to vector<8x1x16xf32>
    %214 = vector.shape_cast %213 : vector<8x1x16xf32> to vector<8x16xf32>
    %215 = vector.extract_strided_slice %210 {offsets = [0, 2, 0], sizes = [8, 1, 16], strides = [1, 1, 1]} : vector<8x8x16xf32> to vector<8x1x16xf32>
    %216 = vector.shape_cast %215 : vector<8x1x16xf32> to vector<8x16xf32>
    %217 = vector.extract_strided_slice %210 {offsets = [0, 3, 0], sizes = [8, 1, 16], strides = [1, 1, 1]} : vector<8x8x16xf32> to vector<8x1x16xf32>
    %218 = vector.shape_cast %217 : vector<8x1x16xf32> to vector<8x16xf32>
    %219 = vector.extract_strided_slice %210 {offsets = [0, 4, 0], sizes = [8, 1, 16], strides = [1, 1, 1]} : vector<8x8x16xf32> to vector<8x1x16xf32>
    %220 = vector.shape_cast %219 : vector<8x1x16xf32> to vector<8x16xf32>
    %221 = vector.extract_strided_slice %210 {offsets = [0, 5, 0], sizes = [8, 1, 16], strides = [1, 1, 1]} : vector<8x8x16xf32> to vector<8x1x16xf32>
    %222 = vector.shape_cast %221 : vector<8x1x16xf32> to vector<8x16xf32>
    %223 = vector.extract_strided_slice %210 {offsets = [0, 6, 0], sizes = [8, 1, 16], strides = [1, 1, 1]} : vector<8x8x16xf32> to vector<8x1x16xf32>
    %224 = vector.shape_cast %223 : vector<8x1x16xf32> to vector<8x16xf32>
    %225 = vector.extract_strided_slice %210 {offsets = [0, 7, 0], sizes = [8, 1, 16], strides = [1, 1, 1]} : vector<8x8x16xf32> to vector<8x1x16xf32>
    %226 = vector.shape_cast %225 : vector<8x1x16xf32> to vector<8x16xf32>
    %227 = tpu.concatenate %212, %214, %216, %218, %220, %222, %224, %226 in 1 : vector<8x16xf32>, vector<8x16xf32>, vector<8x16xf32>, vector<8x16xf32>, vector<8x16xf32>, vector<8x16xf32>, vector<8x16xf32>, vector<8x16xf32> -> vector<8x128xf32>
    %228 = vector.shape_cast %227 : vector<8x128xf32> to vector<1x8x128xf32>
    %c0_210 = arith.constant 0 : index
    %c0_211 = arith.constant 0 : index
    %c0_212 = arith.constant 0 : index
    %229 = vector.load %arg10[%c0_210, %c0_211, %c0_212] : memref<2x8x128xf32, #tpu.memory_space<vmem>>, vector<1x8x128xf32>
    tpu.vector_store %arg10[%c0_210, %c0_211, %c0_212], %228 {strides = array<i32>} : memref<2x8x128xf32, #tpu.memory_space<vmem>>, vector<1x8x128xf32>,
    %230 = vector.extract_strided_slice %177 {offsets = [64, 0], sizes = [64, 16], strides = [1, 1]} : vector<128x16xf32> to vector<64x16xf32>
    %cst_213 = arith.constant dense<0.000000e+00> : vector<16xf32>
    %231 = vector.multi_reduction <add>, %230, %cst_213 [0] : vector<64x16xf32> to vector<16xf32>
    %232 = vector.shape_cast %231 : vector<16xf32> to vector<1x16xf32>
    %233 = arith.mulf %230, %230 : vector<64x16xf32>
    %cst_214 = arith.constant dense<0.000000e+00> : vector<16xf32>
    %234 = vector.multi_reduction <add>, %233, %cst_214 [0] : vector<64x16xf32> to vector<16xf32>
    %235 = vector.shape_cast %234 : vector<16xf32> to vector<1x16xf32>
    %cst_215 = arith.constant dense<0.000000e+00> : vector<1x16xf32>
    %236 = tpu.matmul %232, %180, %cst_215 {dimension_numbers = #tpu.dot_dimension_numbers<[1], [0], [0], [1], [0, 0, 1, 1], [], []>} : vector<1x16xf32>, vector<16x16xf32>, vector<1x16xf32> -> vector<1x16xf32>
    %cst_216 = arith.constant dense<0.000000e+00> : vector<1x16xf32>
    %237 = tpu.matmul %235, %180, %cst_216 {dimension_numbers = #tpu.dot_dimension_numbers<[1], [0], [0], [1], [0, 0, 1, 1], [], []>} : vector<1x16xf32>, vector<16x16xf32>, vector<1x16xf32> -> vector<1x16xf32>
    %cst_217 = arith.constant 7.812500e-03 : f32
    %238 = vector.broadcast %cst_217 : f32 to vector<1x16xf32>
    %239 = arith.mulf %236, %238 : vector<1x16xf32>
    %cst_218 = arith.constant 7.812500e-03 : f32
    %240 = vector.broadcast %cst_218 : f32 to vector<1x16xf32>
    %241 = arith.mulf %237, %240 : vector<1x16xf32>
    %242 = arith.mulf %239, %239 : vector<1x16xf32>
    %243 = arith.subf %241, %242 : vector<1x16xf32>
    %cst_219 = arith.constant 9.99999974E-6 : f32
    %244 = vector.broadcast %cst_219 : f32 to vector<1x16xf32>
    %245 = arith.addf %243, %244 : vector<1x16xf32>
    %246 = math.rsqrt %245 : vector<1x16xf32>
    %247 = arith.mulf %246, %178 : vector<1x16xf32>
    %248 = arith.mulf %239, %247 : vector<1x16xf32>
    %249 = arith.subf %179, %248 : vector<1x16xf32>
    %250 = vector.broadcast %247 : vector<1x16xf32> to vector<64x16xf32>
    %251 = arith.mulf %230, %250 : vector<64x16xf32>
    %252 = vector.broadcast %249 : vector<1x16xf32> to vector<64x16xf32>
    %253 = arith.addf %251, %252 : vector<64x16xf32>
    %cst_220 = arith.constant 0.000000e+00 : f32
    %254 = vector.broadcast %cst_220 : f32 to vector<64x16xf32>
    %255 = arith.cmpf oge, %253, %254 : vector<64x16xf32>
    %cst_221 = arith.constant 0.00999999977 : f32
    %256 = vector.broadcast %cst_221 : f32 to vector<64x16xf32>
    %257 = arith.mulf %256, %253 : vector<64x16xf32>
    %258 = arith.select %255, %253, %257 : vector<64x16xi1>, vector<64x16xf32>
    %259 = vector.shape_cast %258 : vector<64x16xf32> to vector<8x8x16xf32>
    %260 = vector.extract_strided_slice %259 {offsets = [0, 0, 0], sizes = [8, 1, 16], strides = [1, 1, 1]} : vector<8x8x16xf32> to vector<8x1x16xf32>
    %261 = vector.shape_cast %260 : vector<8x1x16xf32> to vector<8x16xf32>
    %262 = vector.extract_strided_slice %259 {offsets = [0, 1, 0], sizes = [8, 1, 16], strides = [1, 1, 1]} : vector<8x8x16xf32> to vector<8x1x16xf32>
    %263 = vector.shape_cast %262 : vector<8x1x16xf32> to vector<8x16xf32>
    %264 = vector.extract_strided_slice %259 {offsets = [0, 2, 0], sizes = [8, 1, 16], strides = [1, 1, 1]} : vector<8x8x16xf32> to vector<8x1x16xf32>
    %265 = vector.shape_cast %264 : vector<8x1x16xf32> to vector<8x16xf32>
    %266 = vector.extract_strided_slice %259 {offsets = [0, 3, 0], sizes = [8, 1, 16], strides = [1, 1, 1]} : vector<8x8x16xf32> to vector<8x1x16xf32>
    %267 = vector.shape_cast %266 : vector<8x1x16xf32> to vector<8x16xf32>
    %268 = vector.extract_strided_slice %259 {offsets = [0, 4, 0], sizes = [8, 1, 16], strides = [1, 1, 1]} : vector<8x8x16xf32> to vector<8x1x16xf32>
    %269 = vector.shape_cast %268 : vector<8x1x16xf32> to vector<8x16xf32>
    %270 = vector.extract_strided_slice %259 {offsets = [0, 5, 0], sizes = [8, 1, 16], strides = [1, 1, 1]} : vector<8x8x16xf32> to vector<8x1x16xf32>
    %271 = vector.shape_cast %270 : vector<8x1x16xf32> to vector<8x16xf32>
    %272 = vector.extract_strided_slice %259 {offsets = [0, 6, 0], sizes = [8, 1, 16], strides = [1, 1, 1]} : vector<8x8x16xf32> to vector<8x1x16xf32>
    %273 = vector.shape_cast %272 : vector<8x1x16xf32> to vector<8x16xf32>
    %274 = vector.extract_strided_slice %259 {offsets = [0, 7, 0], sizes = [8, 1, 16], strides = [1, 1, 1]} : vector<8x8x16xf32> to vector<8x1x16xf32>
    %275 = vector.shape_cast %274 : vector<8x1x16xf32> to vector<8x16xf32>
    %276 = tpu.concatenate %261, %263, %265, %267, %269, %271, %273, %275 in 1 : vector<8x16xf32>, vector<8x16xf32>, vector<8x16xf32>, vector<8x16xf32>, vector<8x16xf32>, vector<8x16xf32>, vector<8x16xf32>, vector<8x16xf32> -> vector<8x128xf32>
    %277 = vector.shape_cast %276 : vector<8x128xf32> to vector<1x8x128xf32>
    %c1_222 = arith.constant 1 : index
    %c0_223 = arith.constant 0 : index
    %c0_224 = arith.constant 0 : index
    %278 = vector.load %arg10[%c1_222, %c0_223, %c0_224] : memref<2x8x128xf32, #tpu.memory_space<vmem>>, vector<1x8x128xf32>
    tpu.vector_store %arg10[%c1_222, %c0_223, %c0_224], %277 {strides = array<i32>} : memref<2x8x128xf32, #tpu.memory_space<vmem>>, vector<1x8x128xf32>,
    return
  }
  func.func @transform_0(%arg0: i32) -> (i32, i32, i32, i32, i32) {
    %c0_i32 = arith.constant 0 : i32
    %c0_i32_0 = arith.constant 0 : i32
    %c0_i32_1 = arith.constant 0 : i32
    %c0_i32_2 = arith.constant 0 : i32
    %c0_i32_3 = arith.constant 0 : i32
    return %arg0, %c0_i32, %c0_i32_0, %c0_i32_1, %c0_i32_2 : i32, i32, i32, i32, i32
  }
  func.func @transform_1(%arg0: i32) -> (i32, i32) {
    %c0_i32 = arith.constant 0 : i32
    %c0_i32_0 = arith.constant 0 : i32
    %c0_i32_1 = arith.constant 0 : i32
    return %c0_i32, %c0_i32_0 : i32, i32
  }
  func.func @transform_2(%arg0: i32) -> (i32, i32) {
    %c0_i32 = arith.constant 0 : i32
    %c0_i32_0 = arith.constant 0 : i32
    %c0_i32_1 = arith.constant 0 : i32
    return %c0_i32, %c0_i32_0 : i32, i32
  }
  func.func @transform_3(%arg0: i32) -> (i32, i32) {
    %c0_i32 = arith.constant 0 : i32
    %c0_i32_0 = arith.constant 0 : i32
    %c0_i32_1 = arith.constant 0 : i32
    return %c0_i32, %c0_i32_0 : i32, i32
  }
  func.func @transform_4(%arg0: i32) -> (i32, i32) {
    %c0_i32 = arith.constant 0 : i32
    %c0_i32_0 = arith.constant 0 : i32
    %c0_i32_1 = arith.constant 0 : i32
    return %c0_i32, %c0_i32_0 : i32, i32
  }
  func.func @transform_5(%arg0: i32) -> (i32, i32) {
    %c0_i32 = arith.constant 0 : i32
    %c0_i32_0 = arith.constant 0 : i32
    %c0_i32_1 = arith.constant 0 : i32
    return %c0_i32, %c0_i32_0 : i32, i32
  }
  func.func @transform_6(%arg0: i32) -> (i32, i32) {
    %c0_i32 = arith.constant 0 : i32
    %c0_i32_0 = arith.constant 0 : i32
    %c0_i32_1 = arith.constant 0 : i32
    return %c0_i32, %c0_i32_0 : i32, i32
  }
  func.func @transform_7(%arg0: i32) -> (i32, i32) {
    %c0_i32 = arith.constant 0 : i32
    %c0_i32_0 = arith.constant 0 : i32
    %c0_i32_1 = arith.constant 0 : i32
    return %c0_i32, %c0_i32_0 : i32, i32
  }
  func.func @transform_8(%arg0: i32) -> (i32, i32) {
    %c0_i32 = arith.constant 0 : i32
    %c0_i32_0 = arith.constant 0 : i32
    %c0_i32_1 = arith.constant 0 : i32
    return %c0_i32, %c0_i32_0 : i32, i32
  }
  func.func @transform_9(%arg0: i32) -> (i32, i32, i32) {
    %c0_i32 = arith.constant 0 : i32
    %c0_i32_0 = arith.constant 0 : i32
    %c0_i32_1 = arith.constant 0 : i32
    return %arg0, %c0_i32, %c0_i32_0 : i32, i32, i32
  }
}

</mosaic_0001>

<llo_original>
// kernel: down_forward.1
$region0: #{down_forward.1}
  #allocation0 [shape = 'u32[]', space=smem, size = 0x4, offset = 0x4, fixed_abs, tag = 'smem constant byte address 0x4 - core index']
  #allocation1 [shape = 'u32[144,128]{1,0:T(1,128)}', space=vmem, size = 0x12000, scoped, tag = 'internal scratch']
  #allocation2 [shape = 'f32[2,10,10,8]{3,2,1,0:T(8,128)}', space=vmem, size = 0x28000, scoped, tag = 'scratch operand']
  #allocation3 [shape = 'f32[2,10,10,16]{3,2,1,0:T(8,128)}', space=vmem, size = 0x28000, scoped, tag = 'scratch operand']
  %s0 = inlined_call_operand.vmem [shape: f32[4,8,2,8,16], index: 0, kind: input, shape index: {}]
  %s1 = inlined_call_operand.vmem [shape: f32[72,16], index: 1, kind: input, shape index: {}]
  %s2 = inlined_call_operand.vmem [shape: f32[1,16], index: 2, kind: input, shape index: {}]
  %s3 = inlined_call_operand.vmem [shape: f32[1,16], index: 3, kind: input, shape index: {}]
  %s4 = inlined_call_operand.vmem [shape: f32[16,16], index: 4, kind: input, shape index: {}, may-alias: {4,8}]
  %s5 = inlined_call_operand.vmem [shape: f32[144,16], index: 5, kind: input, shape index: {}]
  %s6 = inlined_call_operand.vmem [shape: f32[1,16], index: 6, kind: input, shape index: {}]
  %s7 = inlined_call_operand.vmem [shape: f32[1,16], index: 7, kind: input, shape index: {}]
  %s8 = inlined_call_operand.vmem [shape: f32[16,16], index: 8, kind: input, shape index: {}, may-alias: {4,8}]
  %s9 = inlined_call_operand.vmem [shape: f32[4,8,128], index: 9, kind: output, shape index: {}]
  %s10 = sld [smem:[#allocation0]]
  $region69: #{down_forward.1} parent=0
    _
  %s12 = ssub.s32 1, %s10
  %s13 = scalar_select 0, %s12, %s10
  loop: start=0, step=1, limit=4
  $region2: #{down_forward.1} parent=0 // loop_pre_header
    _
  $region3: #{down_forward.1} parent=0 // loop_header
    %s15 = sphi 0, %s19
    %p16 = scmp.ge.s32.totalorder %s15, 4
    %s25 = sphi 0, %s27
    %s28 = sphi 0, %s25
    %s29 = sphi 0, %s28
    %s45 = sphi 0, %s29
    %s49 = sphi 0, %s49
    %s51 = sphi 0, %s49
    %s52 = sphi 0, %s51
    %s66 = sphi 0, %s52
    %s70 = sphi 0, %s70
    %s72 = sphi 0, %s70
    %s73 = sphi 0, %s72
    %s87 = sphi 0, %s73
    %s91 = sphi 0, %s91
    %s93 = sphi 0, %s91
    %s94 = sphi 0, %s93
    %s108 = sphi 0, %s94
    %s112 = sphi 0, %s112
    %s114 = sphi 0, %s112
    %s115 = sphi 0, %s114
    %s129 = sphi 0, %s115
    %s133 = sphi 0, %s133
    %s135 = sphi 0, %s133
    %s136 = sphi 0, %s135
    %s150 = sphi 0, %s136
    %s154 = sphi 0, %s154
    %s156 = sphi 0, %s154
    %s157 = sphi 0, %s156
    %s171 = sphi 0, %s157
    %s175 = sphi 0, %s175
    %s177 = sphi 0, %s175
    %s178 = sphi 0, %s177
    %s192 = sphi 0, %s178
    %s196 = sphi 0, %s196
    %s198 = sphi 0, %s196
    %s199 = sphi 0, %s198
    %s213 = sphi 0, %s199
    %s219 = sphi 0, %s221
    %s222 = sphi 0, %s219
    %s223 = sphi 0, %s222
    %s239 = sphi 0, %s223
  $region4: #{down_forward.1} parent=0 // loop_header_branch
    %18 = sbr.rel (%p16) target = $region8
  $region5: #{down_forward.1} parent=0 // loop_body
    %s20 = ssub.s32 %s15, 1
    %s21 = ssub.s32 %s15, 2
    %s22 = sadd.s32 %s15, 1
    %s23 = ssub.s32 %s15, %s22
    %p24 = scmp.eq.s32.totalorder %s23, 0
    %s26 = sadd.s32 %s25, 1
    %s27 = scalar_select %p24, %s25, %s26
    %p30 = pneg %p24
    %p31 = scmp.eq.s32.totalorder %s15, 1
    %p32 = por %p30, %p31
    %p33 = scmp.ne.s32.totalorder %s25, %s28
    %p34 = scmp.eq.s32.totalorder %s15, 0
    %p35 = por %p33, %p34
    %p36 = scmp.ne.s32.totalorder %s25, %s28
    %p37 = scmp.eq.s32.totalorder %s20, 1
    %p38 = por %p36, %p37
    %p39 = scmp.ne.s32.totalorder %s28, %s29
    %p40 = scmp.eq.s32.totalorder %s20, 0
    %p41 = por %p39, %p40
    %p42 = scmp.ne.s32.totalorder %s28, %s29
    %p43 = scmp.eq.s32.totalorder %s21, 1
    %p44 = por %p42, %p43
    %p46 = scmp.ne.s32.totalorder %s29, %s45
    %p47 = scmp.eq.s32.totalorder %s21, 0
    %p48 = por %p46, %p47
    %s50 = sadd.s32 %s49, 1
    %p53 = scmp.eq.s32.totalorder %s15, 1
    %p54 = scmp.ne.s32.totalorder %s49, %s51
    %p55 = scmp.eq.s32.totalorder %s15, 0
    %p56 = por %p54, %p55
    %p57 = scmp.ne.s32.totalorder %s49, %s51
    %p58 = scmp.eq.s32.totalorder %s20, 1
    %p59 = por %p57, %p58
    %p60 = scmp.ne.s32.totalorder %s51, %s52
    %p61 = scmp.eq.s32.totalorder %s20, 0
    %p62 = por %p60, %p61
    %p63 = scmp.ne.s32.totalorder %s51, %s52
    %p64 = scmp.eq.s32.totalorder %s21, 1
    %p65 = por %p63, %p64
    %p67 = scmp.ne.s32.totalorder %s52, %s66
    %p68 = scmp.eq.s32.totalorder %s21, 0
    %p69 = por %p67, %p68
    %s71 = sadd.s32 %s70, 1
    %p74 = scmp.eq.s32.totalorder %s15, 1
    %p75 = scmp.ne.s32.totalorder %s70, %s72
    %p76 = scmp.eq.s32.totalorder %s15, 0
    %p77 = por %p75, %p76
    %p78 = scmp.ne.s32.totalorder %s70, %s72
    %p79 = scmp.eq.s32.totalorder %s20, 1
    %p80 = por %p78, %p79
    %p81 = scmp.ne.s32.totalorder %s72, %s73
    %p82 = scmp.eq.s32.totalorder %s20, 0
    %p83 = por %p81, %p82
    %p84 = scmp.ne.s32.totalorder %s72, %s73
    %p85 = scmp.eq.s32.totalorder %s21, 1
    %p86 = por %p84, %p85
    %p88 = scmp.ne.s32.totalorder %s73, %s87
    %p89 = scmp.eq.s32.totalorder %s21, 0
    %p90 = por %p88, %p89
    %s92 = sadd.s32 %s91, 1
    %p95 = scmp.eq.s32.totalorder %s15, 1
    %p96 = scmp.ne.s32.totalorder %s91, %s93
    %p97 = scmp.eq.s32.totalorder %s15, 0
    %p98 = por %p96, %p97
    %p99 = scmp.ne.s32.totalorder %s91, %s93
    %p100 = scmp.eq.s32.totalorder %s20, 1
    %p101 = por %p99, %p100
    %p102 = scmp.ne.s32.totalorder %s93, %s94
    %p103 = scmp.eq.s32.totalorder %s20, 0
    %p104 = por %p102, %p103
    %p105 = scmp.ne.s32.totalorder %s93, %s94
    %p106 = scmp.eq.s32.totalorder %s21, 1
    %p107 = por %p105, %p106
    %p109 = scmp.ne.s32.totalorder %s94, %s108
    %p110 = scmp.eq.s32.totalorder %s21, 0
    %p111 = por %p109, %p110
    %s113 = sadd.s32 %s112, 1
    %p116 = scmp.eq.s32.totalorder %s15, 1
    %p117 = scmp.ne.s32.totalorder %s112, %s114
    %p118 = scmp.eq.s32.totalorder %s15, 0
    %p119 = por %p117, %p118
    %p120 = scmp.ne.s32.totalorder %s112, %s114
    %p121 = scmp.eq.s32.totalorder %s20, 1
    %p122 = por %p120, %p121
    %p123 = scmp.ne.s32.totalorder %s114, %s115
    %p124 = scmp.eq.s32.totalorder %s20, 0
    %p125 = por %p123, %p124
    %p126 = scmp.ne.s32.totalorder %s114, %s115
    %p127 = scmp.eq.s32.totalorder %s21, 1
    %p128 = por %p126, %p127
    %p130 = scmp.ne.s32.totalorder %s115, %s129
    %p131 = scmp.eq.s32.totalorder %s21, 0
    %p132 = por %p130, %p131
    %s134 = sadd.s32 %s133, 1
    %p137 = scmp.eq.s32.totalorder %s15, 1
    %p138 = scmp.ne.s32.totalorder %s133, %s135
    %p139 = scmp.eq.s32.totalorder %s15, 0
    %p140 = por %p138, %p139
    %p141 = scmp.ne.s32.totalorder %s133, %s135
    %p142 = scmp.eq.s32.totalorder %s20, 1
    %p143 = por %p141, %p142
    %p144 = scmp.ne.s32.totalorder %s135, %s136
    %p145 = scmp.eq.s32.totalorder %s20, 0
    %p146 = por %p144, %p145
    %p147 = scmp.ne.s32.totalorder %s135, %s136
    %p148 = scmp.eq.s32.totalorder %s21, 1
    %p149 = por %p147, %p148
    %p151 = scmp.ne.s32.totalorder %s136, %s150
    %p152 = scmp.eq.s32.totalorder %s21, 0
    %p153 = por %p151, %p152
    %s155 = sadd.s32 %s154, 1
    %p158 = scmp.eq.s32.totalorder %s15, 1
    %p159 = scmp.ne.s32.totalorder %s154, %s156
    %p160 = scmp.eq.s32.totalorder %s15, 0
    %p161 = por %p159, %p160
    %p162 = scmp.ne.s32.totalorder %s154, %s156
    %p163 = scmp.eq.s32.totalorder %s20, 1
    %p164 = por %p162, %p163
    %p165 = scmp.ne.s32.totalorder %s156, %s157
    %p166 = scmp.eq.s32.totalorder %s20, 0
    %p167 = por %p165, %p166
    %p168 = scmp.ne.s32.totalorder %s156, %s157
    %p169 = scmp.eq.s32.totalorder %s21, 1
    %p170 = por %p168, %p169
    %p172 = scmp.ne.s32.totalorder %s157, %s171
    %p173 = scmp.eq.s32.totalorder %s21, 0
    %p174 = por %p172, %p173
    %s176 = sadd.s32 %s175, 1
    %p179 = scmp.eq.s32.totalorder %s15, 1
    %p180 = scmp.ne.s32.totalorder %s175, %s177
    %p181 = scmp.eq.s32.totalorder %s15, 0
    %p182 = por %p180, %p181
    %p183 = scmp.ne.s32.totalorder %s175, %s177
    %p184 = scmp.eq.s32.totalorder %s20, 1
    %p185 = por %p183, %p184
    %p186 = scmp.ne.s32.totalorder %s177, %s178
    %p187 = scmp.eq.s32.totalorder %s20, 0
    %p188 = por %p186, %p187
    %p189 = scmp.ne.s32.totalorder %s177, %s178
    %p190 = scmp.eq.s32.totalorder %s21, 1
    %p191 = por %p189, %p190
    %p193 = scmp.ne.s32.totalorder %s178, %s192
    %p194 = scmp.eq.s32.totalorder %s21, 0
    %p195 = por %p193, %p194
    %s197 = sadd.s32 %s196, 1
    %p200 = scmp.eq.s32.totalorder %s15, 1
    %p201 = scmp.ne.s32.totalorder %s196, %s198
    %p202 = scmp.eq.s32.totalorder %s15, 0
    %p203 = por %p201, %p202
    %p204 = scmp.ne.s32.totalorder %s196, %s198
    %p205 = scmp.eq.s32.totalorder %s20, 1
    %p206 = por %p204, %p205
    %p207 = scmp.ne.s32.totalorder %s198, %s199
    %p208 = scmp.eq.s32.totalorder %s20, 0
    %p209 = por %p207, %p208
    %p210 = scmp.ne.s32.totalorder %s198, %s199
    %p211 = scmp.eq.s32.totalorder %s21, 1
    %p212 = por %p210, %p211
    %p214 = scmp.ne.s32.totalorder %s199, %s213
    %p215 = scmp.eq.s32.totalorder %s21, 0
    %p216 = por %p214, %p215
    %s217 = ssub.s32 %s15, %s22
    %p218 = scmp.eq.s32.totalorder %s217, 0
    %s220 = sadd.s32 %s219, 1
    %s221 = scalar_select %p218, %s219, %s220
    %p224 = pneg %p218
    %p225 = scmp.eq.s32.totalorder %s15, 1
    %p226 = por %p224, %p225
    %p227 = scmp.ne.s32.totalorder %s219, %s222
    %p228 = scmp.eq.s32.totalorder %s15, 0
    %p229 = por %p227, %p228
    %p230 = scmp.ne.s32.totalorder %s219, %s222
    %p231 = scmp.eq.s32.totalorder %s20, 1
    %p232 = por %p230, %p231
    %p233 = scmp.ne.s32.totalorder %s222, %s223
    %p234 = scmp.eq.s32.totalorder %s20, 0
    %p235 = por %p233, %p234
    %p236 = scmp.ne.s32.totalorder %s222, %s223
    %p237 = scmp.eq.s32.totalorder %s21, 1
    %p238 = por %p236, %p237
    %p240 = scmp.ne.s32.totalorder %s223, %s239
    %p241 = scmp.eq.s32.totalorder %s21, 0
    %p242 = por %p240, %p241
    %p243 = scmp.le.s32.totalorder 1, %s15
    %p244 = scmp.lt.s32.totalorder %s15, 3
    %p245 = pnand %p243, %p244
    %p246 = pneg %p245
    // Predicated region
    $region9: #{down_forward.1} parent=5 // pred_check
      _
    $region10: #{down_forward.1} parent=5 // pred_check_branch
      %248 = sbr.rel (%p245) target = $region12
    $region11: #{down_forward.1} parent=5 // pred_region
      %s249 = ssub.s32 %s15, 1
      // Predicated region
      $region13: #{down_forward.1} parent=11 // pred_check
        %p250 = pneg %p62
      $region14: #{down_forward.1} parent=11 // pred_check_branch
        %252 = sbr.rel (%p250) target = $region16
      $region15: #{down_forward.1} parent=11 // pred_region
        _
      $region16: #{down_forward.1} parent=11 // pred_fallthru
        _
      // Predicated region
      $region17: #{down_forward.1} parent=11 // pred_check
        %p253 = pneg %p83
      $region18: #{down_forward.1} parent=11 // pred_check_branch
        %255 = sbr.rel (%p253) target = $region20
      $region19: #{down_forward.1} parent=11 // pred_region
        _
      $region20: #{down_forward.1} parent=11 // pred_fallthru
        _
      // Predicated region
      $region21: #{down_forward.1} parent=11 // pred_check
        %p256 = pneg %p104
      $region22: #{down_forward.1} parent=11 // pred_check_branch
        %258 = sbr.rel (%p256) target = $region24
      $region23: #{down_forward.1} parent=11 // pred_region
        _
      $region24: #{down_forward.1} parent=11 // pred_fallthru
        _
      // Predicated region
      $region25: #{down_forward.1} parent=11 // pred_check
        %p259 = pneg %p125
      $region26: #{down_forward.1} parent=11 // pred_check_branch
        %261 = sbr.rel (%p259) target = $region28
      $region27: #{down_forward.1} parent=11 // pred_region
        _
      $region28: #{down_forward.1} parent=11 // pred_fallthru
        _
      // Predicated region
      $region29: #{down_forward.1} parent=11 // pred_check
        %p262 = pneg %p146
      $region30: #{down_forward.1} parent=11 // pred_check_branch
        %264 = sbr.rel (%p262) target = $region32
      $region31: #{down_forward.1} parent=11 // pred_region
        _
      $region32: #{down_forward.1} parent=11 // pred_fallthru
        _
      // Predicated region
      $region33: #{down_forward.1} parent=11 // pred_check
        %p265 = pneg %p167
      $region34: #{down_forward.1} parent=11 // pred_check_branch
        %267 = sbr.rel (%p265) target = $region36
      $region35: #{down_forward.1} parent=11 // pred_region
        _
      $region36: #{down_forward.1} parent=11 // pred_fallthru
        _
      // Predicated region
      $region37: #{down_forward.1} parent=11 // pred_check
        %p268 = pneg %p188
      $region38: #{down_forward.1} parent=11 // pred_check_branch
        %270 = sbr.rel (%p268) target = $region40
      $region39: #{down_forward.1} parent=11 // pred_region
        _
      $region40: #{down_forward.1} parent=11 // pred_fallthru
        _
      // Predicated region
      $region41: #{down_forward.1} parent=11 // pred_check
        %p271 = pneg %p209
      $region42: #{down_forward.1} parent=11 // pred_check_branch
        %273 = sbr.rel (%p271) target = $region44
      $region43: #{down_forward.1} parent=11 // pred_region
        _
      $region44: #{down_forward.1} parent=11 // pred_fallthru
        _
    $region12: #{down_forward.1} parent=5 // pred_fallthru
      _
    %p274 = scmp.lt.s32.totalorder %s15, 2
    // Predicated region
    $region45: #{down_forward.1} parent=5 // pred_check
      %p275 = pneg %p274
    $region46: #{down_forward.1} parent=5 // pred_check_branch
      %277 = sbr.rel (%p275) target = $region48
    $region47: #{down_forward.1} parent=5 // pred_region
      // Predicated region
      $region49: #{down_forward.1} parent=47 // pred_check
        %p278 = pneg %p35
      $region50: #{down_forward.1} parent=47 // pred_check_branch
        %280 = sbr.rel (%p278) target = $region52
      $region51: #{down_forward.1} parent=47 // pred_region
        %s281 = smul.u32 2, %s15
        %p282 = scmp.lt.s32.totalorder %s281, 3
        %s283 = scalar_select %p282, %s281, 3
        %s284 = smul.addr %s283, 16
        %s285 = smul.addr %s284, 8
        %s286 = scalar_lea.vmem %s0, %s285
        %s287 = smul.u32 2, %s15
      $region52: #{down_forward.1} parent=47 // pred_fallthru
        _
    $region48: #{down_forward.1} parent=5 // pred_fallthru
      _
    %p288 = scmp.le.s32.totalorder 1, %s15
    %p289 = scmp.lt.s32.totalorder %s15, 3
    %p290 = pnand %p288, %p289
    %p291 = pneg %p290
    // Predicated region
    $region53: #{down_forward.1} parent=5 // pred_check
      _
    $region54: #{down_forward.1} parent=5 // pred_check_branch
      %293 = sbr.rel (%p290) target = $region56
    $region55: #{down_forward.1} parent=5 // pred_region
      %s294 = ssub.s32 %s15, 1
      %s295 = smul.u32 2, %s20
      %p296 = scmp.lt.s32.totalorder %s295, 3
      %s297 = scalar_select %p296, %s295, 3
      %s298 = smul.addr %s297, 16
      %s299 = smul.addr %s298, 8
      %s300 = scalar_lea.vmem %s0, %s299
      %p301 = pneg %p41
      %p302 = pneg %p38
      %p303 = pneg %p62
      %p304 = pneg %p59
      %p305 = pneg %p83
      %p306 = pneg %p80
      %p307 = pneg %p104
      %p308 = pneg %p101
      %p309 = pneg %p125
      %p310 = pneg %p122
      %p311 = pneg %p146
      %p312 = pneg %p143
      %p313 = pneg %p167
      %p314 = pneg %p164
      %p315 = pneg %p188
      %p316 = pneg %p185
      %p317 = pneg %p209
      %p318 = pneg %p206
      %p319 = pneg %p235
      %p320 = pneg %p232
      %s321 = smul.u32 2, %s20
      %p322 = scmp.lt.s32.totalorder %s321, 3
      %s323 = scalar_select %p322, %s321, 3
      %s324 = smul.addr %s323, 8
      %s325 = scalar_lea.vmem %s9, %s324
      %s326 = smul.u32 2, %s20
      %p327 = scmp.lt.s32.totalorder %s326, 3
      %s328 = scalar_select %p327, %s326, 3
      %s329 = smul.addr %s328, 16
      %s330 = smul.addr %s329, 8
      %s331 = scalar_lea.vmem %s0, %s330
      %s332 = smul.u32 2, %s20
      %s333 = smul.u32 2, %s20
      %p334 = scmp.lt.s32.totalorder %s333, 3
      %s335 = scalar_select %p334, %s333, 3
      %s336 = smul.addr %s335, 8
      %s337 = scalar_lea.vmem %s9, %s336
      %s338 = smul.u32 2, %s20
      %v339 = vld [vmem:[%s331] sm:$0xff]
      %v340 = vld [vmem:[%s331 + $0x10] sm:$0xff]
      %v341 = vld [vmem:[%s331 + $0x20] sm:$0xff]
      %v342 = vld [vmem:[%s331 + $0x30] sm:$0xff]
      %v343 = vld [vmem:[%s331 + $0x40] sm:$0xff]
      %v344 = vld [vmem:[%s331 + $0x50] sm:$0xff]
      %v345 = vld [vmem:[%s331 + $0x60] sm:$0xff]
      %v346 = vld [vmem:[%s331 + $0x70] sm:$0xff]
      %v347 = vld [vmem:[%s331 + $0x80] sm:$0xff]
      %v348 = vld [vmem:[%s331 + $0x90] sm:$0xff]
      %v349 = vld [vmem:[%s331 + $0xa0] sm:$0xff]
      %v350 = vld [vmem:[%s331 + $0xb0] sm:$0xff]
      %v351 = vld [vmem:[%s331 + $0xc0] sm:$0xff]
      %v352 = vld [vmem:[%s331 + $0xd0] sm:$0xff]
      %v353 = vld [vmem:[%s331 + $0xe0] sm:$0xff]
      %v354 = vld [vmem:[%s331 + $0xf0] sm:$0xff]
      %s355 = scalar_lea.vmem %s331, 8
      %v356 = vld [vmem:[%s355] sm:$0xff]
      %v357 = vld [vmem:[%s355 + $0x10] sm:$0xff]
      %v358 = vld [vmem:[%s355 + $0x20] sm:$0xff]
      %v359 = vld [vmem:[%s355 + $0x30] sm:$0xff]
      %v360 = vld [vmem:[%s355 + $0x40] sm:$0xff]
      %v361 = vld [vmem:[%s355 + $0x50] sm:$0xff]
      %v362 = vld [vmem:[%s355 + $0x60] sm:$0xff]
      %v363 = vld [vmem:[%s355 + $0x70] sm:$0xff]
      %v364 = vld [vmem:[%s355 + $0x80] sm:$0xff]
      %v365 = vld [vmem:[%s355 + $0x90] sm:$0xff]
      %v366 = vld [vmem:[%s355 + $0xa0] sm:$0xff]
      %v367 = vld [vmem:[%s355 + $0xb0] sm:$0xff]
      %v368 = vld [vmem:[%s355 + $0xc0] sm:$0xff]
      %v369 = vld [vmem:[%s355 + $0xd0] sm:$0xff]
      %v370 = vld [vmem:[%s355 + $0xe0] sm:$0xff]
      %v371 = vld [vmem:[%s355 + $0xf0] sm:$0xff]
      %v372 = vmax.f32 %v339, %v356
      %v373 = vmax.f32 %v340, %v357
      %v374 = vmax.f32 %v341, %v358
      %v375 = vmax.f32 %v342, %v359
      %v376 = vmax.f32 %v343, %v360
      %v377 = vmax.f32 %v344, %v361
      %v378 = vmax.f32 %v345, %v362
      %v379 = vmax.f32 %v346, %v363
      %v380 = vmax.f32 %v347, %v364
      %v381 = vmax.f32 %v348, %v365
      %v382 = vmax.f32 %v349, %v366
      %v383 = vmax.f32 %v350, %v367
      %v384 = vmax.f32 %v351, %v368
      %v385 = vmax.f32 %v352, %v369
      %v386 = vmax.f32 %v353, %v370
      %v387 = vmax.f32 %v354, %v371
      %404 = vrot.lane.b32.xlu0 %v372, 120
      %v405 = vpop.permute.xlu0 %404
      %406 = vrot.lane.b32.xlu0 %v373, 120
      %v407 = vpop.permute.xlu0 %406
      %408 = vrot.lane.b32.xlu0 %v374, 120
      %v409 = vpop.permute.xlu0 %408
      %410 = vrot.lane.b32.xlu0 %v375, 120
      %v411 = vpop.permute.xlu0 %410
      %412 = vrot.lane.b32.xlu0 %v376, 120
      %v413 = vpop.permute.xlu0 %412
      %414 = vrot.lane.b32.xlu0 %v377, 120
      %v415 = vpop.permute.xlu0 %414
      %416 = vrot.lane.b32.xlu0 %v378, 120
      %v417 = vpop.permute.xlu0 %416
      %418 = vrot.lane.b32.xlu0 %v379, 120
      %v419 = vpop.permute.xlu0 %418
      %420 = vrot.lane.b32.xlu0 %v380, 120
      %v421 = vpop.permute.xlu0 %420
      %422 = vrot.lane.b32.xlu0 %v381, 120
      %v423 = vpop.permute.xlu0 %422
      %424 = vrot.lane.b32.xlu0 %v382, 120
      %v425 = vpop.permute.xlu0 %424
      %426 = vrot.lane.b32.xlu0 %v383, 120
      %v427 = vpop.permute.xlu0 %426
      %428 = vrot.lane.b32.xlu0 %v384, 120
      %v429 = vpop.permute.xlu0 %428
      %430 = vrot.lane.b32.xlu0 %v385, 120
      %v431 = vpop.permute.xlu0 %430
      %432 = vrot.lane.b32.xlu0 %v386, 120
      %v433 = vpop.permute.xlu0 %432
      %434 = vrot.lane.b32.xlu0 %v387, 120
      %v435 = vpop.permute.xlu0 %434
      %v452 = vmax.f32 %v372, %v405
      %v453 = vmax.f32 %v373, %v407
      %v454 = vmax.f32 %v374, %v409
      %v455 = vmax.f32 %v375, %v411
      %v456 = vmax.f32 %v376, %v413
      %v457 = vmax.f32 %v377, %v415
      %v458 = vmax.f32 %v378, %v417
      %v459 = vmax.f32 %v379, %v419
      %v460 = vmax.f32 %v380, %v421
      %v461 = vmax.f32 %v381, %v423
      %v462 = vmax.f32 %v382, %v425
      %v463 = vmax.f32 %v383, %v427
      %v464 = vmax.f32 %v384, %v429
      %v465 = vmax.f32 %v385, %v431
      %v466 = vmax.f32 %v386, %v433
      %v467 = vmax.f32 %v387, %v435
      %vm468 = vcmask 64512
      %469 = vst.msk [vmem:[#allocation2] sm:$0xff] %vm468, 0.0
      %vm470 = vcmask 58368
      %471 = vst.msk [vmem:[#allocation2 + $0x8] sm:$0x3] %vm470, 0.0
      %472 = vst.msk [vmem:[#allocation2 + $0xa0] sm:$0xff] %vm468, 0.0
      %473 = vst.msk [vmem:[#allocation2 + $0xa8] sm:$0x3] %vm470, 0.0
      %s474 = scalar_lea.vmem [#allocation2], 144
      %475 = vst.msk [vmem:[%s474] sm:$0xff] %vm468, 0.0
      %476 = vst.msk [vmem:[%s474 + $0x8] sm:$0x3] %vm470, 0.0
      %477 = vst.msk [vmem:[%s474 + $0xa0] sm:$0xff] %vm468, 0.0
      %478 = vst.msk [vmem:[%s474 + $0xa8] sm:$0x3] %vm470, 0.0
      %vm479 = vcmask 57344
      %480 = vst.msk [vmem:[#allocation2] sm:$0x1] %vm479, 0.0
      %481 = vst.msk [vmem:[#allocation2 + $0x10] sm:$0x1] %vm479, 0.0
      %482 = vst.msk [vmem:[#allocation2 + $0x20] sm:$0x1] %vm479, 0.0
      %483 = vst.msk [vmem:[#allocation2 + $0x30] sm:$0x1] %vm479, 0.0
      %484 = vst.msk [vmem:[#allocation2 + $0x40] sm:$0x1] %vm479, 0.0
      %485 = vst.msk [vmem:[#allocation2 + $0x50] sm:$0x1] %vm479, 0.0
      %486 = vst.msk [vmem:[#allocation2 + $0x60] sm:$0x1] %vm479, 0.0
      %487 = vst.msk [vmem:[#allocation2 + $0x70] sm:$0x1] %vm479, 0.0
      %488 = vst.msk [vmem:[#allocation2 + $0x80] sm:$0x1] %vm479, 0.0
      %489 = vst.msk [vmem:[#allocation2 + $0x90] sm:$0x1] %vm479, 0.0
      %490 = vst.msk [vmem:[#allocation2 + $0xa0] sm:$0x1] %vm479, 0.0
      %491 = vst.msk [vmem:[#allocation2 + $0xb0] sm:$0x1] %vm479, 0.0
      %492 = vst.msk [vmem:[#allocation2 + $0xc0] sm:$0x1] %vm479, 0.0
      %493 = vst.msk [vmem:[#allocation2 + $0xd0] sm:$0x1] %vm479, 0.0
      %494 = vst.msk [vmem:[#allocation2 + $0xe0] sm:$0x1] %vm479, 0.0
      %495 = vst.msk [vmem:[#allocation2 + $0xf0] sm:$0x1] %vm479, 0.0
      %496 = vst.msk [vmem:[#allocation2 + $0x100] sm:$0x1] %vm479, 0.0
      %497 = vst.msk [vmem:[#allocation2 + $0x110] sm:$0x1] %vm479, 0.0
      %498 = vst.msk [vmem:[#allocation2 + $0x120] sm:$0x1] %vm479, 0.0
      %499 = vst.msk [vmem:[#allocation2 + $0x130] sm:$0x1] %vm479, 0.0
      %500 = vst.msk [vmem:[#allocation2 + $0x9] sm:$0x1] %vm479, 0.0
      %501 = vst.msk [vmem:[#allocation2 + $0x19] sm:$0x1] %vm479, 0.0
      %502 = vst.msk [vmem:[#allocation2 + $0x29] sm:$0x1] %vm479, 0.0
      %503 = vst.msk [vmem:[#allocation2 + $0x39] sm:$0x1] %vm479, 0.0
      %504 = vst.msk [vmem:[#allocation2 + $0x49] sm:$0x1] %vm479, 0.0
      %505 = vst.msk [vmem:[#allocation2 + $0x59] sm:$0x1] %vm479, 0.0
      %506 = vst.msk [vmem:[#allocation2 + $0x69] sm:$0x1] %vm479, 0.0
      %507 = vst.msk [vmem:[#allocation2 + $0x79] sm:$0x1] %vm479, 0.0
      %508 = vst.msk [vmem:[#allocation2 + $0x89] sm:$0x1] %vm479, 0.0
      %509 = vst.msk [vmem:[#allocation2 + $0x99] sm:$0x1] %vm479, 0.0
      %510 = vst.msk [vmem:[#allocation2 + $0xa9] sm:$0x1] %vm479, 0.0
      %511 = vst.msk [vmem:[#allocation2 + $0xb9] sm:$0x1] %vm479, 0.0
      %512 = vst.msk [vmem:[#allocation2 + $0xc9] sm:$0x1] %vm479, 0.0
      %513 = vst.msk [vmem:[#allocation2 + $0xd9] sm:$0x1] %vm479, 0.0
      %514 = vst.msk [vmem:[#allocation2 + $0xe9] sm:$0x1] %vm479, 0.0
      %515 = vst.msk [vmem:[#allocation2 + $0xf9] sm:$0x1] %vm479, 0.0
      %516 = vst.msk [vmem:[#allocation2 + $0x109] sm:$0x1] %vm479, 0.0
      %517 = vst.msk [vmem:[#allocation2 + $0x119] sm:$0x1] %vm479, 0.0
      %518 = vst.msk [vmem:[#allocation2 + $0x129] sm:$0x1] %vm479, 0.0
      %519 = vst.msk [vmem:[#allocation2 + $0x139] sm:$0x1] %vm479, 0.0
      %s520 = scalar_lea.vmem [#allocation2], 16
      %521 = vst.msk [vmem:[%s520 + $0x1] sm:$0xff] %vm468, %v452
      %522 = vst.msk [vmem:[%s520 + $0x11] sm:$0xff] %vm468, %v453
      %523 = vst.msk [vmem:[%s520 + $0x21] sm:$0xff] %vm468, %v454
      %524 = vst.msk [vmem:[%s520 + $0x31] sm:$0xff] %vm468, %v455
      %525 = vst.msk [vmem:[%s520 + $0x41] sm:$0xff] %vm468, %v456
      %526 = vst.msk [vmem:[%s520 + $0x51] sm:$0xff] %vm468, %v457
      %527 = vst.msk [vmem:[%s520 + $0x61] sm:$0xff] %vm468, %v458
      %528 = vst.msk [vmem:[%s520 + $0x71] sm:$0xff] %vm468, %v459
      %529 = vst.msk [vmem:[%s520 + $0xa1] sm:$0xff] %vm468, %v460
      %530 = vst.msk [vmem:[%s520 + $0xb1] sm:$0xff] %vm468, %v461
      %531 = vst.msk [vmem:[%s520 + $0xc1] sm:$0xff] %vm468, %v462
      %532 = vst.msk [vmem:[%s520 + $0xd1] sm:$0xff] %vm468, %v463
      %533 = vst.msk [vmem:[%s520 + $0xe1] sm:$0xff] %vm468, %v464
      %534 = vst.msk [vmem:[%s520 + $0xf1] sm:$0xff] %vm468, %v465
      %535 = vst.msk [vmem:[%s520 + $0x101] sm:$0xff] %vm468, %v466
      %536 = vst.msk [vmem:[%s520 + $0x111] sm:$0xff] %vm468, %v467
      %v537 = vld [vmem:[#allocation2] sm:$0xff]
      %v538 = vld [vmem:[#allocation2 + $0x10] sm:$0xff]
      %v539 = vld [vmem:[#allocation2 + $0x20] sm:$0xff]
      %v540 = vld [vmem:[#allocation2 + $0x30] sm:$0xff]
      %v541 = vld [vmem:[#allocation2 + $0x40] sm:$0xff]
      %v542 = vld [vmem:[#allocation2 + $0x50] sm:$0xff]
      %v543 = vld [vmem:[#allocation2 + $0x60] sm:$0xff]
      %v544 = vld [vmem:[#allocation2 + $0x70] sm:$0xff]
      %v545 = vld [vmem:[#allocation2 + $0xa0] sm:$0xff]
      %v546 = vld [vmem:[#allocation2 + $0xb0] sm:$0xff]
      %v547 = vld [vmem:[#allocation2 + $0xc0] sm:$0xff]
      %v548 = vld [vmem:[#allocation2 + $0xd0] sm:$0xff]
      %v549 = vld [vmem:[#allocation2 + $0xe0] sm:$0xff]
      %v550 = vld [vmem:[#allocation2 + $0xf0] sm:$0xff]
      %v551 = vld [vmem:[#allocation2 + $0x100] sm:$0xff]
      %v552 = vld [vmem:[#allocation2 + $0x110] sm:$0xff]
      %v553 = vld [vmem:[%s1] sm:$0xff]
      %v554 = vld [vmem:[#allocation2 + $0x1] sm:$0xff]
      %v555 = vld [vmem:[#allocation2 + $0x11] sm:$0xff]
      %v556 = vld [vmem:[#allocation2 + $0x21] sm:$0xff]
      %v557 = vld [vmem:[#allocation2 + $0x31] sm:$0xff]
      %v558 = vld [vmem:[#allocation2 + $0x41] sm:$0xff]
      %v559 = vld [vmem:[#allocation2 + $0x51] sm:$0xff]
      %v560 = vld [vmem:[#allocation2 + $0x61] sm:$0xff]
      %v561 = vld [vmem:[#allocation2 + $0x71] sm:$0xff]
      %v562 = vld [vmem:[#allocation2 + $0xa1] sm:$0xff]
      %v563 = vld [vmem:[#allocation2 + $0xb1] sm:$0xff]
      %v564 = vld [vmem:[#allocation2 + $0xc1] sm:$0xff]
      %v565 = vld [vmem:[#allocation2 + $0xd1] sm:$0xff]
      %v566 = vld [vmem:[#allocation2 + $0xe1] sm:$0xff]
      %v567 = vld [vmem:[#allocation2 + $0xf1] sm:$0xff]
      %v568 = vld [vmem:[#allocation2 + $0x101] sm:$0xff]
      %v569 = vld [vmem:[#allocation2 + $0x111] sm:$0xff]
      %v570 = vld [vmem:[%s1 + $0x8] sm:$0xff]
      %v572 = vsel %vm468, %v554, 0
      %v575 = vsel %vm468, %v555, 0
      %v578 = vsel %vm468, %v556, 0
      %v581 = vsel %vm468, %v557, 0
      %v584 = vsel %vm468, %v558, 0
      %v587 = vsel %vm468, %v559, 0
      %v590 = vsel %vm468, %v560, 0
      %v593 = vsel %vm468, %v561, 0
      %v596 = vsel %vm468, %v562, 0
      %v599 = vsel %vm468, %v563, 0
      %v602 = vsel %vm468, %v564, 0
      %v605 = vsel %vm468, %v565, 0
      %v608 = vsel %vm468, %v566, 0
      %v611 = vsel %vm468, %v567, 0
      %v614 = vsel %vm468, %v568, 0
      %v617 = vsel %vm468, %v569, 0
      %619 = vmatprep.subr.mxu0 0.0
      %620 = vmatpush1.msra.mxu0 0.0
      %621 = vmatprep.subr.mxu0 0.0
      %622 = vmatpush1.msra.mxu0 0.0
      %623 = vmatprep.subr.mxu0 0.0
      %624 = vmatpush1.msra.mxu0 0.0
      %625 = vmatprep.subr.mxu0 0.0
      %626 = vmatpush1.msra.mxu0 0.0
      %627 = vmatprep.subr.mxu0 0.0
      %628 = vmatpush1.msra.mxu0 0.0
      %629 = vmatprep.subr.mxu0 0.0
      %630 = vmatpush1.msra.mxu0 0.0
      %631 = vmatprep.subr.mxu0 0.0
      %632 = vmatpush1.msra.mxu0 0.0
      %633 = vmatprep.subr.mxu0 0.0
      %634 = vmatpush1.msra.mxu0 0.0
      %635 = vmatprep.subr.mxu0 0.0
      %636 = vmatpush1.msra.mxu0 0.0
      %637 = vmatprep.subr.mxu0 0.0
      %638 = vmatpush1.msra.mxu0 0.0
      %639 = vmatprep.subr.mxu0 0.0
      %640 = vmatpush1.msra.mxu0 0.0
      %641 = vmatprep.subr.mxu0 0.0
      %642 = vmatpush1.msra.mxu0 0.0
      %643 = vmatprep.subr.mxu0 0.0
      %644 = vmatpush1.msra.mxu0 0.0
      %645 = vmatprep.subr.mxu0 0.0
      %646 = vmatpush1.msra.mxu0 0.0
      %647 = vmatprep.subr.mxu0 0.0
      %648 = vmatpush1.msra.mxu0 0.0
      %649 = vmatprep.subr.mxu0 0.0
      %650 = vmatpush1.msra.mxu0 %v570
      %651 = vmatprep.subr.mxu0 0.0
      %652 = vmatpush2.msra.mxu0 0.0
      %653 = vmatprep.subr.mxu0 0.0
      %654 = vmatpush2.msra.mxu0 0.0
      %655 = vmatprep.subr.mxu0 0.0
      %656 = vmatpush2.msra.mxu0 0.0
      %657 = vmatprep.subr.mxu0 0.0
      %658 = vmatpush2.msra.mxu0 0.0
      %659 = vmatprep.subr.mxu0 0.0
      %660 = vmatpush2.msra.mxu0 0.0
      %661 = vmatprep.subr.mxu0 0.0
      %662 = vmatpush2.msra.mxu0 0.0
      %663 = vmatprep.subr.mxu0 0.0
      %664 = vmatpush2.msra.mxu0 0.0
      %665 = vmatprep.subr.mxu0 0.0
      %666 = vmatpush2.msra.mxu0 0.0
      %667 = vmatprep.subr.mxu0 0.0
      %668 = vmatpush2.msra.mxu0 0.0
      %669 = vmatprep.subr.mxu0 0.0
      %670 = vmatpush2.msra.mxu0 0.0
      %671 = vmatprep.subr.mxu0 0.0
      %672 = vmatpush2.msra.mxu0 0.0
      %673 = vmatprep.subr.mxu0 0.0
      %674 = vmatpush2.msra.mxu0 0.0
      %675 = vmatprep.subr.mxu0 0.0
      %676 = vmatpush2.msra.mxu0 0.0
      %677 = vmatprep.subr.mxu0 0.0
      %678 = vmatpush2.msra.mxu0 0.0
      %679 = vmatprep.subr.mxu0 0.0
      %680 = vmatpush2.msra.mxu0 0.0
      %681 = vmatprep.subr.mxu0 0.0
      %682 = vmatpush2.msra.mxu0 0.0
      %683 = vmatprep.mubr.f32.mxu0 0.0
      %684 = vmatmul.mubr.f32.gmra.mxu0 %v572
      %v685 = vpop.f32.mrf.mxu0
      %v686 = vadd.f32 0.0, %v685
      %v687 = vpop.f32.mrf.mxu0
      %688 = vmatprep.mubr.f32.mxu0 0.0
      %689 = vmatmul.mubr.f32.gmra.mxu0 %v575
      %v690 = vpop.f32.mrf.mxu0
      %v691 = vadd.f32 0.0, %v690
      %v692 = vpop.f32.mrf.mxu0
      %693 = vmatprep.mubr.f32.mxu0 0.0
      %694 = vmatmul.mubr.f32.gmra.mxu0 %v578
      %v695 = vpop.f32.mrf.mxu0
      %v696 = vadd.f32 0.0, %v695
      %v697 = vpop.f32.mrf.mxu0
      %698 = vmatprep.mubr.f32.mxu0 0.0
      %699 = vmatmul.mubr.f32.gmra.mxu0 %v581
      %v700 = vpop.f32.mrf.mxu0
      %v701 = vadd.f32 0.0, %v700
      %v702 = vpop.f32.mrf.mxu0
      %703 = vmatprep.mubr.f32.mxu0 0.0
      %704 = vmatmul.mubr.f32.gmra.mxu0 %v584
      %v705 = vpop.f32.mrf.mxu0
      %v706 = vadd.f32 0.0, %v705
      %v707 = vpop.f32.mrf.mxu0
      %708 = vmatprep.mubr.f32.mxu0 0.0
      %709 = vmatmul.mubr.f32.gmra.mxu0 %v587
      %v710 = vpop.f32.mrf.mxu0
      %v711 = vadd.f32 0.0, %v710
      %v712 = vpop.f32.mrf.mxu0
      %713 = vmatprep.mubr.f32.mxu0 0.0
      %714 = vmatmul.mubr.f32.gmra.mxu0 %v590
      %v715 = vpop.f32.mrf.mxu0
      %v716 = vadd.f32 0.0, %v715
      %v717 = vpop.f32.mrf.mxu0
      %718 = vmatprep.mubr.f32.mxu0 0.0
      %719 = vmatmul.mubr.f32.gmra.mxu0 %v593
      %v720 = vpop.f32.mrf.mxu0
      %v721 = vadd.f32 0.0, %v720
      %v722 = vpop.f32.mrf.mxu0
      %723 = vmatprep.mubr.f32.mxu0 0.0
      %724 = vmatmul.mubr.f32.gmra.mxu0 %v596
      %v725 = vpop.f32.mrf.mxu0
      %v726 = vadd.f32 0.0, %v725
      %v727 = vpop.f32.mrf.mxu0
      %728 = vmatprep.mubr.f32.mxu0 0.0
      %729 = vmatmul.mubr.f32.gmra.mxu0 %v599
      %v730 = vpop.f32.mrf.mxu0
      %v731 = vadd.f32 0.0, %v730
      %v732 = vpop.f32.mrf.mxu0
      %733 = vmatprep.mubr.f32.mxu0 0.0
      %734 = vmatmul.mubr.f32.gmra.mxu0 %v602
      %v735 = vpop.f32.mrf.mxu0
      %v736 = vadd.f32 0.0, %v735
      %v737 = vpop.f32.mrf.mxu0
      %738 = vmatprep.mubr.f32.mxu0 0.0
      %739 = vmatmul.mubr.f32.gmra.mxu0 %v605
      %v740 = vpop.f32.mrf.mxu0
      %v741 = vadd.f32 0.0, %v740
      %v742 = vpop.f32.mrf.mxu0
      %743 = vmatprep.mubr.f32.mxu0 0.0
      %744 = vmatmul.mubr.f32.gmra.mxu0 %v608
      %v745 = vpop.f32.mrf.mxu0
      %v746 = vadd.f32 0.0, %v745
      %v747 = vpop.f32.mrf.mxu0
      %748 = vmatprep.mubr.f32.mxu0 0.0
      %749 = vmatmul.mubr.f32.gmra.mxu0 %v611
      %v750 = vpop.f32.mrf.mxu0
      %v751 = vadd.f32 0.0, %v750
      %v752 = vpop.f32.mrf.mxu0
      %753 = vmatprep.mubr.f32.mxu0 0.0
      %754 = vmatmul.mubr.f32.gmra.mxu0 %v614
      %v755 = vpop.f32.mrf.mxu0
      %v756 = vadd.f32 0.0, %v755
      %v757 = vpop.f32.mrf.mxu0
      %758 = vmatprep.mubr.f32.mxu0 0.0
      %759 = vmatmul.mubr.f32.gmra.mxu0 %v617
      %v760 = vpop.f32.mrf.mxu0
      %v761 = vadd.f32 0.0, %v760
      %v762 = vpop.f32.mrf.mxu0
      %763 = vdwg.mxu0
      %v765 = vsel %vm468, %v537, 0
      %v768 = vsel %vm468, %v538, 0
      %v771 = vsel %vm468, %v539, 0
      %v774 = vsel %vm468, %v540, 0
      %v777 = vsel %vm468, %v541, 0
      %v780 = vsel %vm468, %v542, 0
      %v783 = vsel %vm468, %v543, 0
      %v786 = vsel %vm468, %v544, 0
      %v789 = vsel %vm468, %v545, 0
      %v792 = vsel %vm468, %v546, 0
      %v795 = vsel %vm468, %v547, 0
      %v798 = vsel %vm468, %v548, 0
      %v801 = vsel %vm468, %v549, 0
      %v804 = vsel %vm468, %v550, 0
      %v807 = vsel %vm468, %v551, 0
      %v810 = vsel %vm468, %v552, 0
      %812 = vmatprep.subr.mxu0 0.0
      %813 = vmatpush1.msra.mxu0 0.0
      %814 = vmatprep.subr.mxu0 0.0
      %815 = vmatpush1.msra.mxu0 0.0
      %816 = vmatprep.subr.mxu0 0.0
      %817 = vmatpush1.msra.mxu0 0.0
      %818 = vmatprep.subr.mxu0 0.0
      %819 = vmatpush1.msra.mxu0 0.0
      %820 = vmatprep.subr.mxu0 0.0
      %821 = vmatpush1.msra.mxu0 0.0
      %822 = vmatprep.subr.mxu0 0.0
      %823 = vmatpush1.msra.mxu0 0.0
      %824 = vmatprep.subr.mxu0 0.0
      %825 = vmatpush1.msra.mxu0 0.0
      %826 = vmatprep.subr.mxu0 0.0
      %827 = vmatpush1.msra.mxu0 0.0
      %828 = vmatprep.subr.mxu0 0.0
      %829 = vmatpush1.msra.mxu0 0.0
      %830 = vmatprep.subr.mxu0 0.0
      %831 = vmatpush1.msra.mxu0 0.0
      %832 = vmatprep.subr.mxu0 0.0
      %833 = vmatpush1.msra.mxu0 0.0
      %834 = vmatprep.subr.mxu0 0.0
      %835 = vmatpush1.msra.mxu0 0.0
      %836 = vmatprep.subr.mxu0 0.0
      %837 = vmatpush1.msra.mxu0 0.0
      %838 = vmatprep.subr.mxu0 0.0
      %839 = vmatpush1.msra.mxu0 0.0
      %840 = vmatprep.subr.mxu0 0.0
      %841 = vmatpush1.msra.mxu0 0.0
      %842 = vmatprep.subr.mxu0 0.0
      %843 = vmatpush1.msra.mxu0 %v553
      %844 = vmatprep.subr.mxu0 0.0
      %845 = vmatpush2.msra.mxu0 0.0
      %846 = vmatprep.subr.mxu0 0.0
      %847 = vmatpush2.msra.mxu0 0.0
      %848 = vmatprep.subr.mxu0 0.0
      %849 = vmatpush2.msra.mxu0 0.0
      %850 = vmatprep.subr.mxu0 0.0
      %851 = vmatpush2.msra.mxu0 0.0
      %852 = vmatprep.subr.mxu0 0.0
      %853 = vmatpush2.msra.mxu0 0.0
      %854 = vmatprep.subr.mxu0 0.0
      %855 = vmatpush2.msra.mxu0 0.0
      %856 = vmatprep.subr.mxu0 0.0
      %857 = vmatpush2.msra.mxu0 0.0
      %858 = vmatprep.subr.mxu0 0.0
      %859 = vmatpush2.msra.mxu0 0.0
      %860 = vmatprep.subr.mxu0 0.0
      %861 = vmatpush2.msra.mxu0 0.0
      %862 = vmatprep.subr.mxu0 0.0
      %863 = vmatpush2.msra.mxu0 0.0
      %864 = vmatprep.subr.mxu0 0.0
      %865 = vmatpush2.msra.mxu0 0.0
      %866 = vmatprep.subr.mxu0 0.0
      %867 = vmatpush2.msra.mxu0 0.0
      %868 = vmatprep.subr.mxu0 0.0
      %869 = vmatpush2.msra.mxu0 0.0
      %870 = vmatprep.subr.mxu0 0.0
      %871 = vmatpush2.msra.mxu0 0.0
      %872 = vmatprep.subr.mxu0 0.0
      %873 = vmatpush2.msra.mxu0 0.0
      %874 = vmatprep.subr.mxu0 0.0
      %875 = vmatpush2.msra.mxu0 0.0
      %876 = vmatprep.mubr.f32.mxu0 0.0
      %877 = vmatmul.mubr.f32.gmra.mxu0 %v765
      %v878 = vpop.f32.mrf.mxu0
      %v879 = vadd.f32 %v686, %v878
      %v880 = vpop.f32.mrf.mxu0
      %881 = vmatprep.mubr.f32.mxu0 0.0
      %882 = vmatmul.mubr.f32.gmra.mxu0 %v768
      %v883 = vpop.f32.mrf.mxu0
      %v884 = vadd.f32 %v691, %v883
      %v885 = vpop.f32.mrf.mxu0
      %886 = vmatprep.mubr.f32.mxu0 0.0
      %887 = vmatmul.mubr.f32.gmra.mxu0 %v771
      %v888 = vpop.f32.mrf.mxu0
      %v889 = vadd.f32 %v696, %v888
      %v890 = vpop.f32.mrf.mxu0
      %891 = vmatprep.mubr.f32.mxu0 0.0
      %892 = vmatmul.mubr.f32.gmra.mxu0 %v774
      %v893 = vpop.f32.mrf.mxu0
      %v894 = vadd.f32 %v701, %v893
      %v895 = vpop.f32.mrf.mxu0
      %896 = vmatprep.mubr.f32.mxu0 0.0
      %897 = vmatmul.mubr.f32.gmra.mxu0 %v777
      %v898 = vpop.f32.mrf.mxu0
      %v899 = vadd.f32 %v706, %v898
      %v900 = vpop.f32.mrf.mxu0
      %901 = vmatprep.mubr.f32.mxu0 0.0
      %902 = vmatmul.mubr.f32.gmra.mxu0 %v780
      %v903 = vpop.f32.mrf.mxu0
      %v904 = vadd.f32 %v711, %v903
      %v905 = vpop.f32.mrf.mxu0
      %906 = vmatprep.mubr.f32.mxu0 0.0
      %907 = vmatmul.mubr.f32.gmra.mxu0 %v783
      %v908 = vpop.f32.mrf.mxu0
      %v909 = vadd.f32 %v716, %v908
      %v910 = vpop.f32.mrf.mxu0
      %911 = vmatprep.mubr.f32.mxu0 0.0
      %912 = vmatmul.mubr.f32.gmra.mxu0 %v786
      %v913 = vpop.f32.mrf.mxu0
      %v914 = vadd.f32 %v721, %v913
      %v915 = vpop.f32.mrf.mxu0
      %916 = vmatprep.mubr.f32.mxu0 0.0
      %917 = vmatmul.mubr.f32.gmra.mxu0 %v789
      %v918 = vpop.f32.mrf.mxu0
      %v919 = vadd.f32 %v726, %v918
      %v920 = vpop.f32.mrf.mxu0
      %921 = vmatprep.mubr.f32.mxu0 0.0
      %922 = vmatmul.mubr.f32.gmra.mxu0 %v792
      %v923 = vpop.f32.mrf.mxu0
      %v924 = vadd.f32 %v731, %v923
      %v925 = vpop.f32.mrf.mxu0
      %926 = vmatprep.mubr.f32.mxu0 0.0
      %927 = vmatmul.mubr.f32.gmra.mxu0 %v795
      %v928 = vpop.f32.mrf.mxu0
      %v929 = vadd.f32 %v736, %v928
      %v930 = vpop.f32.mrf.mxu0
      %931 = vmatprep.mubr.f32.mxu0 0.0
      %932 = vmatmul.mubr.f32.gmra.mxu0 %v798
      %v933 = vpop.f32.mrf.mxu0
      %v934 = vadd.f32 %v741, %v933
      %v935 = vpop.f32.mrf.mxu0
      %936 = vmatprep.mubr.f32.mxu0 0.0
      %937 = vmatmul.mubr.f32.gmra.mxu0 %v801
      %v938 = vpop.f32.mrf.mxu0
      %v939 = vadd.f32 %v746, %v938
      %v940 = vpop.f32.mrf.mxu0
      %941 = vmatprep.mubr.f32.mxu0 0.0
      %942 = vmatmul.mubr.f32.gmra.mxu0 %v804
      %v943 = vpop.f32.mrf.mxu0
      %v944 = vadd.f32 %v751, %v943
      %v945 = vpop.f32.mrf.mxu0
      %946 = vmatprep.mubr.f32.mxu0 0.0
      %947 = vmatmul.mubr.f32.gmra.mxu0 %v807
      %v948 = vpop.f32.mrf.mxu0
      %v949 = vadd.f32 %v756, %v948
      %v950 = vpop.f32.mrf.mxu0
      %951 = vmatprep.mubr.f32.mxu0 0.0
      %952 = vmatmul.mubr.f32.gmra.mxu0 %v810
      %v953 = vpop.f32.mrf.mxu0
      %v954 = vadd.f32 %v761, %v953
      %v955 = vpop.f32.mrf.mxu0
      %956 = vdwg.mxu0
      %v957 = vld [vmem:[#allocation2 + $0x2] sm:$0xff]
      %v958 = vld [vmem:[#allocation2 + $0x12] sm:$0xff]
      %v959 = vld [vmem:[#allocation2 + $0x22] sm:$0xff]
      %v960 = vld [vmem:[#allocation2 + $0x32] sm:$0xff]
      %v961 = vld [vmem:[#allocation2 + $0x42] sm:$0xff]
      %v962 = vld [vmem:[#allocation2 + $0x52] sm:$0xff]
      %v963 = vld [vmem:[#allocation2 + $0x62] sm:$0xff]
      %v964 = vld [vmem:[#allocation2 + $0x72] sm:$0xff]
      %v965 = vld [vmem:[#allocation2 + $0xa2] sm:$0xff]
      %v966 = vld [vmem:[#allocation2 + $0xb2] sm:$0xff]
      %v967 = vld [vmem:[#allocation2 + $0xc2] sm:$0xff]
      %v968 = vld [vmem:[#allocation2 + $0xd2] sm:$0xff]
      %v969 = vld [vmem:[#allocation2 + $0xe2] sm:$0xff]
      %v970 = vld [vmem:[#allocation2 + $0xf2] sm:$0xff]
      %v971 = vld [vmem:[#allocation2 + $0x102] sm:$0xff]
      %v972 = vld [vmem:[#allocation2 + $0x112] sm:$0xff]
      %v973 = vld [vmem:[%s1 + $0x10] sm:$0xff]
      %v975 = vsel %vm468, %v957, 0
      %v978 = vsel %vm468, %v958, 0
      %v981 = vsel %vm468, %v959, 0
      %v984 = vsel %vm468, %v960, 0
      %v987 = vsel %vm468, %v961, 0
      %v990 = vsel %vm468, %v962, 0
      %v993 = vsel %vm468, %v963, 0
      %v996 = vsel %vm468, %v964, 0
      %v999 = vsel %vm468, %v965, 0
      %v1002 = vsel %vm468, %v966, 0
      %v1005 = vsel %vm468, %v967, 0
      %v1008 = vsel %vm468, %v968, 0
      %v1011 = vsel %vm468, %v969, 0
      %v1014 = vsel %vm468, %v970, 0
      %v1017 = vsel %vm468, %v971, 0
      %v1020 = vsel %vm468, %v972, 0
      %1022 = vmatprep.subr.mxu0 0.0
      %1023 = vmatpush1.msra.mxu0 0.0
      %1024 = vmatprep.subr.mxu0 0.0
      %1025 = vmatpush1.msra.mxu0 0.0
      %1026 = vmatprep.subr.mxu0 0.0
      %1027 = vmatpush1.msra.mxu0 0.0
      %1028 = vmatprep.subr.mxu0 0.0
      %1029 = vmatpush1.msra.mxu0 0.0
      %1030 = vmatprep.subr.mxu0 0.0
      %1031 = vmatpush1.msra.mxu0 0.0
      %1032 = vmatprep.subr.mxu0 0.0
      %1033 = vmatpush1.msra.mxu0 0.0
      %1034 = vmatprep.subr.mxu0 0.0
      %1035 = vmatpush1.msra.mxu0 0.0
      %1036 = vmatprep.subr.mxu0 0.0
      %1037 = vmatpush1.msra.mxu0 0.0
      %1038 = vmatprep.subr.mxu0 0.0
      %1039 = vmatpush1.msra.mxu0 0.0
      %1040 = vmatprep.subr.mxu0 0.0
      %1041 = vmatpush1.msra.mxu0 0.0
      %1042 = vmatprep.subr.mxu0 0.0
      %1043 = vmatpush1.msra.mxu0 0.0
      %1044 = vmatprep.subr.mxu0 0.0
      %1045 = vmatpush1.msra.mxu0 0.0
      %1046 = vmatprep.subr.mxu0 0.0
      %1047 = vmatpush1.msra.mxu0 0.0
      %1048 = vmatprep.subr.mxu0 0.0
      %1049 = vmatpush1.msra.mxu0 0.0
      %1050 = vmatprep.subr.mxu0 0.0
      %1051 = vmatpush1.msra.mxu0 0.0
      %1052 = vmatprep.subr.mxu0 0.0
      %1053 = vmatpush1.msra.mxu0 %v973
      %1054 = vmatprep.subr.mxu0 0.0
      %1055 = vmatpush2.msra.mxu0 0.0
      %1056 = vmatprep.subr.mxu0 0.0
      %1057 = vmatpush2.msra.mxu0 0.0
      %1058 = vmatprep.subr.mxu0 0.0
      %1059 = vmatpush2.msra.mxu0 0.0
      %1060 = vmatprep.subr.mxu0 0.0
      %1061 = vmatpush2.msra.mxu0 0.0
      %1062 = vmatprep.subr.mxu0 0.0
      %1063 = vmatpush2.msra.mxu0 0.0
      %1064 = vmatprep.subr.mxu0 0.0
      %1065 = vmatpush2.msra.mxu0 0.0
      %1066 = vmatprep.subr.mxu0 0.0
      %1067 = vmatpush2.msra.mxu0 0.0
      %1068 = vmatprep.subr.mxu0 0.0
      %1069 = vmatpush2.msra.mxu0 0.0
      %1070 = vmatprep.subr.mxu0 0.0
      %1071 = vmatpush2.msra.mxu0 0.0
      %1072 = vmatprep.subr.mxu0 0.0
      %1073 = vmatpush2.msra.mxu0 0.0
      %1074 = vmatprep.subr.mxu0 0.0
      %1075 = vmatpush2.msra.mxu0 0.0
      %1076 = vmatprep.subr.mxu0 0.0
      %1077 = vmatpush2.msra.mxu0 0.0
      %1078 = vmatprep.subr.mxu0 0.0
      %1079 = vmatpush2.msra.mxu0 0.0
      %1080 = vmatprep.subr.mxu0 0.0
      %1081 = vmatpush2.msra.mxu0 0.0
      %1082 = vmatprep.subr.mxu0 0.0
      %1083 = vmatpush2.msra.mxu0 0.0
      %1084 = vmatprep.subr.mxu0 0.0
      %1085 = vmatpush2.msra.mxu0 0.0
      %1086 = vmatprep.mubr.f32.mxu0 0.0
      %1087 = vmatmul.mubr.f32.gmra.mxu0 %v975
      %v1088 = vpop.f32.mrf.mxu0
      %v1089 = vadd.f32 0.0, %v1088
      %v1090 = vpop.f32.mrf.mxu0
      %1091 = vmatprep.mubr.f32.mxu0 0.0
      %1092 = vmatmul.mubr.f32.gmra.mxu0 %v978
      %v1093 = vpop.f32.mrf.mxu0
      %v1094 = vadd.f32 0.0, %v1093
      %v1095 = vpop.f32.mrf.mxu0
      %1096 = vmatprep.mubr.f32.mxu0 0.0
      %1097 = vmatmul.mubr.f32.gmra.mxu0 %v981
      %v1098 = vpop.f32.mrf.mxu0
      %v1099 = vadd.f32 0.0, %v1098
      %v1100 = vpop.f32.mrf.mxu0
      %1101 = vmatprep.mubr.f32.mxu0 0.0
      %1102 = vmatmul.mubr.f32.gmra.mxu0 %v984
      %v1103 = vpop.f32.mrf.mxu0
      %v1104 = vadd.f32 0.0, %v1103
      %v1105 = vpop.f32.mrf.mxu0
      %1106 = vmatprep.mubr.f32.mxu0 0.0
      %1107 = vmatmul.mubr.f32.gmra.mxu0 %v987
      %v1108 = vpop.f32.mrf.mxu0
      %v1109 = vadd.f32 0.0, %v1108
      %v1110 = vpop.f32.mrf.mxu0
      %1111 = vmatprep.mubr.f32.mxu0 0.0
      %1112 = vmatmul.mubr.f32.gmra.mxu0 %v990
      %v1113 = vpop.f32.mrf.mxu0
      %v1114 = vadd.f32 0.0, %v1113
      %v1115 = vpop.f32.mrf.mxu0
      %1116 = vmatprep.mubr.f32.mxu0 0.0
      %1117 = vmatmul.mubr.f32.gmra.mxu0 %v993
      %v1118 = vpop.f32.mrf.mxu0
      %v1119 = vadd.f32 0.0, %v1118
      %v1120 = vpop.f32.mrf.mxu0
      %1121 = vmatprep.mubr.f32.mxu0 0.0
      %1122 = vmatmul.mubr.f32.gmra.mxu0 %v996
      %v1123 = vpop.f32.mrf.mxu0
      %v1124 = vadd.f32 0.0, %v1123
      %v1125 = vpop.f32.mrf.mxu0
      %1126 = vmatprep.mubr.f32.mxu0 0.0
      %1127 = vmatmul.mubr.f32.gmra.mxu0 %v999
      %v1128 = vpop.f32.mrf.mxu0
      %v1129 = vadd.f32 0.0, %v1128
      %v1130 = vpop.f32.mrf.mxu0
      %1131 = vmatprep.mubr.f32.mxu0 0.0
      %1132 = vmatmul.mubr.f32.gmra.mxu0 %v1002
      %v1133 = vpop.f32.mrf.mxu0
      %v1134 = vadd.f32 0.0, %v1133
      %v1135 = vpop.f32.mrf.mxu0
      %1136 = vmatprep.mubr.f32.mxu0 0.0
      %1137 = vmatmul.mubr.f32.gmra.mxu0 %v1005
      %v1138 = vpop.f32.mrf.mxu0
      %v1139 = vadd.f32 0.0, %v1138
      %v1140 = vpop.f32.mrf.mxu0
      %1141 = vmatprep.mubr.f32.mxu0 0.0
      %1142 = vmatmul.mubr.f32.gmra.mxu0 %v1008
      %v1143 = vpop.f32.mrf.mxu0
      %v1144 = vadd.f32 0.0, %v1143
      %v1145 = vpop.f32.mrf.mxu0
      %1146 = vmatprep.mubr.f32.mxu0 0.0
      %1147 = vmatmul.mubr.f32.gmra.mxu0 %v1011
      %v1148 = vpop.f32.mrf.mxu0
      %v1149 = vadd.f32 0.0, %v1148
      %v1150 = vpop.f32.mrf.mxu0
      %1151 = vmatprep.mubr.f32.mxu0 0.0
      %1152 = vmatmul.mubr.f32.gmra.mxu0 %v1014
      %v1153 = vpop.f32.mrf.mxu0
      %v1154 = vadd.f32 0.0, %v1153
      %v1155 = vpop.f32.mrf.mxu0
      %1156 = vmatprep.mubr.f32.mxu0 0.0
      %1157 = vmatmul.mubr.f32.gmra.mxu0 %v1017
      %v1158 = vpop.f32.mrf.mxu0
      %v1159 = vadd.f32 0.0, %v1158
      %v1160 = vpop.f32.mrf.mxu0
      %1161 = vmatprep.mubr.f32.mxu0 0.0
      %1162 = vmatmul.mubr.f32.gmra.mxu0 %v1020
      %v1163 = vpop.f32.mrf.mxu0
      %v1164 = vadd.f32 0.0, %v1163
      %v1165 = vpop.f32.mrf.mxu0
      %1166 = vdwg.mxu0
      %v1167 = vadd.f32 %v879, %v1089
      %v1168 = vadd.f32 %v884, %v1094
      %v1169 = vadd.f32 %v889, %v1099
      %v1170 = vadd.f32 %v894, %v1104
      %v1171 = vadd.f32 %v899, %v1109
      %v1172 = vadd.f32 %v904, %v1114
      %v1173 = vadd.f32 %v909, %v1119
      %v1174 = vadd.f32 %v914, %v1124
      %v1175 = vadd.f32 %v919, %v1129
      %v1176 = vadd.f32 %v924, %v1134
      %v1177 = vadd.f32 %v929, %v1139
      %v1178 = vadd.f32 %v934, %v1144
      %v1179 = vadd.f32 %v939, %v1149
      %v1180 = vadd.f32 %v944, %v1154
      %v1181 = vadd.f32 %v949, %v1159
      %v1182 = vadd.f32 %v954, %v1164
      %v1183 = vld [vmem:[%s520] sm:$0xff]
      %v1184 = vld [vmem:[%s520 + $0x10] sm:$0xff]
      %v1185 = vld [vmem:[%s520 + $0x20] sm:$0xff]
      %v1186 = vld [vmem:[%s520 + $0x30] sm:$0xff]
      %v1187 = vld [vmem:[%s520 + $0x40] sm:$0xff]
      %v1188 = vld [vmem:[%s520 + $0x50] sm:$0xff]
      %v1189 = vld [vmem:[%s520 + $0x60] sm:$0xff]
      %v1190 = vld [vmem:[%s520 + $0x70] sm:$0xff]
      %v1191 = vld [vmem:[%s520 + $0xa0] sm:$0xff]
      %v1192 = vld [vmem:[%s520 + $0xb0] sm:$0xff]
      %v1193 = vld [vmem:[%s520 + $0xc0] sm:$0xff]
      %v1194 = vld [vmem:[%s520 + $0xd0] sm:$0xff]
      %v1195 = vld [vmem:[%s520 + $0xe0] sm:$0xff]
      %v1196 = vld [vmem:[%s520 + $0xf0] sm:$0xff]
      %v1197 = vld [vmem:[%s520 + $0x100] sm:$0xff]
      %v1198 = vld [vmem:[%s520 + $0x110] sm:$0xff]
      %v1199 = vld [vmem:[%s1 + $0x18] sm:$0xff]
      %v1201 = vsel %vm468, %v1183, 0
      %v1204 = vsel %vm468, %v1184, 0
      %v1207 = vsel %vm468, %v1185, 0
      %v1210 = vsel %vm468, %v1186, 0
      %v1213 = vsel %vm468, %v1187, 0
      %v1216 = vsel %vm468, %v1188, 0
      %v1219 = vsel %vm468, %v1189, 0
      %v1222 = vsel %vm468, %v1190, 0
      %v1225 = vsel %vm468, %v1191, 0
      %v1228 = vsel %vm468, %v1192, 0
      %v1231 = vsel %vm468, %v1193, 0
      %v1234 = vsel %vm468, %v1194, 0
      %v1237 = vsel %vm468, %v1195, 0
      %v1240 = vsel %vm468, %v1196, 0
      %v1243 = vsel %vm468, %v1197, 0
      %v1246 = vsel %vm468, %v1198, 0
      %1248 = vmatprep.subr.mxu0 0.0
      %1249 = vmatpush1.msra.mxu0 0.0
      %1250 = vmatprep.subr.mxu0 0.0
      %1251 = vmatpush1.msra.mxu0 0.0
      %1252 = vmatprep.subr.mxu0 0.0
      %1253 = vmatpush1.msra.mxu0 0.0
      %1254 = vmatprep.subr.mxu0 0.0
      %1255 = vmatpush1.msra.mxu0 0.0
      %1256 = vmatprep.subr.mxu0 0.0
      %1257 = vmatpush1.msra.mxu0 0.0
      %1258 = vmatprep.subr.mxu0 0.0
      %1259 = vmatpush1.msra.mxu0 0.0
      %1260 = vmatprep.subr.mxu0 0.0
      %1261 = vmatpush1.msra.mxu0 0.0
      %1262 = vmatprep.subr.mxu0 0.0
      %1263 = vmatpush1.msra.mxu0 0.0
      %1264 = vmatprep.subr.mxu0 0.0
      %1265 = vmatpush1.msra.mxu0 0.0
      %1266 = vmatprep.subr.mxu0 0.0
      %1267 = vmatpush1.msra.mxu0 0.0
      %1268 = vmatprep.subr.mxu0 0.0
      %1269 = vmatpush1.msra.mxu0 0.0
      %1270 = vmatprep.subr.mxu0 0.0
      %1271 = vmatpush1.msra.mxu0 0.0
      %1272 = vmatprep.subr.mxu0 0.0
      %1273 = vmatpush1.msra.mxu0 0.0
      %1274 = vmatprep.subr.mxu0 0.0
      %1275 = vmatpush1.msra.mxu0 0.0
      %1276 = vmatprep.subr.mxu0 0.0
      %1277 = vmatpush1.msra.mxu0 0.0
      %1278 = vmatprep.subr.mxu0 0.0
      %1279 = vmatpush1.msra.mxu0 %v1199
      %1280 = vmatprep.subr.mxu0 0.0
      %1281 = vmatpush2.msra.mxu0 0.0
      %1282 = vmatprep.subr.mxu0 0.0
      %1283 = vmatpush2.msra.mxu0 0.0
      %1284 = vmatprep.subr.mxu0 0.0
      %1285 = vmatpush2.msra.mxu0 0.0
      %1286 = vmatprep.subr.mxu0 0.0
      %1287 = vmatpush2.msra.mxu0 0.0
      %1288 = vmatprep.subr.mxu0 0.0
      %1289 = vmatpush2.msra.mxu0 0.0
      %1290 = vmatprep.subr.mxu0 0.0
      %1291 = vmatpush2.msra.mxu0 0.0
      %1292 = vmatprep.subr.mxu0 0.0
      %1293 = vmatpush2.msra.mxu0 0.0
      %1294 = vmatprep.subr.mxu0 0.0
      %1295 = vmatpush2.msra.mxu0 0.0
      %1296 = vmatprep.subr.mxu0 0.0
      %1297 = vmatpush2.msra.mxu0 0.0
      %1298 = vmatprep.subr.mxu0 0.0
      %1299 = vmatpush2.msra.mxu0 0.0
      %1300 = vmatprep.subr.mxu0 0.0
      %1301 = vmatpush2.msra.mxu0 0.0
      %1302 = vmatprep.subr.mxu0 0.0
      %1303 = vmatpush2.msra.mxu0 0.0
      %1304 = vmatprep.subr.mxu0 0.0
      %1305 = vmatpush2.msra.mxu0 0.0
      %1306 = vmatprep.subr.mxu0 0.0
      %1307 = vmatpush2.msra.mxu0 0.0
      %1308 = vmatprep.subr.mxu0 0.0
      %1309 = vmatpush2.msra.mxu0 0.0
      %1310 = vmatprep.subr.mxu0 0.0
      %1311 = vmatpush2.msra.mxu0 0.0
      %1312 = vmatprep.mubr.f32.mxu0 0.0
      %1313 = vmatmul.mubr.f32.gmra.mxu0 %v1201
      %v1314 = vpop.f32.mrf.mxu0
      %v1315 = vadd.f32 0.0, %v1314
      %v1316 = vpop.f32.mrf.mxu0
      %1317 = vmatprep.mubr.f32.mxu0 0.0
      %1318 = vmatmul.mubr.f32.gmra.mxu0 %v1204
      %v1319 = vpop.f32.mrf.mxu0
      %v1320 = vadd.f32 0.0, %v1319
      %v1321 = vpop.f32.mrf.mxu0
      %1322 = vmatprep.mubr.f32.mxu0 0.0
      %1323 = vmatmul.mubr.f32.gmra.mxu0 %v1207
      %v1324 = vpop.f32.mrf.mxu0
      %v1325 = vadd.f32 0.0, %v1324
      %v1326 = vpop.f32.mrf.mxu0
      %1327 = vmatprep.mubr.f32.mxu0 0.0
      %1328 = vmatmul.mubr.f32.gmra.mxu0 %v1210
      %v1329 = vpop.f32.mrf.mxu0
      %v1330 = vadd.f32 0.0, %v1329
      %v1331 = vpop.f32.mrf.mxu0
      %1332 = vmatprep.mubr.f32.mxu0 0.0
      %1333 = vmatmul.mubr.f32.gmra.mxu0 %v1213
      %v1334 = vpop.f32.mrf.mxu0
      %v1335 = vadd.f32 0.0, %v1334
      %v1336 = vpop.f32.mrf.mxu0
      %1337 = vmatprep.mubr.f32.mxu0 0.0
      %1338 = vmatmul.mubr.f32.gmra.mxu0 %v1216
      %v1339 = vpop.f32.mrf.mxu0
      %v1340 = vadd.f32 0.0, %v1339
      %v1341 = vpop.f32.mrf.mxu0
      %1342 = vmatprep.mubr.f32.mxu0 0.0
      %1343 = vmatmul.mubr.f32.gmra.mxu0 %v1219
      %v1344 = vpop.f32.mrf.mxu0
      %v1345 = vadd.f32 0.0, %v1344
      %v1346 = vpop.f32.mrf.mxu0
      %1347 = vmatprep.mubr.f32.mxu0 0.0
      %1348 = vmatmul.mubr.f32.gmra.mxu0 %v1222
      %v1349 = vpop.f32.mrf.mxu0
      %v1350 = vadd.f32 0.0, %v1349
      %v1351 = vpop.f32.mrf.mxu0
      %1352 = vmatprep.mubr.f32.mxu0 0.0
      %1353 = vmatmul.mubr.f32.gmra.mxu0 %v1225
      %v1354 = vpop.f32.mrf.mxu0
      %v1355 = vadd.f32 0.0, %v1354
      %v1356 = vpop.f32.mrf.mxu0
      %1357 = vmatprep.mubr.f32.mxu0 0.0
      %1358 = vmatmul.mubr.f32.gmra.mxu0 %v1228
      %v1359 = vpop.f32.mrf.mxu0
      %v1360 = vadd.f32 0.0, %v1359
      %v1361 = vpop.f32.mrf.mxu0
      %1362 = vmatprep.mubr.f32.mxu0 0.0
      %1363 = vmatmul.mubr.f32.gmra.mxu0 %v1231
      %v1364 = vpop.f32.mrf.mxu0
      %v1365 = vadd.f32 0.0, %v1364
      %v1366 = vpop.f32.mrf.mxu0
      %1367 = vmatprep.mubr.f32.mxu0 0.0
      %1368 = vmatmul.mubr.f32.gmra.mxu0 %v1234
      %v1369 = vpop.f32.mrf.mxu0
      %v1370 = vadd.f32 0.0, %v1369
      %v1371 = vpop.f32.mrf.mxu0
      %1372 = vmatprep.mubr.f32.mxu0 0.0
      %1373 = vmatmul.mubr.f32.gmra.mxu0 %v1237
      %v1374 = vpop.f32.mrf.mxu0
      %v1375 = vadd.f32 0.0, %v1374
      %v1376 = vpop.f32.mrf.mxu0
      %1377 = vmatprep.mubr.f32.mxu0 0.0
      %1378 = vmatmul.mubr.f32.gmra.mxu0 %v1240
      %v1379 = vpop.f32.mrf.mxu0
      %v1380 = vadd.f32 0.0, %v1379
      %v1381 = vpop.f32.mrf.mxu0
      %1382 = vmatprep.mubr.f32.mxu0 0.0
      %1383 = vmatmul.mubr.f32.gmra.mxu0 %v1243
      %v1384 = vpop.f32.mrf.mxu0
      %v1385 = vadd.f32 0.0, %v1384
      %v1386 = vpop.f32.mrf.mxu0
      %1387 = vmatprep.mubr.f32.mxu0 0.0
      %1388 = vmatmul.mubr.f32.gmra.mxu0 %v1246
      %v1389 = vpop.f32.mrf.mxu0
      %v1390 = vadd.f32 0.0, %v1389
      %v1391 = vpop.f32.mrf.mxu0
      %1392 = vdwg.mxu0
      %v1393 = vadd.f32 %v1167, %v1315
      %v1394 = vadd.f32 %v1168, %v1320
      %v1395 = vadd.f32 %v1169, %v1325
      %v1396 = vadd.f32 %v1170, %v1330
      %v1397 = vadd.f32 %v1171, %v1335
      %v1398 = vadd.f32 %v1172, %v1340
      %v1399 = vadd.f32 %v1173, %v1345
      %v1400 = vadd.f32 %v1174, %v1350
      %v1401 = vadd.f32 %v1175, %v1355
      %v1402 = vadd.f32 %v1176, %v1360
      %v1403 = vadd.f32 %v1177, %v1365
      %v1404 = vadd.f32 %v1178, %v1370
      %v1405 = vadd.f32 %v1179, %v1375
      %v1406 = vadd.f32 %v1180, %v1380
      %v1407 = vadd.f32 %v1181, %v1385
      %v1408 = vadd.f32 %v1182, %v1390
      %v1409 = vld [vmem:[%s520 + $0x1] sm:$0xff]
      %v1410 = vld [vmem:[%s520 + $0x11] sm:$0xff]
      %v1411 = vld [vmem:[%s520 + $0x21] sm:$0xff]
      %v1412 = vld [vmem:[%s520 + $0x31] sm:$0xff]
      %v1413 = vld [vmem:[%s520 + $0x41] sm:$0xff]
      %v1414 = vld [vmem:[%s520 + $0x51] sm:$0xff]
      %v1415 = vld [vmem:[%s520 + $0x61] sm:$0xff]
      %v1416 = vld [vmem:[%s520 + $0x71] sm:$0xff]
      %v1417 = vld [vmem:[%s520 + $0xa1] sm:$0xff]
      %v1418 = vld [vmem:[%s520 + $0xb1] sm:$0xff]
      %v1419 = vld [vmem:[%s520 + $0xc1] sm:$0xff]
      %v1420 = vld [vmem:[%s520 + $0xd1] sm:$0xff]
      %v1421 = vld [vmem:[%s520 + $0xe1] sm:$0xff]
      %v1422 = vld [vmem:[%s520 + $0xf1] sm:$0xff]
      %v1423 = vld [vmem:[%s520 + $0x101] sm:$0xff]
      %v1424 = vld [vmem:[%s520 + $0x111] sm:$0xff]
      %v1425 = vld [vmem:[%s1 + $0x20] sm:$0xff]
      %v1427 = vsel %vm468, %v1409, 0
      %v1430 = vsel %vm468, %v1410, 0
      %v1433 = vsel %vm468, %v1411, 0
      %v1436 = vsel %vm468, %v1412, 0
      %v1439 = vsel %vm468, %v1413, 0
      %v1442 = vsel %vm468, %v1414, 0
      %v1445 = vsel %vm468, %v1415, 0
      %v1448 = vsel %vm468, %v1416, 0
      %v1451 = vsel %vm468, %v1417, 0
      %v1454 = vsel %vm468, %v1418, 0
      %v1457 = vsel %vm468, %v1419, 0
      %v1460 = vsel %vm468, %v1420, 0
      %v1463 = vsel %vm468, %v1421, 0
      %v1466 = vsel %vm468, %v1422, 0
      %v1469 = vsel %vm468, %v1423, 0
      %v1472 = vsel %vm468, %v1424, 0
      %1474 = vmatprep.subr.mxu0 0.0
      %1475 = vmatpush1.msra.mxu0 0.0
      %1476 = vmatprep.subr.mxu0 0.0
      %1477 = vmatpush1.msra.mxu0 0.0
      %1478 = vmatprep.subr.mxu0 0.0
      %1479 = vmatpush1.msra.mxu0 0.0
      %1480 = vmatprep.subr.mxu0 0.0
      %1481 = vmatpush1.msra.mxu0 0.0
      %1482 = vmatprep.subr.mxu0 0.0
      %1483 = vmatpush1.msra.mxu0 0.0
      %1484 = vmatprep.subr.mxu0 0.0
      %1485 = vmatpush1.msra.mxu0 0.0
      %1486 = vmatprep.subr.mxu0 0.0
      %1487 = vmatpush1.msra.mxu0 0.0
      %1488 = vmatprep.subr.mxu0 0.0
      %1489 = vmatpush1.msra.mxu0 0.0
      %1490 = vmatprep.subr.mxu0 0.0
      %1491 = vmatpush1.msra.mxu0 0.0
      %1492 = vmatprep.subr.mxu0 0.0
      %1493 = vmatpush1.msra.mxu0 0.0
      %1494 = vmatprep.subr.mxu0 0.0
      %1495 = vmatpush1.msra.mxu0 0.0
      %1496 = vmatprep.subr.mxu0 0.0
      %1497 = vmatpush1.msra.mxu0 0.0
      %1498 = vmatprep.subr.mxu0 0.0
      %1499 = vmatpush1.msra.mxu0 0.0
      %1500 = vmatprep.subr.mxu0 0.0
      %1501 = vmatpush1.msra.mxu0 0.0
      %1502 = vmatprep.subr.mxu0 0.0
      %1503 = vmatpush1.msra.mxu0 0.0
      %1504 = vmatprep.subr.mxu0 0.0
      %1505 = vmatpush1.msra.mxu0 %v1425
      %1506 = vmatprep.subr.mxu0 0.0
      %1507 = vmatpush2.msra.mxu0 0.0
      %1508 = vmatprep.subr.mxu0 0.0
      %1509 = vmatpush2.msra.mxu0 0.0
      %1510 = vmatprep.subr.mxu0 0.0
      %1511 = vmatpush2.msra.mxu0 0.0
      %1512 = vmatprep.subr.mxu0 0.0
      %1513 = vmatpush2.msra.mxu0 0.0
      %1514 = vmatprep.subr.mxu0 0.0
      %1515 = vmatpush2.msra.mxu0 0.0
      %1516 = vmatprep.subr.mxu0 0.0
      %1517 = vmatpush2.msra.mxu0 0.0
      %1518 = vmatprep.subr.mxu0 0.0
      %1519 = vmatpush2.msra.mxu0 0.0
      %1520 = vmatprep.subr.mxu0 0.0
      %1521 = vmatpush2.msra.mxu0 0.0
      %1522 = vmatprep.subr.mxu0 0.0
      %1523 = vmatpush2.msra.mxu0 0.0
      %1524 = vmatprep.subr.mxu0 0.0
      %1525 = vmatpush2.msra.mxu0 0.0
      %1526 = vmatprep.subr.mxu0 0.0
      %1527 = vmatpush2.msra.mxu0 0.0
      %1528 = vmatprep.subr.mxu0 0.0
      %1529 = vmatpush2.msra.mxu0 0.0
      %1530 = vmatprep.subr.mxu0 0.0
      %1531 = vmatpush2.msra.mxu0 0.0
      %1532 = vmatprep.subr.mxu0 0.0
      %1533 = vmatpush2.msra.mxu0 0.0
      %1534 = vmatprep.subr.mxu0 0.0
      %1535 = vmatpush2.msra.mxu0 0.0
      %1536 = vmatprep.subr.mxu0 0.0
      %1537 = vmatpush2.msra.mxu0 0.0
      %1538 = vmatprep.mubr.f32.mxu0 0.0
      %1539 = vmatmul.mubr.f32.gmra.mxu0 %v1427
      %v1540 = vpop.f32.mrf.mxu0
      %v1541 = vadd.f32 0.0, %v1540
      %v1542 = vpop.f32.mrf.mxu0
      %1543 = vmatprep.mubr.f32.mxu0 0.0
      %1544 = vmatmul.mubr.f32.gmra.mxu0 %v1430
      %v1545 = vpop.f32.mrf.mxu0
      %v1546 = vadd.f32 0.0, %v1545
      %v1547 = vpop.f32.mrf.mxu0
      %1548 = vmatprep.mubr.f32.mxu0 0.0
      %1549 = vmatmul.mubr.f32.gmra.mxu0 %v1433
      %v1550 = vpop.f32.mrf.mxu0
      %v1551 = vadd.f32 0.0, %v1550
      %v1552 = vpop.f32.mrf.mxu0
      %1553 = vmatprep.mubr.f32.mxu0 0.0
      %1554 = vmatmul.mubr.f32.gmra.mxu0 %v1436
      %v1555 = vpop.f32.mrf.mxu0
      %v1556 = vadd.f32 0.0, %v1555
      %v1557 = vpop.f32.mrf.mxu0
      %1558 = vmatprep.mubr.f32.mxu0 0.0
      %1559 = vmatmul.mubr.f32.gmra.mxu0 %v1439
      %v1560 = vpop.f32.mrf.mxu0
      %v1561 = vadd.f32 0.0, %v1560
      %v1562 = vpop.f32.mrf.mxu0
      %1563 = vmatprep.mubr.f32.mxu0 0.0
      %1564 = vmatmul.mubr.f32.gmra.mxu0 %v1442
      %v1565 = vpop.f32.mrf.mxu0
      %v1566 = vadd.f32 0.0, %v1565
      %v1567 = vpop.f32.mrf.mxu0
      %1568 = vmatprep.mubr.f32.mxu0 0.0
      %1569 = vmatmul.mubr.f32.gmra.mxu0 %v1445
      %v1570 = vpop.f32.mrf.mxu0
      %v1571 = vadd.f32 0.0, %v1570
      %v1572 = vpop.f32.mrf.mxu0
      %1573 = vmatprep.mubr.f32.mxu0 0.0
      %1574 = vmatmul.mubr.f32.gmra.mxu0 %v1448
      %v1575 = vpop.f32.mrf.mxu0
      %v1576 = vadd.f32 0.0, %v1575
      %v1577 = vpop.f32.mrf.mxu0
      %1578 = vmatprep.mubr.f32.mxu0 0.0
      %1579 = vmatmul.mubr.f32.gmra.mxu0 %v1451
      %v1580 = vpop.f32.mrf.mxu0
      %v1581 = vadd.f32 0.0, %v1580
      %v1582 = vpop.f32.mrf.mxu0
      %1583 = vmatprep.mubr.f32.mxu0 0.0
      %1584 = vmatmul.mubr.f32.gmra.mxu0 %v1454
      %v1585 = vpop.f32.mrf.mxu0
      %v1586 = vadd.f32 0.0, %v1585
      %v1587 = vpop.f32.mrf.mxu0
      %1588 = vmatprep.mubr.f32.mxu0 0.0
      %1589 = vmatmul.mubr.f32.gmra.mxu0 %v1457
      %v1590 = vpop.f32.mrf.mxu0
      %v1591 = vadd.f32 0.0, %v1590
      %v1592 = vpop.f32.mrf.mxu0
      %1593 = vmatprep.mubr.f32.mxu0 0.0
      %1594 = vmatmul.mubr.f32.gmra.mxu0 %v1460
      %v1595 = vpop.f32.mrf.mxu0
      %v1596 = vadd.f32 0.0, %v1595
      %v1597 = vpop.f32.mrf.mxu0
      %1598 = vmatprep.mubr.f32.mxu0 0.0
      %1599 = vmatmul.mubr.f32.gmra.mxu0 %v1463
      %v1600 = vpop.f32.mrf.mxu0
      %v1601 = vadd.f32 0.0, %v1600
      %v1602 = vpop.f32.mrf.mxu0
      %1603 = vmatprep.mubr.f32.mxu0 0.0
      %1604 = vmatmul.mubr.f32.gmra.mxu0 %v1466
      %v1605 = vpop.f32.mrf.mxu0
      %v1606 = vadd.f32 0.0, %v1605
      %v1607 = vpop.f32.mrf.mxu0
      %1608 = vmatprep.mubr.f32.mxu0 0.0
      %1609 = vmatmul.mubr.f32.gmra.mxu0 %v1469
      %v1610 = vpop.f32.mrf.mxu0
      %v1611 = vadd.f32 0.0, %v1610
      %v1612 = vpop.f32.mrf.mxu0
      %1613 = vmatprep.mubr.f32.mxu0 0.0
      %1614 = vmatmul.mubr.f32.gmra.mxu0 %v1472
      %v1615 = vpop.f32.mrf.mxu0
      %v1616 = vadd.f32 0.0, %v1615
      %v1617 = vpop.f32.mrf.mxu0
      %1618 = vdwg.mxu0
      %v1619 = vadd.f32 %v1393, %v1541
      %v1620 = vadd.f32 %v1394, %v1546
      %v1621 = vadd.f32 %v1395, %v1551
      %v1622 = vadd.f32 %v1396, %v1556
      %v1623 = vadd.f32 %v1397, %v1561
      %v1624 = vadd.f32 %v1398, %v1566
      %v1625 = vadd.f32 %v1399, %v1571
      %v1626 = vadd.f32 %v1400, %v1576
      %v1627 = vadd.f32 %v1401, %v1581
      %v1628 = vadd.f32 %v1402, %v1586
      %v1629 = vadd.f32 %v1403, %v1591
      %v1630 = vadd.f32 %v1404, %v1596
      %v1631 = vadd.f32 %v1405, %v1601
      %v1632 = vadd.f32 %v1406, %v1606
      %v1633 = vadd.f32 %v1407, %v1611
      %v1634 = vadd.f32 %v1408, %v1616
      %v1635 = vld [vmem:[%s520 + $0x2] sm:$0xff]
      %v1636 = vld [vmem:[%s520 + $0x12] sm:$0xff]
      %v1637 = vld [vmem:[%s520 + $0x22] sm:$0xff]
      %v1638 = vld [vmem:[%s520 + $0x32] sm:$0xff]
      %v1639 = vld [vmem:[%s520 + $0x42] sm:$0xff]
      %v1640 = vld [vmem:[%s520 + $0x52] sm:$0xff]
      %v1641 = vld [vmem:[%s520 + $0x62] sm:$0xff]
      %v1642 = vld [vmem:[%s520 + $0x72] sm:$0xff]
      %v1643 = vld [vmem:[%s520 + $0xa2] sm:$0xff]
      %v1644 = vld [vmem:[%s520 + $0xb2] sm:$0xff]
      %v1645 = vld [vmem:[%s520 + $0xc2] sm:$0xff]
      %v1646 = vld [vmem:[%s520 + $0xd2] sm:$0xff]
      %v1647 = vld [vmem:[%s520 + $0xe2] sm:$0xff]
      %v1648 = vld [vmem:[%s520 + $0xf2] sm:$0xff]
      %v1649 = vld [vmem:[%s520 + $0x102] sm:$0xff]
      %v1650 = vld [vmem:[%s520 + $0x112] sm:$0xff]
      %v1651 = vld [vmem:[%s1 + $0x28] sm:$0xff]
      %v1653 = vsel %vm468, %v1635, 0
      %v1656 = vsel %vm468, %v1636, 0
      %v1659 = vsel %vm468, %v1637, 0
      %v1662 = vsel %vm468, %v1638, 0
      %v1665 = vsel %vm468, %v1639, 0
      %v1668 = vsel %vm468, %v1640, 0
      %v1671 = vsel %vm468, %v1641, 0
      %v1674 = vsel %vm468, %v1642, 0
      %v1677 = vsel %vm468, %v1643, 0
      %v1680 = vsel %vm468, %v1644, 0
      %v1683 = vsel %vm468, %v1645, 0
      %v1686 = vsel %vm468, %v1646, 0
      %v1689 = vsel %vm468, %v1647, 0
      %v1692 = vsel %vm468, %v1648, 0
      %v1695 = vsel %vm468, %v1649, 0
      %v1698 = vsel %vm468, %v1650, 0
      %1700 = vmatprep.subr.mxu0 0.0
      %1701 = vmatpush1.msra.mxu0 0.0
      %1702 = vmatprep.subr.mxu0 0.0
      %1703 = vmatpush1.msra.mxu0 0.0
      %1704 = vmatprep.subr.mxu0 0.0
      %1705 = vmatpush1.msra.mxu0 0.0
      %1706 = vmatprep.subr.mxu0 0.0
      %1707 = vmatpush1.msra.mxu0 0.0
      %1708 = vmatprep.subr.mxu0 0.0
      %1709 = vmatpush1.msra.mxu0 0.0
      %1710 = vmatprep.subr.mxu0 0.0
      %1711 = vmatpush1.msra.mxu0 0.0
      %1712 = vmatprep.subr.mxu0 0.0
      %1713 = vmatpush1.msra.mxu0 0.0
      %1714 = vmatprep.subr.mxu0 0.0
      %1715 = vmatpush1.msra.mxu0 0.0
      %1716 = vmatprep.subr.mxu0 0.0
      %1717 = vmatpush1.msra.mxu0 0.0
      %1718 = vmatprep.subr.mxu0 0.0
      %1719 = vmatpush1.msra.mxu0 0.0
      %1720 = vmatprep.subr.mxu0 0.0
      %1721 = vmatpush1.msra.mxu0 0.0
      %1722 = vmatprep.subr.mxu0 0.0
      %1723 = vmatpush1.msra.mxu0 0.0
      %1724 = vmatprep.subr.mxu0 0.0
      %1725 = vmatpush1.msra.mxu0 0.0
      %1726 = vmatprep.subr.mxu0 0.0
      %1727 = vmatpush1.msra.mxu0 0.0
      %1728 = vmatprep.subr.mxu0 0.0
      %1729 = vmatpush1.msra.mxu0 0.0
      %1730 = vmatprep.subr.mxu0 0.0
      %1731 = vmatpush1.msra.mxu0 %v1651
      %1732 = vmatprep.subr.mxu0 0.0
      %1733 = vmatpush2.msra.mxu0 0.0
      %1734 = vmatprep.subr.mxu0 0.0
      %1735 = vmatpush2.msra.mxu0 0.0
      %1736 = vmatprep.subr.mxu0 0.0
      %1737 = vmatpush2.msra.mxu0 0.0
      %1738 = vmatprep.subr.mxu0 0.0
      %1739 = vmatpush2.msra.mxu0 0.0
      %1740 = vmatprep.subr.mxu0 0.0
      %1741 = vmatpush2.msra.mxu0 0.0
      %1742 = vmatprep.subr.mxu0 0.0
      %1743 = vmatpush2.msra.mxu0 0.0
      %1744 = vmatprep.subr.mxu0 0.0
      %1745 = vmatpush2.msra.mxu0 0.0
      %1746 = vmatprep.subr.mxu0 0.0
      %1747 = vmatpush2.msra.mxu0 0.0
      %1748 = vmatprep.subr.mxu0 0.0
      %1749 = vmatpush2.msra.mxu0 0.0
      %1750 = vmatprep.subr.mxu0 0.0
      %1751 = vmatpush2.msra.mxu0 0.0
      %1752 = vmatprep.subr.mxu0 0.0
      %1753 = vmatpush2.msra.mxu0 0.0
      %1754 = vmatprep.subr.mxu0 0.0
      %1755 = vmatpush2.msra.mxu0 0.0
      %1756 = vmatprep.subr.mxu0 0.0
      %1757 = vmatpush2.msra.mxu0 0.0
      %1758 = vmatprep.subr.mxu0 0.0
      %1759 = vmatpush2.msra.mxu0 0.0
      %1760 = vmatprep.subr.mxu0 0.0
      %1761 = vmatpush2.msra.mxu0 0.0
      %1762 = vmatprep.subr.mxu0 0.0
      %1763 = vmatpush2.msra.mxu0 0.0
      %1764 = vmatprep.mubr.f32.mxu0 0.0
      %1765 = vmatmul.mubr.f32.gmra.mxu0 %v1653
      %v1766 = vpop.f32.mrf.mxu0
      %v1767 = vadd.f32 0.0, %v1766
      %v1768 = vpop.f32.mrf.mxu0
      %1769 = vmatprep.mubr.f32.mxu0 0.0
      %1770 = vmatmul.mubr.f32.gmra.mxu0 %v1656
      %v1771 = vpop.f32.mrf.mxu0
      %v1772 = vadd.f32 0.0, %v1771
      %v1773 = vpop.f32.mrf.mxu0
      %1774 = vmatprep.mubr.f32.mxu0 0.0
      %1775 = vmatmul.mubr.f32.gmra.mxu0 %v1659
      %v1776 = vpop.f32.mrf.mxu0
      %v1777 = vadd.f32 0.0, %v1776
      %v1778 = vpop.f32.mrf.mxu0
      %1779 = vmatprep.mubr.f32.mxu0 0.0
      %1780 = vmatmul.mubr.f32.gmra.mxu0 %v1662
      %v1781 = vpop.f32.mrf.mxu0
      %v1782 = vadd.f32 0.0, %v1781
      %v1783 = vpop.f32.mrf.mxu0
      %1784 = vmatprep.mubr.f32.mxu0 0.0
      %1785 = vmatmul.mubr.f32.gmra.mxu0 %v1665
      %v1786 = vpop.f32.mrf.mxu0
      %v1787 = vadd.f32 0.0, %v1786
      %v1788 = vpop.f32.mrf.mxu0
      %1789 = vmatprep.mubr.f32.mxu0 0.0
      %1790 = vmatmul.mubr.f32.gmra.mxu0 %v1668
      %v1791 = vpop.f32.mrf.mxu0
      %v1792 = vadd.f32 0.0, %v1791
      %v1793 = vpop.f32.mrf.mxu0
      %1794 = vmatprep.mubr.f32.mxu0 0.0
      %1795 = vmatmul.mubr.f32.gmra.mxu0 %v1671
      %v1796 = vpop.f32.mrf.mxu0
      %v1797 = vadd.f32 0.0, %v1796
      %v1798 = vpop.f32.mrf.mxu0
      %1799 = vmatprep.mubr.f32.mxu0 0.0
      %1800 = vmatmul.mubr.f32.gmra.mxu0 %v1674
      %v1801 = vpop.f32.mrf.mxu0
      %v1802 = vadd.f32 0.0, %v1801
      %v1803 = vpop.f32.mrf.mxu0
      %1804 = vmatprep.mubr.f32.mxu0 0.0
      %1805 = vmatmul.mubr.f32.gmra.mxu0 %v1677
      %v1806 = vpop.f32.mrf.mxu0
      %v1807 = vadd.f32 0.0, %v1806
      %v1808 = vpop.f32.mrf.mxu0
      %1809 = vmatprep.mubr.f32.mxu0 0.0
      %1810 = vmatmul.mubr.f32.gmra.mxu0 %v1680
      %v1811 = vpop.f32.mrf.mxu0
      %v1812 = vadd.f32 0.0, %v1811
      %v1813 = vpop.f32.mrf.mxu0
      %1814 = vmatprep.mubr.f32.mxu0 0.0
      %1815 = vmatmul.mubr.f32.gmra.mxu0 %v1683
      %v1816 = vpop.f32.mrf.mxu0
      %v1817 = vadd.f32 0.0, %v1816
      %v1818 = vpop.f32.mrf.mxu0
      %1819 = vmatprep.mubr.f32.mxu0 0.0
      %1820 = vmatmul.mubr.f32.gmra.mxu0 %v1686
      %v1821 = vpop.f32.mrf.mxu0
      %v1822 = vadd.f32 0.0, %v1821
      %v1823 = vpop.f32.mrf.mxu0
      %1824 = vmatprep.mubr.f32.mxu0 0.0
      %1825 = vmatmul.mubr.f32.gmra.mxu0 %v1689
      %v1826 = vpop.f32.mrf.mxu0
      %v1827 = vadd.f32 0.0, %v1826
      %v1828 = vpop.f32.mrf.mxu0
      %1829 = vmatprep.mubr.f32.mxu0 0.0
      %1830 = vmatmul.mubr.f32.gmra.mxu0 %v1692
      %v1831 = vpop.f32.mrf.mxu0
      %v1832 = vadd.f32 0.0, %v1831
      %v1833 = vpop.f32.mrf.mxu0
      %1834 = vmatprep.mubr.f32.mxu0 0.0
      %1835 = vmatmul.mubr.f32.gmra.mxu0 %v1695
      %v1836 = vpop.f32.mrf.mxu0
      %v1837 = vadd.f32 0.0, %v1836
      %v1838 = vpop.f32.mrf.mxu0
      %1839 = vmatprep.mubr.f32.mxu0 0.0
      %1840 = vmatmul.mubr.f32.gmra.mxu0 %v1698
      %v1841 = vpop.f32.mrf.mxu0
      %v1842 = vadd.f32 0.0, %v1841
      %v1843 = vpop.f32.mrf.mxu0
      %1844 = vdwg.mxu0
      %v1845 = vadd.f32 %v1619, %v1767
      %v1846 = vadd.f32 %v1620, %v1772
      %v1847 = vadd.f32 %v1621, %v1777
      %v1848 = vadd.f32 %v1622, %v1782
      %v1849 = vadd.f32 %v1623, %v1787
      %v1850 = vadd.f32 %v1624, %v1792
      %v1851 = vadd.f32 %v1625, %v1797
      %v1852 = vadd.f32 %v1626, %v1802
      %v1853 = vadd.f32 %v1627, %v1807
      %v1854 = vadd.f32 %v1628, %v1812
      %v1855 = vadd.f32 %v1629, %v1817
      %v1856 = vadd.f32 %v1630, %v1822
      %v1857 = vadd.f32 %v1631, %v1827
      %v1858 = vadd.f32 %v1632, %v1832
      %v1859 = vadd.f32 %v1633, %v1837
      %v1860 = vadd.f32 %v1634, %v1842
      %s1861 = scalar_lea.vmem [#allocation2], 32
      %v1862 = vld [vmem:[%s1861] sm:$0xff]
      %v1863 = vld [vmem:[%s1861 + $0x10] sm:$0xff]
      %v1864 = vld [vmem:[%s1861 + $0x20] sm:$0xff]
      %v1865 = vld [vmem:[%s1861 + $0x30] sm:$0xff]
      %v1866 = vld [vmem:[%s1861 + $0x40] sm:$0xff]
      %v1867 = vld [vmem:[%s1861 + $0x50] sm:$0xff]
      %v1868 = vld [vmem:[%s1861 + $0x60] sm:$0xff]
      %v1869 = vld [vmem:[%s1861 + $0x70] sm:$0xff]
      %v1870 = vld [vmem:[%s1861 + $0xa0] sm:$0xff]
      %v1871 = vld [vmem:[%s1861 + $0xb0] sm:$0xff]
      %v1872 = vld [vmem:[%s1861 + $0xc0] sm:$0xff]
      %v1873 = vld [vmem:[%s1861 + $0xd0] sm:$0xff]
      %v1874 = vld [vmem:[%s1861 + $0xe0] sm:$0xff]
      %v1875 = vld [vmem:[%s1861 + $0xf0] sm:$0xff]
      %v1876 = vld [vmem:[%s1861 + $0x100] sm:$0xff]
      %v1877 = vld [vmem:[%s1861 + $0x110] sm:$0xff]
      %v1878 = vld [vmem:[%s1 + $0x30] sm:$0xff]
      %v1880 = vsel %vm468, %v1862, 0
      %v1883 = vsel %vm468, %v1863, 0
      %v1886 = vsel %vm468, %v1864, 0
      %v1889 = vsel %vm468, %v1865, 0
      %v1892 = vsel %vm468, %v1866, 0
      %v1895 = vsel %vm468, %v1867, 0
      %v1898 = vsel %vm468, %v1868, 0
      %v1901 = vsel %vm468, %v1869, 0
      %v1904 = vsel %vm468, %v1870, 0
      %v1907 = vsel %vm468, %v1871, 0
      %v1910 = vsel %vm468, %v1872, 0
      %v1913 = vsel %vm468, %v1873, 0
      %v1916 = vsel %vm468, %v1874, 0
      %v1919 = vsel %vm468, %v1875, 0
      %v1922 = vsel %vm468, %v1876, 0
      %v1925 = vsel %vm468, %v1877, 0
      %1927 = vmatprep.subr.mxu0 0.0
      %1928 = vmatpush1.msra.mxu0 0.0
      %1929 = vmatprep.subr.mxu0 0.0
      %1930 = vmatpush1.msra.mxu0 0.0
      %1931 = vmatprep.subr.mxu0 0.0
      %1932 = vmatpush1.msra.mxu0 0.0
      %1933 = vmatprep.subr.mxu0 0.0
      %1934 = vmatpush1.msra.mxu0 0.0
      %1935 = vmatprep.subr.mxu0 0.0
      %1936 = vmatpush1.msra.mxu0 0.0
      %1937 = vmatprep.subr.mxu0 0.0
      %1938 = vmatpush1.msra.mxu0 0.0
      %1939 = vmatprep.subr.mxu0 0.0
      %1940 = vmatpush1.msra.mxu0 0.0
      %1941 = vmatprep.subr.mxu0 0.0
      %1942 = vmatpush1.msra.mxu0 0.0
      %1943 = vmatprep.subr.mxu0 0.0
      %1944 = vmatpush1.msra.mxu0 0.0
      %1945 = vmatprep.subr.mxu0 0.0
      %1946 = vmatpush1.msra.mxu0 0.0
      %1947 = vmatprep.subr.mxu0 0.0
      %1948 = vmatpush1.msra.mxu0 0.0
      %1949 = vmatprep.subr.mxu0 0.0
      %1950 = vmatpush1.msra.mxu0 0.0
      %1951 = vmatprep.subr.mxu0 0.0
      %1952 = vmatpush1.msra.mxu0 0.0
      %1953 = vmatprep.subr.mxu0 0.0
      %1954 = vmatpush1.msra.mxu0 0.0
      %1955 = vmatprep.subr.mxu0 0.0
      %1956 = vmatpush1.msra.mxu0 0.0
      %1957 = vmatprep.subr.mxu0 0.0
      %1958 = vmatpush1.msra.mxu0 %v1878
      %1959 = vmatprep.subr.mxu0 0.0
      %1960 = vmatpush2.msra.mxu0 0.0
      %1961 = vmatprep.subr.mxu0 0.0
      %1962 = vmatpush2.msra.mxu0 0.0
      %1963 = vmatprep.subr.mxu0 0.0
      %1964 = vmatpush2.msra.mxu0 0.0
      %1965 = vmatprep.subr.mxu0 0.0
      %1966 = vmatpush2.msra.mxu0 0.0
      %1967 = vmatprep.subr.mxu0 0.0
      %1968 = vmatpush2.msra.mxu0 0.0
      %1969 = vmatprep.subr.mxu0 0.0
      %1970 = vmatpush2.msra.mxu0 0.0
      %1971 = vmatprep.subr.mxu0 0.0
      %1972 = vmatpush2.msra.mxu0 0.0
      %1973 = vmatprep.subr.mxu0 0.0
      %1974 = vmatpush2.msra.mxu0 0.0
      %1975 = vmatprep.subr.mxu0 0.0
      %1976 = vmatpush2.msra.mxu0 0.0
      %1977 = vmatprep.subr.mxu0 0.0
      %1978 = vmatpush2.msra.mxu0 0.0
      %1979 = vmatprep.subr.mxu0 0.0
      %1980 = vmatpush2.msra.mxu0 0.0
      %1981 = vmatprep.subr.mxu0 0.0
      %1982 = vmatpush2.msra.mxu0 0.0
      %1983 = vmatprep.subr.mxu0 0.0
      %1984 = vmatpush2.msra.mxu0 0.0
      %1985 = vmatprep.subr.mxu0 0.0
      %1986 = vmatpush2.msra.mxu0 0.0
      %1987 = vmatprep.subr.mxu0 0.0
      %1988 = vmatpush2.msra.mxu0 0.0
      %1989 = vmatprep.subr.mxu0 0.0
      %1990 = vmatpush2.msra.mxu0 0.0
      %1991 = vmatprep.mubr.f32.mxu0 0.0
      %1992 = vmatmul.mubr.f32.gmra.mxu0 %v1880
      %v1993 = vpop.f32.mrf.mxu0
      %v1994 = vadd.f32 0.0, %v1993
      %v1995 = vpop.f32.mrf.mxu0
      %1996 = vmatprep.mubr.f32.mxu0 0.0
      %1997 = vmatmul.mubr.f32.gmra.mxu0 %v1883
      %v1998 = vpop.f32.mrf.mxu0
      %v1999 = vadd.f32 0.0, %v1998
      %v2000 = vpop.f32.mrf.mxu0
      %2001 = vmatprep.mubr.f32.mxu0 0.0
      %2002 = vmatmul.mubr.f32.gmra.mxu0 %v1886
      %v2003 = vpop.f32.mrf.mxu0
      %v2004 = vadd.f32 0.0, %v2003
      %v2005 = vpop.f32.mrf.mxu0
      %2006 = vmatprep.mubr.f32.mxu0 0.0
      %2007 = vmatmul.mubr.f32.gmra.mxu0 %v1889
      %v2008 = vpop.f32.mrf.mxu0
      %v2009 = vadd.f32 0.0, %v2008
      %v2010 = vpop.f32.mrf.mxu0
      %2011 = vmatprep.mubr.f32.mxu0 0.0
      %2012 = vmatmul.mubr.f32.gmra.mxu0 %v1892
      %v2013 = vpop.f32.mrf.mxu0
      %v2014 = vadd.f32 0.0, %v2013
      %v2015 = vpop.f32.mrf.mxu0
      %2016 = vmatprep.mubr.f32.mxu0 0.0
      %2017 = vmatmul.mubr.f32.gmra.mxu0 %v1895
      %v2018 = vpop.f32.mrf.mxu0
      %v2019 = vadd.f32 0.0, %v2018
      %v2020 = vpop.f32.mrf.mxu0
      %2021 = vmatprep.mubr.f32.mxu0 0.0
      %2022 = vmatmul.mubr.f32.gmra.mxu0 %v1898
      %v2023 = vpop.f32.mrf.mxu0
      %v2024 = vadd.f32 0.0, %v2023
      %v2025 = vpop.f32.mrf.mxu0
      %2026 = vmatprep.mubr.f32.mxu0 0.0
      %2027 = vmatmul.mubr.f32.gmra.mxu0 %v1901
      %v2028 = vpop.f32.mrf.mxu0
      %v2029 = vadd.f32 0.0, %v2028
      %v2030 = vpop.f32.mrf.mxu0
      %2031 = vmatprep.mubr.f32.mxu0 0.0
      %2032 = vmatmul.mubr.f32.gmra.mxu0 %v1904
      %v2033 = vpop.f32.mrf.mxu0
      %v2034 = vadd.f32 0.0, %v2033
      %v2035 = vpop.f32.mrf.mxu0
      %2036 = vmatprep.mubr.f32.mxu0 0.0
      %2037 = vmatmul.mubr.f32.gmra.mxu0 %v1907
      %v2038 = vpop.f32.mrf.mxu0
      %v2039 = vadd.f32 0.0, %v2038
      %v2040 = vpop.f32.mrf.mxu0
      %2041 = vmatprep.mubr.f32.mxu0 0.0
      %2042 = vmatmul.mubr.f32.gmra.mxu0 %v1910
      %v2043 = vpop.f32.mrf.mxu0
      %v2044 = vadd.f32 0.0, %v2043
      %v2045 = vpop.f32.mrf.mxu0
      %2046 = vmatprep.mubr.f32.mxu0 0.0
      %2047 = vmatmul.mubr.f32.gmra.mxu0 %v1913
      %v2048 = vpop.f32.mrf.mxu0
      %v2049 = vadd.f32 0.0, %v2048
      %v2050 = vpop.f32.mrf.mxu0
      %2051 = vmatprep.mubr.f32.mxu0 0.0
      %2052 = vmatmul.mubr.f32.gmra.mxu0 %v1916
      %v2053 = vpop.f32.mrf.mxu0
      %v2054 = vadd.f32 0.0, %v2053
      %v2055 = vpop.f32.mrf.mxu0
      %2056 = vmatprep.mubr.f32.mxu0 0.0
      %2057 = vmatmul.mubr.f32.gmra.mxu0 %v1919
      %v2058 = vpop.f32.mrf.mxu0
      %v2059 = vadd.f32 0.0, %v2058
      %v2060 = vpop.f32.mrf.mxu0
      %2061 = vmatprep.mubr.f32.mxu0 0.0
      %2062 = vmatmul.mubr.f32.gmra.mxu0 %v1922
      %v2063 = vpop.f32.mrf.mxu0
      %v2064 = vadd.f32 0.0, %v2063
      %v2065 = vpop.f32.mrf.mxu0
      %2066 = vmatprep.mubr.f32.mxu0 0.0
      %2067 = vmatmul.mubr.f32.gmra.mxu0 %v1925
      %v2068 = vpop.f32.mrf.mxu0
      %v2069 = vadd.f32 0.0, %v2068
      %v2070 = vpop.f32.mrf.mxu0
      %2071 = vdwg.mxu0
      %v2072 = vadd.f32 %v1845, %v1994
      %v2073 = vadd.f32 %v1846, %v1999
      %v2074 = vadd.f32 %v1847, %v2004
      %v2075 = vadd.f32 %v1848, %v2009
      %v2076 = vadd.f32 %v1849, %v2014
      %v2077 = vadd.f32 %v1850, %v2019
      %v2078 = vadd.f32 %v1851, %v2024
      %v2079 = vadd.f32 %v1852, %v2029
      %v2080 = vadd.f32 %v1853, %v2034
      %v2081 = vadd.f32 %v1854, %v2039
      %v2082 = vadd.f32 %v1855, %v2044
      %v2083 = vadd.f32 %v1856, %v2049
      %v2084 = vadd.f32 %v1857, %v2054
      %v2085 = vadd.f32 %v1858, %v2059
      %v2086 = vadd.f32 %v1859, %v2064
      %v2087 = vadd.f32 %v1860, %v2069
      %v2088 = vld [vmem:[%s1861 + $0x1] sm:$0xff]
      %v2089 = vld [vmem:[%s1861 + $0x11] sm:$0xff]
      %v2090 = vld [vmem:[%s1861 + $0x21] sm:$0xff]
      %v2091 = vld [vmem:[%s1861 + $0x31] sm:$0xff]
      %v2092 = vld [vmem:[%s1861 + $0x41] sm:$0xff]
      %v2093 = vld [vmem:[%s1861 + $0x51] sm:$0xff]
      %v2094 = vld [vmem:[%s1861 + $0x61] sm:$0xff]
      %v2095 = vld [vmem:[%s1861 + $0x71] sm:$0xff]
      %v2096 = vld [vmem:[%s1861 + $0xa1] sm:$0xff]
      %v2097 = vld [vmem:[%s1861 + $0xb1] sm:$0xff]
      %v2098 = vld [vmem:[%s1861 + $0xc1] sm:$0xff]
      %v2099 = vld [vmem:[%s1861 + $0xd1] sm:$0xff]
      %v2100 = vld [vmem:[%s1861 + $0xe1] sm:$0xff]
      %v2101 = vld [vmem:[%s1861 + $0xf1] sm:$0xff]
      %v2102 = vld [vmem:[%s1861 + $0x101] sm:$0xff]
      %v2103 = vld [vmem:[%s1861 + $0x111] sm:$0xff]
      %v2104 = vld [vmem:[%s1 + $0x38] sm:$0xff]
      %v2106 = vsel %vm468, %v2088, 0
      %v2109 = vsel %vm468, %v2089, 0
      %v2112 = vsel %vm468, %v2090, 0
      %v2115 = vsel %vm468, %v2091, 0
      %v2118 = vsel %vm468, %v2092, 0
      %v2121 = vsel %vm468, %v2093, 0
      %v2124 = vsel %vm468, %v2094, 0
      %v2127 = vsel %vm468, %v2095, 0
      %v2130 = vsel %vm468, %v2096, 0
      %v2133 = vsel %vm468, %v2097, 0
      %v2136 = vsel %vm468, %v2098, 0
      %v2139 = vsel %vm468, %v2099, 0
      %v2142 = vsel %vm468, %v2100, 0
      %v2145 = vsel %vm468, %v2101, 0
      %v2148 = vsel %vm468, %v2102, 0
      %v2151 = vsel %vm468, %v2103, 0
      %2153 = vmatprep.subr.mxu0 0.0
      %2154 = vmatpush1.msra.mxu0 0.0
      %2155 = vmatprep.subr.mxu0 0.0
      %2156 = vmatpush1.msra.mxu0 0.0
      %2157 = vmatprep.subr.mxu0 0.0
      %2158 = vmatpush1.msra.mxu0 0.0
      %2159 = vmatprep.subr.mxu0 0.0
      %2160 = vmatpush1.msra.mxu0 0.0
      %2161 = vmatprep.subr.mxu0 0.0
      %2162 = vmatpush1.msra.mxu0 0.0
      %2163 = vmatprep.subr.mxu0 0.0
      %2164 = vmatpush1.msra.mxu0 0.0
      %2165 = vmatprep.subr.mxu0 0.0
      %2166 = vmatpush1.msra.mxu0 0.0
      %2167 = vmatprep.subr.mxu0 0.0
      %2168 = vmatpush1.msra.mxu0 0.0
      %2169 = vmatprep.subr.mxu0 0.0
      %2170 = vmatpush1.msra.mxu0 0.0
      %2171 = vmatprep.subr.mxu0 0.0
      %2172 = vmatpush1.msra.mxu0 0.0
      %2173 = vmatprep.subr.mxu0 0.0
      %2174 = vmatpush1.msra.mxu0 0.0
      %2175 = vmatprep.subr.mxu0 0.0
      %2176 = vmatpush1.msra.mxu0 0.0
      %2177 = vmatprep.subr.mxu0 0.0
      %2178 = vmatpush1.msra.mxu0 0.0
      %2179 = vmatprep.subr.mxu0 0.0
      %2180 = vmatpush1.msra.mxu0 0.0
      %2181 = vmatprep.subr.mxu0 0.0
      %2182 = vmatpush1.msra.mxu0 0.0
      %2183 = vmatprep.subr.mxu0 0.0
      %2184 = vmatpush1.msra.mxu0 %v2104
      %2185 = vmatprep.subr.mxu0 0.0
      %2186 = vmatpush2.msra.mxu0 0.0
      %2187 = vmatprep.subr.mxu0 0.0
      %2188 = vmatpush2.msra.mxu0 0.0
      %2189 = vmatprep.subr.mxu0 0.0
      %2190 = vmatpush2.msra.mxu0 0.0
      %2191 = vmatprep.subr.mxu0 0.0
      %2192 = vmatpush2.msra.mxu0 0.0
      %2193 = vmatprep.subr.mxu0 0.0
      %2194 = vmatpush2.msra.mxu0 0.0
      %2195 = vmatprep.subr.mxu0 0.0
      %2196 = vmatpush2.msra.mxu0 0.0
      %2197 = vmatprep.subr.mxu0 0.0
      %2198 = vmatpush2.msra.mxu0 0.0
      %2199 = vmatprep.subr.mxu0 0.0
      %2200 = vmatpush2.msra.mxu0 0.0
      %2201 = vmatprep.subr.mxu0 0.0
      %2202 = vmatpush2.msra.mxu0 0.0
      %2203 = vmatprep.subr.mxu0 0.0
      %2204 = vmatpush2.msra.mxu0 0.0
      %2205 = vmatprep.subr.mxu0 0.0
      %2206 = vmatpush2.msra.mxu0 0.0
      %2207 = vmatprep.subr.mxu0 0.0
      %2208 = vmatpush2.msra.mxu0 0.0
      %2209 = vmatprep.subr.mxu0 0.0
      %2210 = vmatpush2.msra.mxu0 0.0
      %2211 = vmatprep.subr.mxu0 0.0
      %2212 = vmatpush2.msra.mxu0 0.0
      %2213 = vmatprep.subr.mxu0 0.0
      %2214 = vmatpush2.msra.mxu0 0.0
      %2215 = vmatprep.subr.mxu0 0.0
      %2216 = vmatpush2.msra.mxu0 0.0
      %2217 = vmatprep.mubr.f32.mxu0 0.0
      %2218 = vmatmul.mubr.f32.gmra.mxu0 %v2106
      %v2219 = vpop.f32.mrf.mxu0
      %v2220 = vadd.f32 0.0, %v2219
      %v2221 = vpop.f32.mrf.mxu0
      %2222 = vmatprep.mubr.f32.mxu0 0.0
      %2223 = vmatmul.mubr.f32.gmra.mxu0 %v2109
      %v2224 = vpop.f32.mrf.mxu0
      %v2225 = vadd.f32 0.0, %v2224
      %v2226 = vpop.f32.mrf.mxu0
      %2227 = vmatprep.mubr.f32.mxu0 0.0
      %2228 = vmatmul.mubr.f32.gmra.mxu0 %v2112
      %v2229 = vpop.f32.mrf.mxu0
      %v2230 = vadd.f32 0.0, %v2229
      %v2231 = vpop.f32.mrf.mxu0
      %2232 = vmatprep.mubr.f32.mxu0 0.0
      %2233 = vmatmul.mubr.f32.gmra.mxu0 %v2115
      %v2234 = vpop.f32.mrf.mxu0
      %v2235 = vadd.f32 0.0, %v2234
      %v2236 = vpop.f32.mrf.mxu0
      %2237 = vmatprep.mubr.f32.mxu0 0.0
      %2238 = vmatmul.mubr.f32.gmra.mxu0 %v2118
      %v2239 = vpop.f32.mrf.mxu0
      %v2240 = vadd.f32 0.0, %v2239
      %v2241 = vpop.f32.mrf.mxu0
      %2242 = vmatprep.mubr.f32.mxu0 0.0
      %2243 = vmatmul.mubr.f32.gmra.mxu0 %v2121
      %v2244 = vpop.f32.mrf.mxu0
      %v2245 = vadd.f32 0.0, %v2244
      %v2246 = vpop.f32.mrf.mxu0
      %2247 = vmatprep.mubr.f32.mxu0 0.0
      %2248 = vmatmul.mubr.f32.gmra.mxu0 %v2124
      %v2249 = vpop.f32.mrf.mxu0
      %v2250 = vadd.f32 0.0, %v2249
      %v2251 = vpop.f32.mrf.mxu0
      %2252 = vmatprep.mubr.f32.mxu0 0.0
      %2253 = vmatmul.mubr.f32.gmra.mxu0 %v2127
      %v2254 = vpop.f32.mrf.mxu0
      %v2255 = vadd.f32 0.0, %v2254
      %v2256 = vpop.f32.mrf.mxu0
      %2257 = vmatprep.mubr.f32.mxu0 0.0
      %2258 = vmatmul.mubr.f32.gmra.mxu0 %v2130
      %v2259 = vpop.f32.mrf.mxu0
      %v2260 = vadd.f32 0.0, %v2259
      %v2261 = vpop.f32.mrf.mxu0
      %2262 = vmatprep.mubr.f32.mxu0 0.0
      %2263 = vmatmul.mubr.f32.gmra.mxu0 %v2133
      %v2264 = vpop.f32.mrf.mxu0
      %v2265 = vadd.f32 0.0, %v2264
      %v2266 = vpop.f32.mrf.mxu0
      %2267 = vmatprep.mubr.f32.mxu0 0.0
      %2268 = vmatmul.mubr.f32.gmra.mxu0 %v2136
      %v2269 = vpop.f32.mrf.mxu0
      %v2270 = vadd.f32 0.0, %v2269
      %v2271 = vpop.f32.mrf.mxu0
      %2272 = vmatprep.mubr.f32.mxu0 0.0
      %2273 = vmatmul.mubr.f32.gmra.mxu0 %v2139
      %v2274 = vpop.f32.mrf.mxu0
      %v2275 = vadd.f32 0.0, %v2274
      %v2276 = vpop.f32.mrf.mxu0
      %2277 = vmatprep.mubr.f32.mxu0 0.0
      %2278 = vmatmul.mubr.f32.gmra.mxu0 %v2142
      %v2279 = vpop.f32.mrf.mxu0
      %v2280 = vadd.f32 0.0, %v2279
      %v2281 = vpop.f32.mrf.mxu0
      %2282 = vmatprep.mubr.f32.mxu0 0.0
      %2283 = vmatmul.mubr.f32.gmra.mxu0 %v2145
      %v2284 = vpop.f32.mrf.mxu0
      %v2285 = vadd.f32 0.0, %v2284
      %v2286 = vpop.f32.mrf.mxu0
      %2287 = vmatprep.mubr.f32.mxu0 0.0
      %2288 = vmatmul.mubr.f32.gmra.mxu0 %v2148
      %v2289 = vpop.f32.mrf.mxu0
      %v2290 = vadd.f32 0.0, %v2289
      %v2291 = vpop.f32.mrf.mxu0
      %2292 = vmatprep.mubr.f32.mxu0 0.0
      %2293 = vmatmul.mubr.f32.gmra.mxu0 %v2151
      %v2294 = vpop.f32.mrf.mxu0
      %v2295 = vadd.f32 0.0, %v2294
      %v2296 = vpop.f32.mrf.mxu0
      %2297 = vdwg.mxu0
      %v2298 = vadd.f32 %v2072, %v2220
      %v2299 = vadd.f32 %v2073, %v2225
      %v2300 = vadd.f32 %v2074, %v2230
      %v2301 = vadd.f32 %v2075, %v2235
      %v2302 = vadd.f32 %v2076, %v2240
      %v2303 = vadd.f32 %v2077, %v2245
      %v2304 = vadd.f32 %v2078, %v2250
      %v2305 = vadd.f32 %v2079, %v2255
      %v2306 = vadd.f32 %v2080, %v2260
      %v2307 = vadd.f32 %v2081, %v2265
      %v2308 = vadd.f32 %v2082, %v2270
      %v2309 = vadd.f32 %v2083, %v2275
      %v2310 = vadd.f32 %v2084, %v2280
      %v2311 = vadd.f32 %v2085, %v2285
      %v2312 = vadd.f32 %v2086, %v2290
      %v2313 = vadd.f32 %v2087, %v2295
      %v2314 = vld [vmem:[%s1861 + $0x2] sm:$0xff]
      %v2315 = vld [vmem:[%s1861 + $0x12] sm:$0xff]
      %v2316 = vld [vmem:[%s1861 + $0x22] sm:$0xff]
      %v2317 = vld [vmem:[%s1861 + $0x32] sm:$0xff]
      %v2318 = vld [vmem:[%s1861 + $0x42] sm:$0xff]
      %v2319 = vld [vmem:[%s1861 + $0x52] sm:$0xff]
      %v2320 = vld [vmem:[%s1861 + $0x62] sm:$0xff]
      %v2321 = vld [vmem:[%s1861 + $0x72] sm:$0xff]
      %v2322 = vld [vmem:[%s1861 + $0xa2] sm:$0xff]
      %v2323 = vld [vmem:[%s1861 + $0xb2] sm:$0xff]
      %v2324 = vld [vmem:[%s1861 + $0xc2] sm:$0xff]
      %v2325 = vld [vmem:[%s1861 + $0xd2] sm:$0xff]
      %v2326 = vld [vmem:[%s1861 + $0xe2] sm:$0xff]
      %v2327 = vld [vmem:[%s1861 + $0xf2] sm:$0xff]
      %v2328 = vld [vmem:[%s1861 + $0x102] sm:$0xff]
      %v2329 = vld [vmem:[%s1861 + $0x112] sm:$0xff]
      %v2330 = vld [vmem:[%s1 + $0x40] sm:$0xff]
      %v2332 = vsel %vm468, %v2314, 0
      %v2335 = vsel %vm468, %v2315, 0
      %v2338 = vsel %vm468, %v2316, 0
      %v2341 = vsel %vm468, %v2317, 0
      %v2344 = vsel %vm468, %v2318, 0
      %v2347 = vsel %vm468, %v2319, 0
      %v2350 = vsel %vm468, %v2320, 0
      %v2353 = vsel %vm468, %v2321, 0
      %v2356 = vsel %vm468, %v2322, 0
      %v2359 = vsel %vm468, %v2323, 0
      %v2362 = vsel %vm468, %v2324, 0
      %v2365 = vsel %vm468, %v2325, 0
      %v2368 = vsel %vm468, %v2326, 0
      %v2371 = vsel %vm468, %v2327, 0
      %v2374 = vsel %vm468, %v2328, 0
      %v2377 = vsel %vm468, %v2329, 0
      %2379 = vmatprep.subr.mxu0 0.0
      %2380 = vmatpush1.msra.mxu0 0.0
      %2381 = vmatprep.subr.mxu0 0.0
      %2382 = vmatpush1.msra.mxu0 0.0
      %2383 = vmatprep.subr.mxu0 0.0
      %2384 = vmatpush1.msra.mxu0 0.0
      %2385 = vmatprep.subr.mxu0 0.0
      %2386 = vmatpush1.msra.mxu0 0.0
      %2387 = vmatprep.subr.mxu0 0.0
      %2388 = vmatpush1.msra.mxu0 0.0
      %2389 = vmatprep.subr.mxu0 0.0
      %2390 = vmatpush1.msra.mxu0 0.0
      %2391 = vmatprep.subr.mxu0 0.0
      %2392 = vmatpush1.msra.mxu0 0.0
      %2393 = vmatprep.subr.mxu0 0.0
      %2394 = vmatpush1.msra.mxu0 0.0
      %2395 = vmatprep.subr.mxu0 0.0
      %2396 = vmatpush1.msra.mxu0 0.0
      %2397 = vmatprep.subr.mxu0 0.0
      %2398 = vmatpush1.msra.mxu0 0.0
      %2399 = vmatprep.subr.mxu0 0.0
      %2400 = vmatpush1.msra.mxu0 0.0
      %2401 = vmatprep.subr.mxu0 0.0
      %2402 = vmatpush1.msra.mxu0 0.0
      %2403 = vmatprep.subr.mxu0 0.0
      %2404 = vmatpush1.msra.mxu0 0.0
      %2405 = vmatprep.subr.mxu0 0.0
      %2406 = vmatpush1.msra.mxu0 0.0
      %2407 = vmatprep.subr.mxu0 0.0
      %2408 = vmatpush1.msra.mxu0 0.0
      %2409 = vmatprep.subr.mxu0 0.0
      %2410 = vmatpush1.msra.mxu0 %v2330
      %2411 = vmatprep.subr.mxu0 0.0
      %2412 = vmatpush2.msra.mxu0 0.0
      %2413 = vmatprep.subr.mxu0 0.0
      %2414 = vmatpush2.msra.mxu0 0.0
      %2415 = vmatprep.subr.mxu0 0.0
      %2416 = vmatpush2.msra.mxu0 0.0
      %2417 = vmatprep.subr.mxu0 0.0
      %2418 = vmatpush2.msra.mxu0 0.0
      %2419 = vmatprep.subr.mxu0 0.0
      %2420 = vmatpush2.msra.mxu0 0.0
      %2421 = vmatprep.subr.mxu0 0.0
      %2422 = vmatpush2.msra.mxu0 0.0
      %2423 = vmatprep.subr.mxu0 0.0
      %2424 = vmatpush2.msra.mxu0 0.0
      %2425 = vmatprep.subr.mxu0 0.0
      %2426 = vmatpush2.msra.mxu0 0.0
      %2427 = vmatprep.subr.mxu0 0.0
      %2428 = vmatpush2.msra.mxu0 0.0
      %2429 = vmatprep.subr.mxu0 0.0
      %2430 = vmatpush2.msra.mxu0 0.0
      %2431 = vmatprep.subr.mxu0 0.0
      %2432 = vmatpush2.msra.mxu0 0.0
      %2433 = vmatprep.subr.mxu0 0.0
      %2434 = vmatpush2.msra.mxu0 0.0
      %2435 = vmatprep.subr.mxu0 0.0
      %2436 = vmatpush2.msra.mxu0 0.0
      %2437 = vmatprep.subr.mxu0 0.0
      %2438 = vmatpush2.msra.mxu0 0.0
      %2439 = vmatprep.subr.mxu0 0.0
      %2440 = vmatpush2.msra.mxu0 0.0
      %2441 = vmatprep.subr.mxu0 0.0
      %2442 = vmatpush2.msra.mxu0 0.0
      %2443 = vmatprep.mubr.f32.mxu0 0.0
      %2444 = vmatmul.mubr.f32.gmra.mxu0 %v2332
      %v2445 = vpop.f32.mrf.mxu0
      %v2446 = vadd.f32 0.0, %v2445
      %v2447 = vpop.f32.mrf.mxu0
      %2448 = vmatprep.mubr.f32.mxu0 0.0
      %2449 = vmatmul.mubr.f32.gmra.mxu0 %v2335
      %v2450 = vpop.f32.mrf.mxu0
      %v2451 = vadd.f32 0.0, %v2450
      %v2452 = vpop.f32.mrf.mxu0
      %2453 = vmatprep.mubr.f32.mxu0 0.0
      %2454 = vmatmul.mubr.f32.gmra.mxu0 %v2338
      %v2455 = vpop.f32.mrf.mxu0
      %v2456 = vadd.f32 0.0, %v2455
      %v2457 = vpop.f32.mrf.mxu0
      %2458 = vmatprep.mubr.f32.mxu0 0.0
      %2459 = vmatmul.mubr.f32.gmra.mxu0 %v2341
      %v2460 = vpop.f32.mrf.mxu0
      %v2461 = vadd.f32 0.0, %v2460
      %v2462 = vpop.f32.mrf.mxu0
      %2463 = vmatprep.mubr.f32.mxu0 0.0
      %2464 = vmatmul.mubr.f32.gmra.mxu0 %v2344
      %v2465 = vpop.f32.mrf.mxu0
      %v2466 = vadd.f32 0.0, %v2465
      %v2467 = vpop.f32.mrf.mxu0
      %2468 = vmatprep.mubr.f32.mxu0 0.0
      %2469 = vmatmul.mubr.f32.gmra.mxu0 %v2347
      %v2470 = vpop.f32.mrf.mxu0
      %v2471 = vadd.f32 0.0, %v2470
      %v2472 = vpop.f32.mrf.mxu0
      %2473 = vmatprep.mubr.f32.mxu0 0.0
      %2474 = vmatmul.mubr.f32.gmra.mxu0 %v2350
      %v2475 = vpop.f32.mrf.mxu0
      %v2476 = vadd.f32 0.0, %v2475
      %v2477 = vpop.f32.mrf.mxu0
      %2478 = vmatprep.mubr.f32.mxu0 0.0
      %2479 = vmatmul.mubr.f32.gmra.mxu0 %v2353
      %v2480 = vpop.f32.mrf.mxu0
      %v2481 = vadd.f32 0.0, %v2480
      %v2482 = vpop.f32.mrf.mxu0
      %2483 = vmatprep.mubr.f32.mxu0 0.0
      %2484 = vmatmul.mubr.f32.gmra.mxu0 %v2356
      %v2485 = vpop.f32.mrf.mxu0
      %v2486 = vadd.f32 0.0, %v2485
      %v2487 = vpop.f32.mrf.mxu0
      %2488 = vmatprep.mubr.f32.mxu0 0.0
      %2489 = vmatmul.mubr.f32.gmra.mxu0 %v2359
      %v2490 = vpop.f32.mrf.mxu0
      %v2491 = vadd.f32 0.0, %v2490
      %v2492 = vpop.f32.mrf.mxu0
      %2493 = vmatprep.mubr.f32.mxu0 0.0
      %2494 = vmatmul.mubr.f32.gmra.mxu0 %v2362
      %v2495 = vpop.f32.mrf.mxu0
      %v2496 = vadd.f32 0.0, %v2495
      %v2497 = vpop.f32.mrf.mxu0
      %2498 = vmatprep.mubr.f32.mxu0 0.0
      %2499 = vmatmul.mubr.f32.gmra.mxu0 %v2365
      %v2500 = vpop.f32.mrf.mxu0
      %v2501 = vadd.f32 0.0, %v2500
      %v2502 = vpop.f32.mrf.mxu0
      %2503 = vmatprep.mubr.f32.mxu0 0.0
      %2504 = vmatmul.mubr.f32.gmra.mxu0 %v2368
      %v2505 = vpop.f32.mrf.mxu0
      %v2506 = vadd.f32 0.0, %v2505
      %v2507 = vpop.f32.mrf.mxu0
      %2508 = vmatprep.mubr.f32.mxu0 0.0
      %2509 = vmatmul.mubr.f32.gmra.mxu0 %v2371
      %v2510 = vpop.f32.mrf.mxu0
      %v2511 = vadd.f32 0.0, %v2510
      %v2512 = vpop.f32.mrf.mxu0
      %2513 = vmatprep.mubr.f32.mxu0 0.0
      %2514 = vmatmul.mubr.f32.gmra.mxu0 %v2374
      %v2515 = vpop.f32.mrf.mxu0
      %v2516 = vadd.f32 0.0, %v2515
      %v2517 = vpop.f32.mrf.mxu0
      %2518 = vmatprep.mubr.f32.mxu0 0.0
      %2519 = vmatmul.mubr.f32.gmra.mxu0 %v2377
      %v2520 = vpop.f32.mrf.mxu0
      %v2521 = vadd.f32 0.0, %v2520
      %v2522 = vpop.f32.mrf.mxu0
      %2523 = vdwg.mxu0
      %v2524 = vadd.f32 %v2298, %v2446
      %v2525 = vadd.f32 %v2299, %v2451
      %v2526 = vadd.f32 %v2300, %v2456
      %v2527 = vadd.f32 %v2301, %v2461
      %v2528 = vadd.f32 %v2302, %v2466
      %v2529 = vadd.f32 %v2303, %v2471
      %v2530 = vadd.f32 %v2304, %v2476
      %v2531 = vadd.f32 %v2305, %v2481
      %v2532 = vadd.f32 %v2306, %v2486
      %v2533 = vadd.f32 %v2307, %v2491
      %v2534 = vadd.f32 %v2308, %v2496
      %v2535 = vadd.f32 %v2309, %v2501
      %v2536 = vadd.f32 %v2310, %v2506
      %v2537 = vadd.f32 %v2311, %v2511
      %v2538 = vadd.f32 %v2312, %v2516
      %v2539 = vadd.f32 %v2313, %v2521
      %vm2540 = vcmask 130048
      %2541 = vst.msk [vmem:[#allocation3] sm:$0xff] %vm2540, 0.0
      %vm2542 = vcmask 123904
      %2543 = vst.msk [vmem:[#allocation3 + $0x8] sm:$0x3] %vm2542, 0.0
      %2544 = vst.msk [vmem:[#allocation3 + $0xa0] sm:$0xff] %vm2540, 0.0
      %2545 = vst.msk [vmem:[#allocation3 + $0xa8] sm:$0x3] %vm2542, 0.0
      %s2546 = scalar_lea.vmem [#allocation3], 144
      %2547 = vst.msk [vmem:[%s2546] sm:$0xff] %vm2540, 0.0
      %2548 = vst.msk [vmem:[%s2546 + $0x8] sm:$0x3] %vm2542, 0.0
      %2549 = vst.msk [vmem:[%s2546 + $0xa0] sm:$0xff] %vm2540, 0.0
      %2550 = vst.msk [vmem:[%s2546 + $0xa8] sm:$0x3] %vm2542, 0.0
      %vm2551 = vcmask 122880
      %2552 = vst.msk [vmem:[#allocation3] sm:$0x1] %vm2551, 0.0
      %2553 = vst.msk [vmem:[#allocation3 + $0x10] sm:$0x1] %vm2551, 0.0
      %2554 = vst.msk [vmem:[#allocation3 + $0x20] sm:$0x1] %vm2551, 0.0
      %2555 = vst.msk [vmem:[#allocation3 + $0x30] sm:$0x1] %vm2551, 0.0
      %2556 = vst.msk [vmem:[#allocation3 + $0x40] sm:$0x1] %vm2551, 0.0
      %2557 = vst.msk [vmem:[#allocation3 + $0x50] sm:$0x1] %vm2551, 0.0
      %2558 = vst.msk [vmem:[#allocation3 + $0x60] sm:$0x1] %vm2551, 0.0
      %2559 = vst.msk [vmem:[#allocation3 + $0x70] sm:$0x1] %vm2551, 0.0
      %2560 = vst.msk [vmem:[#allocation3 + $0x80] sm:$0x1] %vm2551, 0.0
      %2561 = vst.msk [vmem:[#allocation3 + $0x90] sm:$0x1] %vm2551, 0.0
      %2562 = vst.msk [vmem:[#allocation3 + $0xa0] sm:$0x1] %vm2551, 0.0
      %2563 = vst.msk [vmem:[#allocation3 + $0xb0] sm:$0x1] %vm2551, 0.0
      %2564 = vst.msk [vmem:[#allocation3 + $0xc0] sm:$0x1] %vm2551, 0.0
      %2565 = vst.msk [vmem:[#allocation3 + $0xd0] sm:$0x1] %vm2551, 0.0
      %2566 = vst.msk [vmem:[#allocation3 + $0xe0] sm:$0x1] %vm2551, 0.0
      %2567 = vst.msk [vmem:[#allocation3 + $0xf0] sm:$0x1] %vm2551, 0.0
      %2568 = vst.msk [vmem:[#allocation3 + $0x100] sm:$0x1] %vm2551, 0.0
      %2569 = vst.msk [vmem:[#allocation3 + $0x110] sm:$0x1] %vm2551, 0.0
      %2570 = vst.msk [vmem:[#allocation3 + $0x120] sm:$0x1] %vm2551, 0.0
      %2571 = vst.msk [vmem:[#allocation3 + $0x130] sm:$0x1] %vm2551, 0.0
      %2572 = vst.msk [vmem:[#allocation3 + $0x9] sm:$0x1] %vm2551, 0.0
      %2573 = vst.msk [vmem:[#allocation3 + $0x19] sm:$0x1] %vm2551, 0.0
      %2574 = vst.msk [vmem:[#allocation3 + $0x29] sm:$0x1] %vm2551, 0.0
      %2575 = vst.msk [vmem:[#allocation3 + $0x39] sm:$0x1] %vm2551, 0.0
      %2576 = vst.msk [vmem:[#allocation3 + $0x49] sm:$0x1] %vm2551, 0.0
      %2577 = vst.msk [vmem:[#allocation3 + $0x59] sm:$0x1] %vm2551, 0.0
      %2578 = vst.msk [vmem:[#allocation3 + $0x69] sm:$0x1] %vm2551, 0.0
      %2579 = vst.msk [vmem:[#allocation3 + $0x79] sm:$0x1] %vm2551, 0.0
      %2580 = vst.msk [vmem:[#allocation3 + $0x89] sm:$0x1] %vm2551, 0.0
      %2581 = vst.msk [vmem:[#allocation3 + $0x99] sm:$0x1] %vm2551, 0.0
      %2582 = vst.msk [vmem:[#allocation3 + $0xa9] sm:$0x1] %vm2551, 0.0
      %2583 = vst.msk [vmem:[#allocation3 + $0xb9] sm:$0x1] %vm2551, 0.0
      %2584 = vst.msk [vmem:[#allocation3 + $0xc9] sm:$0x1] %vm2551, 0.0
      %2585 = vst.msk [vmem:[#allocation3 + $0xd9] sm:$0x1] %vm2551, 0.0
      %2586 = vst.msk [vmem:[#allocation3 + $0xe9] sm:$0x1] %vm2551, 0.0
      %2587 = vst.msk [vmem:[#allocation3 + $0xf9] sm:$0x1] %vm2551, 0.0
      %2588 = vst.msk [vmem:[#allocation3 + $0x109] sm:$0x1] %vm2551, 0.0
      %2589 = vst.msk [vmem:[#allocation3 + $0x119] sm:$0x1] %vm2551, 0.0
      %2590 = vst.msk [vmem:[#allocation3 + $0x129] sm:$0x1] %vm2551, 0.0
      %2591 = vst.msk [vmem:[#allocation3 + $0x139] sm:$0x1] %vm2551, 0.0
      %v2592 = vld [vmem:[%s2] sm:$0x1]
      %v2593 = vld [vmem:[%s3] sm:$0x1]
      %v2594 = vld [vmem:[%s4] sm:$0xff]
      %v2595 = vld [vmem:[%s4 + $0x8] sm:$0xff]
      %v2596 = vsel %vm2540, %v2524, 0.0
      %v2597 = vsel %vm2540, %v2525, 0.0
      %v2598 = vadd.f32 %v2596, %v2597
      %v2599 = vsel %vm2540, %v2526, 0.0
      %v2600 = vadd.f32 %v2598, %v2599
      %v2601 = vsel %vm2540, %v2527, 0.0
      %v2602 = vadd.f32 %v2600, %v2601
      %v2603 = vsel %vm2540, %v2528, 0.0
      %v2604 = vadd.f32 %v2602, %v2603
      %v2605 = vsel %vm2540, %v2529, 0.0
      %v2606 = vadd.f32 %v2604, %v2605
      %v2607 = vsel %vm2540, %v2530, 0.0
      %v2608 = vadd.f32 %v2606, %v2607
      %v2609 = vsel %vm2540, %v2531, 0.0
      %v2610 = vadd.f32 %v2608, %v2609
      %v2611 = vrot.slane %v2610, 4
      %v2612 = vadd.f32 %v2610, %v2611
      %v2613 = vrot.slane %v2612, 2
      %v2614 = vadd.f32 %v2612, %v2613
      %v2615 = vrot.slane %v2614, 1
      %v2616 = vadd.f32 %v2614, %v2615
      %v2617 = vmul.f32 %v2524, %v2524
      %v2618 = vmul.f32 %v2525, %v2525
      %v2619 = vmul.f32 %v2526, %v2526
      %v2620 = vmul.f32 %v2527, %v2527
      %v2621 = vmul.f32 %v2528, %v2528
      %v2622 = vmul.f32 %v2529, %v2529
      %v2623 = vmul.f32 %v2530, %v2530
      %v2624 = vmul.f32 %v2531, %v2531
      %v2625 = vsel %vm2540, %v2617, 0.0
      %v2626 = vsel %vm2540, %v2618, 0.0
      %v2627 = vadd.f32 %v2625, %v2626
      %v2628 = vsel %vm2540, %v2619, 0.0
      %v2629 = vadd.f32 %v2627, %v2628
      %v2630 = vsel %vm2540, %v2620, 0.0
      %v2631 = vadd.f32 %v2629, %v2630
      %v2632 = vsel %vm2540, %v2621, 0.0
      %v2633 = vadd.f32 %v2631, %v2632
      %v2634 = vsel %vm2540, %v2622, 0.0
      %v2635 = vadd.f32 %v2633, %v2634
      %v2636 = vsel %vm2540, %v2623, 0.0
      %v2637 = vadd.f32 %v2635, %v2636
      %v2638 = vsel %vm2540, %v2624, 0.0
      %v2639 = vadd.f32 %v2637, %v2638
      %v2640 = vrot.slane %v2639, 4
      %v2641 = vadd.f32 %v2639, %v2640
      %v2642 = vrot.slane %v2641, 2
      %v2643 = vadd.f32 %v2641, %v2642
      %v2644 = vrot.slane %v2643, 1
      %v2645 = vadd.f32 %v2643, %v2644
      %v2647 = vsel %vm2540, %v2616, 0
      %2649 = vmatprep.subr.mxu0 0.0
      %2650 = vmatpush1.msra.mxu0 0.0
      %2651 = vmatprep.subr.mxu0 0.0
      %2652 = vmatpush1.msra.mxu0 0.0
      %2653 = vmatprep.subr.mxu0 0.0
      %2654 = vmatpush1.msra.mxu0 0.0
      %2655 = vmatprep.subr.mxu0 0.0
      %2656 = vmatpush1.msra.mxu0 0.0
      %2657 = vmatprep.subr.mxu0 0.0
      %2658 = vmatpush1.msra.mxu0 0.0
      %2659 = vmatprep.subr.mxu0 0.0
      %2660 = vmatpush1.msra.mxu0 0.0
      %2661 = vmatprep.subr.mxu0 0.0
      %2662 = vmatpush1.msra.mxu0 0.0
      %2663 = vmatprep.subr.mxu0 0.0
      %2664 = vmatpush1.msra.mxu0 0.0
      %2665 = vmatprep.subr.mxu0 0.0
      %2666 = vmatpush1.msra.mxu0 0.0
      %2667 = vmatprep.subr.mxu0 0.0
      %2668 = vmatpush1.msra.mxu0 0.0
      %2669 = vmatprep.subr.mxu0 0.0
      %2670 = vmatpush1.msra.mxu0 0.0
      %2671 = vmatprep.subr.mxu0 0.0
      %2672 = vmatpush1.msra.mxu0 0.0
      %2673 = vmatprep.subr.mxu0 0.0
      %2674 = vmatpush1.msra.mxu0 0.0
      %2675 = vmatprep.subr.mxu0 0.0
      %2676 = vmatpush1.msra.mxu0 0.0
      %2677 = vmatprep.subr.mxu0 0.0
      %2678 = vmatpush1.msra.mxu0 %v2595
      %2679 = vmatprep.subr.mxu0 0.0
      %2680 = vmatpush1.msra.mxu0 %v2594
      %2681 = vmatprep.subr.mxu0 0.0
      %2682 = vmatpush2.msra.mxu0 0.0
      %2683 = vmatprep.subr.mxu0 0.0
      %2684 = vmatpush2.msra.mxu0 0.0
      %2685 = vmatprep.subr.mxu0 0.0
      %2686 = vmatpush2.msra.mxu0 0.0
      %2687 = vmatprep.subr.mxu0 0.0
      %2688 = vmatpush2.msra.mxu0 0.0
      %2689 = vmatprep.subr.mxu0 0.0
      %2690 = vmatpush2.msra.mxu0 0.0
      %2691 = vmatprep.subr.mxu0 0.0
      %2692 = vmatpush2.msra.mxu0 0.0
      %2693 = vmatprep.subr.mxu0 0.0
      %2694 = vmatpush2.msra.mxu0 0.0
      %2695 = vmatprep.subr.mxu0 0.0
      %2696 = vmatpush2.msra.mxu0 0.0
      %2697 = vmatprep.subr.mxu0 0.0
      %2698 = vmatpush2.msra.mxu0 0.0
      %2699 = vmatprep.subr.mxu0 0.0
      %2700 = vmatpush2.msra.mxu0 0.0
      %2701 = vmatprep.subr.mxu0 0.0
      %2702 = vmatpush2.msra.mxu0 0.0
      %2703 = vmatprep.subr.mxu0 0.0
      %2704 = vmatpush2.msra.mxu0 0.0
      %2705 = vmatprep.subr.mxu0 0.0
      %2706 = vmatpush2.msra.mxu0 0.0
      %2707 = vmatprep.subr.mxu0 0.0
      %2708 = vmatpush2.msra.mxu0 0.0
      %2709 = vmatprep.subr.mxu0 0.0
      %2710 = vmatpush2.msra.mxu0 0.0
      %2711 = vmatprep.subr.mxu0 0.0
      %2712 = vmatpush2.msra.mxu0 0.0
      %2713 = vmatprep.mubr.f32.mxu0 0.0
      %2714 = vmatmul.mubr.f32.gmra.mxu0 %v2647
      %v2715 = vpop.f32.mrf.mxu0
      %v2716 = vadd.f32 0.0, %v2715
      %v2717 = vpop.f32.mrf.mxu0
      %2718 = vdwg.mxu0
      %v2720 = vsel %vm2540, %v2645, 0
      %2722 = vmatprep.subr.mxu0 0.0
      %2723 = vmatpush1.msra.mxu0 0.0
      %2724 = vmatprep.subr.mxu0 0.0
      %2725 = vmatpush1.msra.mxu0 0.0
      %2726 = vmatprep.subr.mxu0 0.0
      %2727 = vmatpush1.msra.mxu0 0.0
      %2728 = vmatprep.subr.mxu0 0.0
      %2729 = vmatpush1.msra.mxu0 0.0
      %2730 = vmatprep.subr.mxu0 0.0
      %2731 = vmatpush1.msra.mxu0 0.0
      %2732 = vmatprep.subr.mxu0 0.0
      %2733 = vmatpush1.msra.mxu0 0.0
      %2734 = vmatprep.subr.mxu0 0.0
      %2735 = vmatpush1.msra.mxu0 0.0
      %2736 = vmatprep.subr.mxu0 0.0
      %2737 = vmatpush1.msra.mxu0 0.0
      %2738 = vmatprep.subr.mxu0 0.0
      %2739 = vmatpush1.msra.mxu0 0.0
      %2740 = vmatprep.subr.mxu0 0.0
      %2741 = vmatpush1.msra.mxu0 0.0
      %2742 = vmatprep.subr.mxu0 0.0
      %2743 = vmatpush1.msra.mxu0 0.0
      %2744 = vmatprep.subr.mxu0 0.0
      %2745 = vmatpush1.msra.mxu0 0.0
      %2746 = vmatprep.subr.mxu0 0.0
      %2747 = vmatpush1.msra.mxu0 0.0
      %2748 = vmatprep.subr.mxu0 0.0
      %2749 = vmatpush1.msra.mxu0 0.0
      %2750 = vmatprep.subr.mxu0 0.0
      %2751 = vmatpush1.msra.mxu0 %v2595
      %2752 = vmatprep.subr.mxu0 0.0
      %2753 = vmatpush1.msra.mxu0 %v2594
      %2754 = vmatprep.subr.mxu0 0.0
      %2755 = vmatpush2.msra.mxu0 0.0
      %2756 = vmatprep.subr.mxu0 0.0
      %2757 = vmatpush2.msra.mxu0 0.0
      %2758 = vmatprep.subr.mxu0 0.0
      %2759 = vmatpush2.msra.mxu0 0.0
      %2760 = vmatprep.subr.mxu0 0.0
      %2761 = vmatpush2.msra.mxu0 0.0
      %2762 = vmatprep.subr.mxu0 0.0
      %2763 = vmatpush2.msra.mxu0 0.0
      %2764 = vmatprep.subr.mxu0 0.0
      %2765 = vmatpush2.msra.mxu0 0.0
      %2766 = vmatprep.subr.mxu0 0.0
      %2767 = vmatpush2.msra.mxu0 0.0
      %2768 = vmatprep.subr.mxu0 0.0
      %2769 = vmatpush2.msra.mxu0 0.0
      %2770 = vmatprep.subr.mxu0 0.0
      %2771 = vmatpush2.msra.mxu0 0.0
      %2772 = vmatprep.subr.mxu0 0.0
      %2773 = vmatpush2.msra.mxu0 0.0
      %2774 = vmatprep.subr.mxu0 0.0
      %2775 = vmatpush2.msra.mxu0 0.0
      %2776 = vmatprep.subr.mxu0 0.0
      %2777 = vmatpush2.msra.mxu0 0.0
      %2778 = vmatprep.subr.mxu0 0.0
      %2779 = vmatpush2.msra.mxu0 0.0
      %2780 = vmatprep.subr.mxu0 0.0
      %2781 = vmatpush2.msra.mxu0 0.0
      %2782 = vmatprep.subr.mxu0 0.0
      %2783 = vmatpush2.msra.mxu0 0.0
      %2784 = vmatprep.subr.mxu0 0.0
      %2785 = vmatpush2.msra.mxu0 0.0
      %2786 = vmatprep.mubr.f32.mxu0 0.0
      %2787 = vmatmul.mubr.f32.gmra.mxu0 %v2720
      %v2788 = vpop.f32.mrf.mxu0
      %v2789 = vadd.f32 0.0, %v2788
      %v2790 = vpop.f32.mrf.mxu0
      %2791 = vdwg.mxu0
      %v2792 = vmul.f32 %v2716, 0.0078125
      %v2793 = vmul.f32 %v2789, 0.0078125
      %v2794 = vmul.f32 %v2792, %v2792
      %v2795 = vsub.f32 %v2793, %v2794
      %v2796 = vadd.f32 %v2795, 1e-05
      %v2797 = vrsqrt.pop %v2796
      %v2798 = vmul.f32 %v2797, %v2592
      %v2799 = vmul.f32 %v2792, %v2798
      %v2800 = vsub.f32 %v2593, %v2799
      %v2801 = vlaneseq
      %v2802 = vshrl.u32 %v2801, 7
      %v2803 = vsub.s32 0, %v2802
      %v2804 = vrot.slane %v2798, %v2803
      %v2805 = vmul.f32 %v2524, %v2804
      %v2806 = vmul.f32 %v2525, %v2804
      %v2807 = vmul.f32 %v2526, %v2804
      %v2808 = vmul.f32 %v2527, %v2804
      %v2809 = vmul.f32 %v2528, %v2804
      %v2810 = vmul.f32 %v2529, %v2804
      %v2811 = vmul.f32 %v2530, %v2804
      %v2812 = vmul.f32 %v2531, %v2804
      %v2814 = vlaneseq
      %v2815 = vshrl.u32 %v2814, 7
      %v2816 = vsub.s32 0, %v2815
      %v2817 = vrot.slane %v2800, %v2816
      %v2819 = vadd.f32 %v2805, %v2817
      %v2820 = vadd.f32 %v2806, %v2817
      %v2821 = vadd.f32 %v2807, %v2817
      %v2822 = vadd.f32 %v2808, %v2817
      %v2823 = vadd.f32 %v2809, %v2817
      %v2824 = vadd.f32 %v2810, %v2817
      %v2825 = vadd.f32 %v2811, %v2817
      %v2826 = vadd.f32 %v2812, %v2817
      %vm2827 = vcmp.ge.f32.partialorder %v2819, 0.0
      %vm2828 = vcmp.ge.f32.partialorder %v2820, 0.0
      %vm2829 = vcmp.ge.f32.partialorder %v2821, 0.0
      %vm2830 = vcmp.ge.f32.partialorder %v2822, 0.0
      %vm2831 = vcmp.ge.f32.partialorder %v2823, 0.0
      %vm2832 = vcmp.ge.f32.partialorder %v2824, 0.0
      %vm2833 = vcmp.ge.f32.partialorder %v2825, 0.0
      %vm2834 = vcmp.ge.f32.partialorder %v2826, 0.0
      %v2835 = vmul.f32 %v2819, 0.01
      %v2836 = vmul.f32 %v2820, 0.01
      %v2837 = vmul.f32 %v2821, 0.01
      %v2838 = vmul.f32 %v2822, 0.01
      %v2839 = vmul.f32 %v2823, 0.01
      %v2840 = vmul.f32 %v2824, 0.01
      %v2841 = vmul.f32 %v2825, 0.01
      %v2842 = vmul.f32 %v2826, 0.01
      %v2843 = vsel %vm2827, %v2819, %v2835
      %v2844 = vsel %vm2828, %v2820, %v2836
      %v2845 = vsel %vm2829, %v2821, %v2837
      %v2846 = vsel %vm2830, %v2822, %v2838
      %v2847 = vsel %vm2831, %v2823, %v2839
      %v2848 = vsel %vm2832, %v2824, %v2840
      %v2849 = vsel %vm2833, %v2825, %v2841
      %v2850 = vsel %vm2834, %v2826, %v2842
      %s2851 = scalar_lea.vmem [#allocation3], 16
      %2852 = vst.msk [vmem:[%s2851 + $0x1] sm:$0xff] %vm2540, %v2843
      %2853 = vst.msk [vmem:[%s2851 + $0x11] sm:$0xff] %vm2540, %v2844
      %2854 = vst.msk [vmem:[%s2851 + $0x21] sm:$0xff] %vm2540, %v2845
      %2855 = vst.msk [vmem:[%s2851 + $0x31] sm:$0xff] %vm2540, %v2846
      %2856 = vst.msk [vmem:[%s2851 + $0x41] sm:$0xff] %vm2540, %v2847
      %2857 = vst.msk [vmem:[%s2851 + $0x51] sm:$0xff] %vm2540, %v2848
      %2858 = vst.msk [vmem:[%s2851 + $0x61] sm:$0xff] %vm2540, %v2849
      %2859 = vst.msk [vmem:[%s2851 + $0x71] sm:$0xff] %vm2540, %v2850
      %v2860 = vsel %vm2540, %v2532, 0.0
      %v2861 = vsel %vm2540, %v2533, 0.0
      %v2862 = vadd.f32 %v2860, %v2861
      %v2863 = vsel %vm2540, %v2534, 0.0
      %v2864 = vadd.f32 %v2862, %v2863
      %v2865 = vsel %vm2540, %v2535, 0.0
      %v2866 = vadd.f32 %v2864, %v2865
      %v2867 = vsel %vm2540, %v2536, 0.0
      %v2868 = vadd.f32 %v2866, %v2867
      %v2869 = vsel %vm2540, %v2537, 0.0
      %v2870 = vadd.f32 %v2868, %v2869
      %v2871 = vsel %vm2540, %v2538, 0.0
      %v2872 = vadd.f32 %v2870, %v2871
      %v2873 = vsel %vm2540, %v2539, 0.0
      %v2874 = vadd.f32 %v2872, %v2873
      %v2875 = vrot.slane %v2874, 4
      %v2876 = vadd.f32 %v2874, %v2875
      %v2877 = vrot.slane %v2876, 2
      %v2878 = vadd.f32 %v2876, %v2877
      %v2879 = vrot.slane %v2878, 1
      %v2880 = vadd.f32 %v2878, %v2879
      %v2881 = vmul.f32 %v2532, %v2532
      %v2882 = vmul.f32 %v2533, %v2533
      %v2883 = vmul.f32 %v2534, %v2534
      %v2884 = vmul.f32 %v2535, %v2535
      %v2885 = vmul.f32 %v2536, %v2536
      %v2886 = vmul.f32 %v2537, %v2537
      %v2887 = vmul.f32 %v2538, %v2538
      %v2888 = vmul.f32 %v2539, %v2539
      %v2889 = vsel %vm2540, %v2881, 0.0
      %v2890 = vsel %vm2540, %v2882, 0.0
      %v2891 = vadd.f32 %v2889, %v2890
      %v2892 = vsel %vm2540, %v2883, 0.0
      %v2893 = vadd.f32 %v2891, %v2892
      %v2894 = vsel %vm2540, %v2884, 0.0
      %v2895 = vadd.f32 %v2893, %v2894
      %v2896 = vsel %vm2540, %v2885, 0.0
      %v2897 = vadd.f32 %v2895, %v2896
      %v2898 = vsel %vm2540, %v2886, 0.0
      %v2899 = vadd.f32 %v2897, %v2898
      %v2900 = vsel %vm2540, %v2887, 0.0
      %v2901 = vadd.f32 %v2899, %v2900
      %v2902 = vsel %vm2540, %v2888, 0.0
      %v2903 = vadd.f32 %v2901, %v2902
      %v2904 = vrot.slane %v2903, 4
      %v2905 = vadd.f32 %v2903, %v2904
      %v2906 = vrot.slane %v2905, 2
      %v2907 = vadd.f32 %v2905, %v2906
      %v2908 = vrot.slane %v2907, 1
      %v2909 = vadd.f32 %v2907, %v2908
      %v2911 = vsel %vm2540, %v2880, 0
      %2913 = vmatprep.subr.mxu0 0.0
      %2914 = vmatpush1.msra.mxu0 0.0
      %2915 = vmatprep.subr.mxu0 0.0
      %2916 = vmatpush1.msra.mxu0 0.0
      %2917 = vmatprep.subr.mxu0 0.0
      %2918 = vmatpush1.msra.mxu0 0.0
      %2919 = vmatprep.subr.mxu0 0.0
      %2920 = vmatpush1.msra.mxu0 0.0
      %2921 = vmatprep.subr.mxu0 0.0
      %2922 = vmatpush1.msra.mxu0 0.0
      %2923 = vmatprep.subr.mxu0 0.0
      %2924 = vmatpush1.msra.mxu0 0.0
      %2925 = vmatprep.subr.mxu0 0.0
      %2926 = vmatpush1.msra.mxu0 0.0
      %2927 = vmatprep.subr.mxu0 0.0
      %2928 = vmatpush1.msra.mxu0 0.0
      %2929 = vmatprep.subr.mxu0 0.0
      %2930 = vmatpush1.msra.mxu0 0.0
      %2931 = vmatprep.subr.mxu0 0.0
      %2932 = vmatpush1.msra.mxu0 0.0
      %2933 = vmatprep.subr.mxu0 0.0
      %2934 = vmatpush1.msra.mxu0 0.0
      %2935 = vmatprep.subr.mxu0 0.0
      %2936 = vmatpush1.msra.mxu0 0.0
      %2937 = vmatprep.subr.mxu0 0.0
      %2938 = vmatpush1.msra.mxu0 0.0
      %2939 = vmatprep.subr.mxu0 0.0
      %2940 = vmatpush1.msra.mxu0 0.0
      %2941 = vmatprep.subr.mxu0 0.0
      %2942 = vmatpush1.msra.mxu0 %v2595
      %2943 = vmatprep.subr.mxu0 0.0
      %2944 = vmatpush1.msra.mxu0 %v2594
      %2945 = vmatprep.subr.mxu0 0.0
      %2946 = vmatpush2.msra.mxu0 0.0
      %2947 = vmatprep.subr.mxu0 0.0
      %2948 = vmatpush2.msra.mxu0 0.0
      %2949 = vmatprep.subr.mxu0 0.0
      %2950 = vmatpush2.msra.mxu0 0.0
      %2951 = vmatprep.subr.mxu0 0.0
      %2952 = vmatpush2.msra.mxu0 0.0
      %2953 = vmatprep.subr.mxu0 0.0
      %2954 = vmatpush2.msra.mxu0 0.0
      %2955 = vmatprep.subr.mxu0 0.0
      %2956 = vmatpush2.msra.mxu0 0.0
      %2957 = vmatprep.subr.mxu0 0.0
      %2958 = vmatpush2.msra.mxu0 0.0
      %2959 = vmatprep.subr.mxu0 0.0
      %2960 = vmatpush2.msra.mxu0 0.0
      %2961 = vmatprep.subr.mxu0 0.0
      %2962 = vmatpush2.msra.mxu0 0.0
      %2963 = vmatprep.subr.mxu0 0.0
      %2964 = vmatpush2.msra.mxu0 0.0
      %2965 = vmatprep.subr.mxu0 0.0
      %2966 = vmatpush2.msra.mxu0 0.0
      %2967 = vmatprep.subr.mxu0 0.0
      %2968 = vmatpush2.msra.mxu0 0.0
      %2969 = vmatprep.subr.mxu0 0.0
      %2970 = vmatpush2.msra.mxu0 0.0
      %2971 = vmatprep.subr.mxu0 0.0
      %2972 = vmatpush2.msra.mxu0 0.0
      %2973 = vmatprep.subr.mxu0 0.0
      %2974 = vmatpush2.msra.mxu0 0.0
      %2975 = vmatprep.subr.mxu0 0.0
      %2976 = vmatpush2.msra.mxu0 0.0
      %2977 = vmatprep.mubr.f32.mxu0 0.0
      %2978 = vmatmul.mubr.f32.gmra.mxu0 %v2911
      %v2979 = vpop.f32.mrf.mxu0
      %v2980 = vadd.f32 0.0, %v2979
      %v2981 = vpop.f32.mrf.mxu0
      %2982 = vdwg.mxu0
      %v2984 = vsel %vm2540, %v2909, 0
      %2986 = vmatprep.subr.mxu0 0.0
      %2987 = vmatpush1.msra.mxu0 0.0
      %2988 = vmatprep.subr.mxu0 0.0
      %2989 = vmatpush1.msra.mxu0 0.0
      %2990 = vmatprep.subr.mxu0 0.0
      %2991 = vmatpush1.msra.mxu0 0.0
      %2992 = vmatprep.subr.mxu0 0.0
      %2993 = vmatpush1.msra.mxu0 0.0
      %2994 = vmatprep.subr.mxu0 0.0
      %2995 = vmatpush1.msra.mxu0 0.0
      %2996 = vmatprep.subr.mxu0 0.0
      %2997 = vmatpush1.msra.mxu0 0.0
      %2998 = vmatprep.subr.mxu0 0.0
      %2999 = vmatpush1.msra.mxu0 0.0
      %3000 = vmatprep.subr.mxu0 0.0
      %3001 = vmatpush1.msra.mxu0 0.0
      %3002 = vmatprep.subr.mxu0 0.0
      %3003 = vmatpush1.msra.mxu0 0.0
      %3004 = vmatprep.subr.mxu0 0.0
      %3005 = vmatpush1.msra.mxu0 0.0
      %3006 = vmatprep.subr.mxu0 0.0
      %3007 = vmatpush1.msra.mxu0 0.0
      %3008 = vmatprep.subr.mxu0 0.0
      %3009 = vmatpush1.msra.mxu0 0.0
      %3010 = vmatprep.subr.mxu0 0.0
      %3011 = vmatpush1.msra.mxu0 0.0
      %3012 = vmatprep.subr.mxu0 0.0
      %3013 = vmatpush1.msra.mxu0 0.0
      %3014 = vmatprep.subr.mxu0 0.0
      %3015 = vmatpush1.msra.mxu0 %v2595
      %3016 = vmatprep.subr.mxu0 0.0
      %3017 = vmatpush1.msra.mxu0 %v2594
      %3018 = vmatprep.subr.mxu0 0.0
      %3019 = vmatpush2.msra.mxu0 0.0
      %3020 = vmatprep.subr.mxu0 0.0
      %3021 = vmatpush2.msra.mxu0 0.0
      %3022 = vmatprep.subr.mxu0 0.0
      %3023 = vmatpush2.msra.mxu0 0.0
      %3024 = vmatprep.subr.mxu0 0.0
      %3025 = vmatpush2.msra.mxu0 0.0
      %3026 = vmatprep.subr.mxu0 0.0
      %3027 = vmatpush2.msra.mxu0 0.0
      %3028 = vmatprep.subr.mxu0 0.0
      %3029 = vmatpush2.msra.mxu0 0.0
      %3030 = vmatprep.subr.mxu0 0.0
      %3031 = vmatpush2.msra.mxu0 0.0
      %3032 = vmatprep.subr.mxu0 0.0
      %3033 = vmatpush2.msra.mxu0 0.0
      %3034 = vmatprep.subr.mxu0 0.0
      %3035 = vmatpush2.msra.mxu0 0.0
      %3036 = vmatprep.subr.mxu0 0.0
      %3037 = vmatpush2.msra.mxu0 0.0
      %3038 = vmatprep.subr.mxu0 0.0
      %3039 = vmatpush2.msra.mxu0 0.0
      %3040 = vmatprep.subr.mxu0 0.0
      %3041 = vmatpush2.msra.mxu0 0.0
      %3042 = vmatprep.subr.mxu0 0.0
      %3043 = vmatpush2.msra.mxu0 0.0
      %3044 = vmatprep.subr.mxu0 0.0
      %3045 = vmatpush2.msra.mxu0 0.0
      %3046 = vmatprep.subr.mxu0 0.0
      %3047 = vmatpush2.msra.mxu0 0.0
      %3048 = vmatprep.subr.mxu0 0.0
      %3049 = vmatpush2.msra.mxu0 0.0
      %3050 = vmatprep.mubr.f32.mxu0 0.0
      %3051 = vmatmul.mubr.f32.gmra.mxu0 %v2984
      %v3052 = vpop.f32.mrf.mxu0
      %v3053 = vadd.f32 0.0, %v3052
      %v3054 = vpop.f32.mrf.mxu0
      %3055 = vdwg.mxu0
      %v3056 = vmul.f32 %v2980, 0.0078125
      %v3057 = vmul.f32 %v3053, 0.0078125
      %v3058 = vmul.f32 %v3056, %v3056
      %v3059 = vsub.f32 %v3057, %v3058
      %v3060 = vadd.f32 %v3059, 1e-05
      %v3061 = vrsqrt.pop %v3060
      %v3062 = vmul.f32 %v3061, %v2592
      %v3063 = vmul.f32 %v3056, %v3062
      %v3064 = vsub.f32 %v2593, %v3063
      %v3065 = vlaneseq
      %v3066 = vshrl.u32 %v3065, 7
      %v3067 = vsub.s32 0, %v3066
      %v3068 = vrot.slane %v3062, %v3067
      %v3069 = vmul.f32 %v2532, %v3068
      %v3070 = vmul.f32 %v2533, %v3068
      %v3071 = vmul.f32 %v2534, %v3068
      %v3072 = vmul.f32 %v2535, %v3068
      %v3073 = vmul.f32 %v2536, %v3068
      %v3074 = vmul.f32 %v2537, %v3068
      %v3075 = vmul.f32 %v2538, %v3068
      %v3076 = vmul.f32 %v2539, %v3068
      %v3078 = vlaneseq
      %v3079 = vshrl.u32 %v3078, 7
      %v3080 = vsub.s32 0, %v3079
      %v3081 = vrot.slane %v3064, %v3080
      %v3083 = vadd.f32 %v3069, %v3081
      %v3084 = vadd.f32 %v3070, %v3081
      %v3085 = vadd.f32 %v3071, %v3081
      %v3086 = vadd.f32 %v3072, %v3081
      %v3087 = vadd.f32 %v3073, %v3081
      %v3088 = vadd.f32 %v3074, %v3081
      %v3089 = vadd.f32 %v3075, %v3081
      %v3090 = vadd.f32 %v3076, %v3081
      %vm3091 = vcmp.ge.f32.partialorder %v3083, 0.0
      %vm3092 = vcmp.ge.f32.partialorder %v3084, 0.0
      %vm3093 = vcmp.ge.f32.partialorder %v3085, 0.0
      %vm3094 = vcmp.ge.f32.partialorder %v3086, 0.0
      %vm3095 = vcmp.ge.f32.partialorder %v3087, 0.0
      %vm3096 = vcmp.ge.f32.partialorder %v3088, 0.0
      %vm3097 = vcmp.ge.f32.partialorder %v3089, 0.0
      %vm3098 = vcmp.ge.f32.partialorder %v3090, 0.0
      %v3099 = vmul.f32 %v3083, 0.01
      %v3100 = vmul.f32 %v3084, 0.01
      %v3101 = vmul.f32 %v3085, 0.01
      %v3102 = vmul.f32 %v3086, 0.01
      %v3103 = vmul.f32 %v3087, 0.01
      %v3104 = vmul.f32 %v3088, 0.01
      %v3105 = vmul.f32 %v3089, 0.01
      %v3106 = vmul.f32 %v3090, 0.01
      %v3107 = vsel %vm3091, %v3083, %v3099
      %v3108 = vsel %vm3092, %v3084, %v3100
      %v3109 = vsel %vm3093, %v3085, %v3101
      %v3110 = vsel %vm3094, %v3086, %v3102
      %v3111 = vsel %vm3095, %v3087, %v3103
      %v3112 = vsel %vm3096, %v3088, %v3104
      %v3113 = vsel %vm3097, %v3089, %v3105
      %v3114 = vsel %vm3098, %v3090, %v3106
      %s3115 = scalar_lea.vmem [#allocation3], 176
      %3116 = vst.msk [vmem:[%s3115 + $0x1] sm:$0xff] %vm2540, %v3107
      %3117 = vst.msk [vmem:[%s3115 + $0x11] sm:$0xff] %vm2540, %v3108
      %3118 = vst.msk [vmem:[%s3115 + $0x21] sm:$0xff] %vm2540, %v3109
      %3119 = vst.msk [vmem:[%s3115 + $0x31] sm:$0xff] %vm2540, %v3110
      %3120 = vst.msk [vmem:[%s3115 + $0x41] sm:$0xff] %vm2540, %v3111
      %3121 = vst.msk [vmem:[%s3115 + $0x51] sm:$0xff] %vm2540, %v3112
      %3122 = vst.msk [vmem:[%s3115 + $0x61] sm:$0xff] %vm2540, %v3113
      %3123 = vst.msk [vmem:[%s3115 + $0x71] sm:$0xff] %vm2540, %v3114
      %v3124 = vld [vmem:[#allocation3] sm:$0xff]
      %v3125 = vld [vmem:[#allocation3 + $0x10] sm:$0xff]
      %v3126 = vld [vmem:[#allocation3 + $0x20] sm:$0xff]
      %v3127 = vld [vmem:[#allocation3 + $0x30] sm:$0xff]
      %v3128 = vld [vmem:[#allocation3 + $0x40] sm:$0xff]
      %v3129 = vld [vmem:[#allocation3 + $0x50] sm:$0xff]
      %v3130 = vld [vmem:[#allocation3 + $0x60] sm:$0xff]
      %v3131 = vld [vmem:[#allocation3 + $0x70] sm:$0xff]
      %v3132 = vld [vmem:[#allocation3 + $0xa0] sm:$0xff]
      %v3133 = vld [vmem:[#allocation3 + $0xb0] sm:$0xff]
      %v3134 = vld [vmem:[#allocation3 + $0xc0] sm:$0xff]
      %v3135 = vld [vmem:[#allocation3 + $0xd0] sm:$0xff]
      %v3136 = vld [vmem:[#allocation3 + $0xe0] sm:$0xff]
      %v3137 = vld [vmem:[#allocation3 + $0xf0] sm:$0xff]
      %v3138 = vld [vmem:[#allocation3 + $0x100] sm:$0xff]
      %v3139 = vld [vmem:[#allocation3 + $0x110] sm:$0xff]
      %v3140 = vld [vmem:[%s5] sm:$0xff]
      %v3141 = vld [vmem:[%s5 + $0x8] sm:$0xff]
      %v3142 = vld [vmem:[#allocation3 + $0x1] sm:$0xff]
      %v3143 = vld [vmem:[#allocation3 + $0x11] sm:$0xff]
      %v3144 = vld [vmem:[#allocation3 + $0x21] sm:$0xff]
      %v3145 = vld [vmem:[#allocation3 + $0x31] sm:$0xff]
      %v3146 = vld [vmem:[#allocation3 + $0x41] sm:$0xff]
      %v3147 = vld [vmem:[#allocation3 + $0x51] sm:$0xff]
      %v3148 = vld [vmem:[#allocation3 + $0x61] sm:$0xff]
      %v3149 = vld [vmem:[#allocation3 + $0x71] sm:$0xff]
      %v3150 = vld [vmem:[#allocation3 + $0xa1] sm:$0xff]
      %v3151 = vld [vmem:[#allocation3 + $0xb1] sm:$0xff]
      %v3152 = vld [vmem:[#allocation3 + $0xc1] sm:$0xff]
      %v3153 = vld [vmem:[#allocation3 + $0xd1] sm:$0xff]
      %v3154 = vld [vmem:[#allocation3 + $0xe1] sm:$0xff]
      %v3155 = vld [vmem:[#allocation3 + $0xf1] sm:$0xff]
      %v3156 = vld [vmem:[#allocation3 + $0x101] sm:$0xff]
      %v3157 = vld [vmem:[#allocation3 + $0x111] sm:$0xff]
      %v3158 = vld [vmem:[%s5 + $0x10] sm:$0xff]
      %v3159 = vld [vmem:[%s5 + $0x18] sm:$0xff]
      %v3161 = vsel %vm2540, %v3142, 0
      %v3164 = vsel %vm2540, %v3143, 0
      %v3167 = vsel %vm2540, %v3144, 0
      %v3170 = vsel %vm2540, %v3145, 0
      %v3173 = vsel %vm2540, %v3146, 0
      %v3176 = vsel %vm2540, %v3147, 0
      %v3179 = vsel %vm2540, %v3148, 0
      %v3182 = vsel %vm2540, %v3149, 0
      %v3185 = vsel %vm2540, %v3150, 0
      %v3188 = vsel %vm2540, %v3151, 0
      %v3191 = vsel %vm2540, %v3152, 0
      %v3194 = vsel %vm2540, %v3153, 0
      %v3197 = vsel %vm2540, %v3154, 0
      %v3200 = vsel %vm2540, %v3155, 0
      %v3203 = vsel %vm2540, %v3156, 0
      %v3206 = vsel %vm2540, %v3157, 0
      %3208 = vmatprep.subr.mxu0 0.0
      %3209 = vmatpush1.msra.mxu0 0.0
      %3210 = vmatprep.subr.mxu0 0.0
      %3211 = vmatpush1.msra.mxu0 0.0
      %3212 = vmatprep.subr.mxu0 0.0
      %3213 = vmatpush1.msra.mxu0 0.0
      %3214 = vmatprep.subr.mxu0 0.0
      %3215 = vmatpush1.msra.mxu0 0.0
      %3216 = vmatprep.subr.mxu0 0.0
      %3217 = vmatpush1.msra.mxu0 0.0
      %3218 = vmatprep.subr.mxu0 0.0
      %3219 = vmatpush1.msra.mxu0 0.0
      %3220 = vmatprep.subr.mxu0 0.0
      %3221 = vmatpush1.msra.mxu0 0.0
      %3222 = vmatprep.subr.mxu0 0.0
      %3223 = vmatpush1.msra.mxu0 0.0
      %3224 = vmatprep.subr.mxu0 0.0
      %3225 = vmatpush1.msra.mxu0 0.0
      %3226 = vmatprep.subr.mxu0 0.0
      %3227 = vmatpush1.msra.mxu0 0.0
      %3228 = vmatprep.subr.mxu0 0.0
      %3229 = vmatpush1.msra.mxu0 0.0
      %3230 = vmatprep.subr.mxu0 0.0
      %3231 = vmatpush1.msra.mxu0 0.0
      %3232 = vmatprep.subr.mxu0 0.0
      %3233 = vmatpush1.msra.mxu0 0.0
      %3234 = vmatprep.subr.mxu0 0.0
      %3235 = vmatpush1.msra.mxu0 0.0
      %3236 = vmatprep.subr.mxu0 0.0
      %3237 = vmatpush1.msra.mxu0 %v3159
      %3238 = vmatprep.subr.mxu0 0.0
      %3239 = vmatpush1.msra.mxu0 %v3158
      %3240 = vmatprep.subr.mxu0 0.0
      %3241 = vmatpush2.msra.mxu0 0.0
      %3242 = vmatprep.subr.mxu0 0.0
      %3243 = vmatpush2.msra.mxu0 0.0
      %3244 = vmatprep.subr.mxu0 0.0
      %3245 = vmatpush2.msra.mxu0 0.0
      %3246 = vmatprep.subr.mxu0 0.0
      %3247 = vmatpush2.msra.mxu0 0.0
      %3248 = vmatprep.subr.mxu0 0.0
      %3249 = vmatpush2.msra.mxu0 0.0
      %3250 = vmatprep.subr.mxu0 0.0
      %3251 = vmatpush2.msra.mxu0 0.0
      %3252 = vmatprep.subr.mxu0 0.0
      %3253 = vmatpush2.msra.mxu0 0.0
      %3254 = vmatprep.subr.mxu0 0.0
      %3255 = vmatpush2.msra.mxu0 0.0
      %3256 = vmatprep.subr.mxu0 0.0
      %3257 = vmatpush2.msra.mxu0 0.0
      %3258 = vmatprep.subr.mxu0 0.0
      %3259 = vmatpush2.msra.mxu0 0.0
      %3260 = vmatprep.subr.mxu0 0.0
      %3261 = vmatpush2.msra.mxu0 0.0
      %3262 = vmatprep.subr.mxu0 0.0
      %3263 = vmatpush2.msra.mxu0 0.0
      %3264 = vmatprep.subr.mxu0 0.0
      %3265 = vmatpush2.msra.mxu0 0.0
      %3266 = vmatprep.subr.mxu0 0.0
      %3267 = vmatpush2.msra.mxu0 0.0
      %3268 = vmatprep.subr.mxu0 0.0
      %3269 = vmatpush2.msra.mxu0 0.0
      %3270 = vmatprep.subr.mxu0 0.0
      %3271 = vmatpush2.msra.mxu0 0.0
      %3272 = vmatprep.mubr.f32.mxu0 0.0
      %3273 = vmatmul.mubr.f32.gmra.mxu0 %v3161
      %v3274 = vpop.f32.mrf.mxu0
      %v3275 = vadd.f32 0.0, %v3274
      %v3276 = vpop.f32.mrf.mxu0
      %3277 = vmatprep.mubr.f32.mxu0 0.0
      %3278 = vmatmul.mubr.f32.gmra.mxu0 %v3164
      %v3279 = vpop.f32.mrf.mxu0
      %v3280 = vadd.f32 0.0, %v3279
      %v3281 = vpop.f32.mrf.mxu0
      %3282 = vmatprep.mubr.f32.mxu0 0.0
      %3283 = vmatmul.mubr.f32.gmra.mxu0 %v3167
      %v3284 = vpop.f32.mrf.mxu0
      %v3285 = vadd.f32 0.0, %v3284
      %v3286 = vpop.f32.mrf.mxu0
      %3287 = vmatprep.mubr.f32.mxu0 0.0
      %3288 = vmatmul.mubr.f32.gmra.mxu0 %v3170
      %v3289 = vpop.f32.mrf.mxu0
      %v3290 = vadd.f32 0.0, %v3289
      %v3291 = vpop.f32.mrf.mxu0
      %3292 = vmatprep.mubr.f32.mxu0 0.0
      %3293 = vmatmul.mubr.f32.gmra.mxu0 %v3173
      %v3294 = vpop.f32.mrf.mxu0
      %v3295 = vadd.f32 0.0, %v3294
      %v3296 = vpop.f32.mrf.mxu0
      %3297 = vmatprep.mubr.f32.mxu0 0.0
      %3298 = vmatmul.mubr.f32.gmra.mxu0 %v3176
      %v3299 = vpop.f32.mrf.mxu0
      %v3300 = vadd.f32 0.0, %v3299
      %v3301 = vpop.f32.mrf.mxu0
      %3302 = vmatprep.mubr.f32.mxu0 0.0
      %3303 = vmatmul.mubr.f32.gmra.mxu0 %v3179
      %v3304 = vpop.f32.mrf.mxu0
      %v3305 = vadd.f32 0.0, %v3304
      %v3306 = vpop.f32.mrf.mxu0
      %3307 = vmatprep.mubr.f32.mxu0 0.0
      %3308 = vmatmul.mubr.f32.gmra.mxu0 %v3182
      %v3309 = vpop.f32.mrf.mxu0
      %v3310 = vadd.f32 0.0, %v3309
      %v3311 = vpop.f32.mrf.mxu0
      %3312 = vmatprep.mubr.f32.mxu0 0.0
      %3313 = vmatmul.mubr.f32.gmra.mxu0 %v3185
      %v3314 = vpop.f32.mrf.mxu0
      %v3315 = vadd.f32 0.0, %v3314
      %v3316 = vpop.f32.mrf.mxu0
      %3317 = vmatprep.mubr.f32.mxu0 0.0
      %3318 = vmatmul.mubr.f32.gmra.mxu0 %v3188
      %v3319 = vpop.f32.mrf.mxu0
      %v3320 = vadd.f32 0.0, %v3319
      %v3321 = vpop.f32.mrf.mxu0
      %3322 = vmatprep.mubr.f32.mxu0 0.0
      %3323 = vmatmul.mubr.f32.gmra.mxu0 %v3191
      %v3324 = vpop.f32.mrf.mxu0
      %v3325 = vadd.f32 0.0, %v3324
      %v3326 = vpop.f32.mrf.mxu0
      %3327 = vmatprep.mubr.f32.mxu0 0.0
      %3328 = vmatmul.mubr.f32.gmra.mxu0 %v3194
      %v3329 = vpop.f32.mrf.mxu0
      %v3330 = vadd.f32 0.0, %v3329
      %v3331 = vpop.f32.mrf.mxu0
      %3332 = vmatprep.mubr.f32.mxu0 0.0
      %3333 = vmatmul.mubr.f32.gmra.mxu0 %v3197
      %v3334 = vpop.f32.mrf.mxu0
      %v3335 = vadd.f32 0.0, %v3334
      %v3336 = vpop.f32.mrf.mxu0
      %3337 = vmatprep.mubr.f32.mxu0 0.0
      %3338 = vmatmul.mubr.f32.gmra.mxu0 %v3200
      %v3339 = vpop.f32.mrf.mxu0
      %v3340 = vadd.f32 0.0, %v3339
      %v3341 = vpop.f32.mrf.mxu0
      %3342 = vmatprep.mubr.f32.mxu0 0.0
      %3343 = vmatmul.mubr.f32.gmra.mxu0 %v3203
      %v3344 = vpop.f32.mrf.mxu0
      %v3345 = vadd.f32 0.0, %v3344
      %v3346 = vpop.f32.mrf.mxu0
      %3347 = vmatprep.mubr.f32.mxu0 0.0
      %3348 = vmatmul.mubr.f32.gmra.mxu0 %v3206
      %v3349 = vpop.f32.mrf.mxu0
      %v3350 = vadd.f32 0.0, %v3349
      %v3351 = vpop.f32.mrf.mxu0
      %3352 = vdwg.mxu0
      %v3354 = vsel %vm2540, %v3124, 0
      %v3357 = vsel %vm2540, %v3125, 0
      %v3360 = vsel %vm2540, %v3126, 0
      %v3363 = vsel %vm2540, %v3127, 0
      %v3366 = vsel %vm2540, %v3128, 0
      %v3369 = vsel %vm2540, %v3129, 0
      %v3372 = vsel %vm2540, %v3130, 0
      %v3375 = vsel %vm2540, %v3131, 0
      %v3378 = vsel %vm2540, %v3132, 0
      %v3381 = vsel %vm2540, %v3133, 0
      %v3384 = vsel %vm2540, %v3134, 0
      %v3387 = vsel %vm2540, %v3135, 0
      %v3390 = vsel %vm2540, %v3136, 0
      %v3393 = vsel %vm2540, %v3137, 0
      %v3396 = vsel %vm2540, %v3138, 0
      %v3399 = vsel %vm2540, %v3139, 0
      %3401 = vmatprep.subr.mxu0 0.0
      %3402 = vmatpush1.msra.mxu0 0.0
      %3403 = vmatprep.subr.mxu0 0.0
      %3404 = vmatpush1.msra.mxu0 0.0
      %3405 = vmatprep.subr.mxu0 0.0
      %3406 = vmatpush1.msra.mxu0 0.0
      %3407 = vmatprep.subr.mxu0 0.0
      %3408 = vmatpush1.msra.mxu0 0.0
      %3409 = vmatprep.subr.mxu0 0.0
      %3410 = vmatpush1.msra.mxu0 0.0
      %3411 = vmatprep.subr.mxu0 0.0
      %3412 = vmatpush1.msra.mxu0 0.0
      %3413 = vmatprep.subr.mxu0 0.0
      %3414 = vmatpush1.msra.mxu0 0.0
      %3415 = vmatprep.subr.mxu0 0.0
      %3416 = vmatpush1.msra.mxu0 0.0
      %3417 = vmatprep.subr.mxu0 0.0
      %3418 = vmatpush1.msra.mxu0 0.0
      %3419 = vmatprep.subr.mxu0 0.0
      %3420 = vmatpush1.msra.mxu0 0.0
      %3421 = vmatprep.subr.mxu0 0.0
      %3422 = vmatpush1.msra.mxu0 0.0
      %3423 = vmatprep.subr.mxu0 0.0
      %3424 = vmatpush1.msra.mxu0 0.0
      %3425 = vmatprep.subr.mxu0 0.0
      %3426 = vmatpush1.msra.mxu0 0.0
      %3427 = vmatprep.subr.mxu0 0.0
      %3428 = vmatpush1.msra.mxu0 0.0
      %3429 = vmatprep.subr.mxu0 0.0
      %3430 = vmatpush1.msra.mxu0 %v3141
      %3431 = vmatprep.subr.mxu0 0.0
      %3432 = vmatpush1.msra.mxu0 %v3140
      %3433 = vmatprep.subr.mxu0 0.0
      %3434 = vmatpush2.msra.mxu0 0.0
      %3435 = vmatprep.subr.mxu0 0.0
      %3436 = vmatpush2.msra.mxu0 0.0
      %3437 = vmatprep.subr.mxu0 0.0
      %3438 = vmatpush2.msra.mxu0 0.0
      %3439 = vmatprep.subr.mxu0 0.0
      %3440 = vmatpush2.msra.mxu0 0.0
      %3441 = vmatprep.subr.mxu0 0.0
      %3442 = vmatpush2.msra.mxu0 0.0
      %3443 = vmatprep.subr.mxu0 0.0
      %3444 = vmatpush2.msra.mxu0 0.0
      %3445 = vmatprep.subr.mxu0 0.0
      %3446 = vmatpush2.msra.mxu0 0.0
      %3447 = vmatprep.subr.mxu0 0.0
      %3448 = vmatpush2.msra.mxu0 0.0
      %3449 = vmatprep.subr.mxu0 0.0
      %3450 = vmatpush2.msra.mxu0 0.0
      %3451 = vmatprep.subr.mxu0 0.0
      %3452 = vmatpush2.msra.mxu0 0.0
      %3453 = vmatprep.subr.mxu0 0.0
      %3454 = vmatpush2.msra.mxu0 0.0
      %3455 = vmatprep.subr.mxu0 0.0
      %3456 = vmatpush2.msra.mxu0 0.0
      %3457 = vmatprep.subr.mxu0 0.0
      %3458 = vmatpush2.msra.mxu0 0.0
      %3459 = vmatprep.subr.mxu0 0.0
      %3460 = vmatpush2.msra.mxu0 0.0
      %3461 = vmatprep.subr.mxu0 0.0
      %3462 = vmatpush2.msra.mxu0 0.0
      %3463 = vmatprep.subr.mxu0 0.0
      %3464 = vmatpush2.msra.mxu0 0.0
      %3465 = vmatprep.mubr.f32.mxu0 0.0
      %3466 = vmatmul.mubr.f32.gmra.mxu0 %v3354
      %v3467 = vpop.f32.mrf.mxu0
      %v3468 = vadd.f32 %v3275, %v3467
      %v3469 = vpop.f32.mrf.mxu0
      %3470 = vmatprep.mubr.f32.mxu0 0.0
      %3471 = vmatmul.mubr.f32.gmra.mxu0 %v3357
      %v3472 = vpop.f32.mrf.mxu0
      %v3473 = vadd.f32 %v3280, %v3472
      %v3474 = vpop.f32.mrf.mxu0
      %3475 = vmatprep.mubr.f32.mxu0 0.0
      %3476 = vmatmul.mubr.f32.gmra.mxu0 %v3360
      %v3477 = vpop.f32.mrf.mxu0
      %v3478 = vadd.f32 %v3285, %v3477
      %v3479 = vpop.f32.mrf.mxu0
      %3480 = vmatprep.mubr.f32.mxu0 0.0
      %3481 = vmatmul.mubr.f32.gmra.mxu0 %v3363
      %v3482 = vpop.f32.mrf.mxu0
      %v3483 = vadd.f32 %v3290, %v3482
      %v3484 = vpop.f32.mrf.mxu0
      %3485 = vmatprep.mubr.f32.mxu0 0.0
      %3486 = vmatmul.mubr.f32.gmra.mxu0 %v3366
      %v3487 = vpop.f32.mrf.mxu0
      %v3488 = vadd.f32 %v3295, %v3487
      %v3489 = vpop.f32.mrf.mxu0
      %3490 = vmatprep.mubr.f32.mxu0 0.0
      %3491 = vmatmul.mubr.f32.gmra.mxu0 %v3369
      %v3492 = vpop.f32.mrf.mxu0
      %v3493 = vadd.f32 %v3300, %v3492
      %v3494 = vpop.f32.mrf.mxu0
      %3495 = vmatprep.mubr.f32.mxu0 0.0
      %3496 = vmatmul.mubr.f32.gmra.mxu0 %v3372
      %v3497 = vpop.f32.mrf.mxu0
      %v3498 = vadd.f32 %v3305, %v3497
      %v3499 = vpop.f32.mrf.mxu0
      %3500 = vmatprep.mubr.f32.mxu0 0.0
      %3501 = vmatmul.mubr.f32.gmra.mxu0 %v3375
      %v3502 = vpop.f32.mrf.mxu0
      %v3503 = vadd.f32 %v3310, %v3502
      %v3504 = vpop.f32.mrf.mxu0
      %3505 = vmatprep.mubr.f32.mxu0 0.0
      %3506 = vmatmul.mubr.f32.gmra.mxu0 %v3378
      %v3507 = vpop.f32.mrf.mxu0
      %v3508 = vadd.f32 %v3315, %v3507
      %v3509 = vpop.f32.mrf.mxu0
      %3510 = vmatprep.mubr.f32.mxu0 0.0
      %3511 = vmatmul.mubr.f32.gmra.mxu0 %v3381
      %v3512 = vpop.f32.mrf.mxu0
      %v3513 = vadd.f32 %v3320, %v3512
      %v3514 = vpop.f32.mrf.mxu0
      %3515 = vmatprep.mubr.f32.mxu0 0.0
      %3516 = vmatmul.mubr.f32.gmra.mxu0 %v3384
      %v3517 = vpop.f32.mrf.mxu0
      %v3518 = vadd.f32 %v3325, %v3517
      %v3519 = vpop.f32.mrf.mxu0
      %3520 = vmatprep.mubr.f32.mxu0 0.0
      %3521 = vmatmul.mubr.f32.gmra.mxu0 %v3387
      %v3522 = vpop.f32.mrf.mxu0
      %v3523 = vadd.f32 %v3330, %v3522
      %v3524 = vpop.f32.mrf.mxu0
      %3525 = vmatprep.mubr.f32.mxu0 0.0
      %3526 = vmatmul.mubr.f32.gmra.mxu0 %v3390
      %v3527 = vpop.f32.mrf.mxu0
      %v3528 = vadd.f32 %v3335, %v3527
      %v3529 = vpop.f32.mrf.mxu0
      %3530 = vmatprep.mubr.f32.mxu0 0.0
      %3531 = vmatmul.mubr.f32.gmra.mxu0 %v3393
      %v3532 = vpop.f32.mrf.mxu0
      %v3533 = vadd.f32 %v3340, %v3532
      %v3534 = vpop.f32.mrf.mxu0
      %3535 = vmatprep.mubr.f32.mxu0 0.0
      %3536 = vmatmul.mubr.f32.gmra.mxu0 %v3396
      %v3537 = vpop.f32.mrf.mxu0
      %v3538 = vadd.f32 %v3345, %v3537
      %v3539 = vpop.f32.mrf.mxu0
      %3540 = vmatprep.mubr.f32.mxu0 0.0
      %3541 = vmatmul.mubr.f32.gmra.mxu0 %v3399
      %v3542 = vpop.f32.mrf.mxu0
      %v3543 = vadd.f32 %v3350, %v3542
      %v3544 = vpop.f32.mrf.mxu0
      %3545 = vdwg.mxu0
      %v3546 = vld [vmem:[#allocation3 + $0x2] sm:$0xff]
      %v3547 = vld [vmem:[#allocation3 + $0x12] sm:$0xff]
      %v3548 = vld [vmem:[#allocation3 + $0x22] sm:$0xff]
      %v3549 = vld [vmem:[#allocation3 + $0x32] sm:$0xff]
      %v3550 = vld [vmem:[#allocation3 + $0x42] sm:$0xff]
      %v3551 = vld [vmem:[#allocation3 + $0x52] sm:$0xff]
      %v3552 = vld [vmem:[#allocation3 + $0x62] sm:$0xff]
      %v3553 = vld [vmem:[#allocation3 + $0x72] sm:$0xff]
      %v3554 = vld [vmem:[#allocation3 + $0xa2] sm:$0xff]
      %v3555 = vld [vmem:[#allocation3 + $0xb2] sm:$0xff]
      %v3556 = vld [vmem:[#allocation3 + $0xc2] sm:$0xff]
      %v3557 = vld [vmem:[#allocation3 + $0xd2] sm:$0xff]
      %v3558 = vld [vmem:[#allocation3 + $0xe2] sm:$0xff]
      %v3559 = vld [vmem:[#allocation3 + $0xf2] sm:$0xff]
      %v3560 = vld [vmem:[#allocation3 + $0x102] sm:$0xff]
      %v3561 = vld [vmem:[#allocation3 + $0x112] sm:$0xff]
      %v3562 = vld [vmem:[%s5 + $0x20] sm:$0xff]
      %v3563 = vld [vmem:[%s5 + $0x28] sm:$0xff]
      %v3565 = vsel %vm2540, %v3546, 0
      %v3568 = vsel %vm2540, %v3547, 0
      %v3571 = vsel %vm2540, %v3548, 0
      %v3574 = vsel %vm2540, %v3549, 0
      %v3577 = vsel %vm2540, %v3550, 0
      %v3580 = vsel %vm2540, %v3551, 0
      %v3583 = vsel %vm2540, %v3552, 0
      %v3586 = vsel %vm2540, %v3553, 0
      %v3589 = vsel %vm2540, %v3554, 0
      %v3592 = vsel %vm2540, %v3555, 0
      %v3595 = vsel %vm2540, %v3556, 0
      %v3598 = vsel %vm2540, %v3557, 0
      %v3601 = vsel %vm2540, %v3558, 0
      %v3604 = vsel %vm2540, %v3559, 0
      %v3607 = vsel %vm2540, %v3560, 0
      %v3610 = vsel %vm2540, %v3561, 0
      %3612 = vmatprep.subr.mxu0 0.0
      %3613 = vmatpush1.msra.mxu0 0.0
      %3614 = vmatprep.subr.mxu0 0.0
      %3615 = vmatpush1.msra.mxu0 0.0
      %3616 = vmatprep.subr.mxu0 0.0
      %3617 = vmatpush1.msra.mxu0 0.0
      %3618 = vmatprep.subr.mxu0 0.0
      %3619 = vmatpush1.msra.mxu0 0.0
      %3620 = vmatprep.subr.mxu0 0.0
      %3621 = vmatpush1.msra.mxu0 0.0
      %3622 = vmatprep.subr.mxu0 0.0
      %3623 = vmatpush1.msra.mxu0 0.0
      %3624 = vmatprep.subr.mxu0 0.0
      %3625 = vmatpush1.msra.mxu0 0.0
      %3626 = vmatprep.subr.mxu0 0.0
      %3627 = vmatpush1.msra.mxu0 0.0
      %3628 = vmatprep.subr.mxu0 0.0
      %3629 = vmatpush1.msra.mxu0 0.0
      %3630 = vmatprep.subr.mxu0 0.0
      %3631 = vmatpush1.msra.mxu0 0.0
      %3632 = vmatprep.subr.mxu0 0.0
      %3633 = vmatpush1.msra.mxu0 0.0
      %3634 = vmatprep.subr.mxu0 0.0
      %3635 = vmatpush1.msra.mxu0 0.0
      %3636 = vmatprep.subr.mxu0 0.0
      %3637 = vmatpush1.msra.mxu0 0.0
      %3638 = vmatprep.subr.mxu0 0.0
      %3639 = vmatpush1.msra.mxu0 0.0
      %3640 = vmatprep.subr.mxu0 0.0
      %3641 = vmatpush1.msra.mxu0 %v3563
      %3642 = vmatprep.subr.mxu0 0.0
      %3643 = vmatpush1.msra.mxu0 %v3562
      %3644 = vmatprep.subr.mxu0 0.0
      %3645 = vmatpush2.msra.mxu0 0.0
      %3646 = vmatprep.subr.mxu0 0.0
      %3647 = vmatpush2.msra.mxu0 0.0
      %3648 = vmatprep.subr.mxu0 0.0
      %3649 = vmatpush2.msra.mxu0 0.0
      %3650 = vmatprep.subr.mxu0 0.0
      %3651 = vmatpush2.msra.mxu0 0.0
      %3652 = vmatprep.subr.mxu0 0.0
      %3653 = vmatpush2.msra.mxu0 0.0
      %3654 = vmatprep.subr.mxu0 0.0
      %3655 = vmatpush2.msra.mxu0 0.0
      %3656 = vmatprep.subr.mxu0 0.0
      %3657 = vmatpush2.msra.mxu0 0.0
      %3658 = vmatprep.subr.mxu0 0.0
      %3659 = vmatpush2.msra.mxu0 0.0
      %3660 = vmatprep.subr.mxu0 0.0
      %3661 = vmatpush2.msra.mxu0 0.0
      %3662 = vmatprep.subr.mxu0 0.0
      %3663 = vmatpush2.msra.mxu0 0.0
      %3664 = vmatprep.subr.mxu0 0.0
      %3665 = vmatpush2.msra.mxu0 0.0
      %3666 = vmatprep.subr.mxu0 0.0
      %3667 = vmatpush2.msra.mxu0 0.0
      %3668 = vmatprep.subr.mxu0 0.0
      %3669 = vmatpush2.msra.mxu0 0.0
      %3670 = vmatprep.subr.mxu0 0.0
      %3671 = vmatpush2.msra.mxu0 0.0
      %3672 = vmatprep.subr.mxu0 0.0
      %3673 = vmatpush2.msra.mxu0 0.0
      %3674 = vmatprep.subr.mxu0 0.0
      %3675 = vmatpush2.msra.mxu0 0.0
      %3676 = vmatprep.mubr.f32.mxu0 0.0
      %3677 = vmatmul.mubr.f32.gmra.mxu0 %v3565
      %v3678 = vpop.f32.mrf.mxu0
      %v3679 = vadd.f32 0.0, %v3678
      %v3680 = vpop.f32.mrf.mxu0
      %3681 = vmatprep.mubr.f32.mxu0 0.0
      %3682 = vmatmul.mubr.f32.gmra.mxu0 %v3568
      %v3683 = vpop.f32.mrf.mxu0
      %v3684 = vadd.f32 0.0, %v3683
      %v3685 = vpop.f32.mrf.mxu0
      %3686 = vmatprep.mubr.f32.mxu0 0.0
      %3687 = vmatmul.mubr.f32.gmra.mxu0 %v3571
      %v3688 = vpop.f32.mrf.mxu0
      %v3689 = vadd.f32 0.0, %v3688
      %v3690 = vpop.f32.mrf.mxu0
      %3691 = vmatprep.mubr.f32.mxu0 0.0
      %3692 = vmatmul.mubr.f32.gmra.mxu0 %v3574
      %v3693 = vpop.f32.mrf.mxu0
      %v3694 = vadd.f32 0.0, %v3693
      %v3695 = vpop.f32.mrf.mxu0
      %3696 = vmatprep.mubr.f32.mxu0 0.0
      %3697 = vmatmul.mubr.f32.gmra.mxu0 %v3577
      %v3698 = vpop.f32.mrf.mxu0
      %v3699 = vadd.f32 0.0, %v3698
      %v3700 = vpop.f32.mrf.mxu0
      %3701 = vmatprep.mubr.f32.mxu0 0.0
      %3702 = vmatmul.mubr.f32.gmra.mxu0 %v3580
      %v3703 = vpop.f32.mrf.mxu0
      %v3704 = vadd.f32 0.0, %v3703
      %v3705 = vpop.f32.mrf.mxu0
      %3706 = vmatprep.mubr.f32.mxu0 0.0
      %3707 = vmatmul.mubr.f32.gmra.mxu0 %v3583
      %v3708 = vpop.f32.mrf.mxu0
      %v3709 = vadd.f32 0.0, %v3708
      %v3710 = vpop.f32.mrf.mxu0
      %3711 = vmatprep.mubr.f32.mxu0 0.0
      %3712 = vmatmul.mubr.f32.gmra.mxu0 %v3586
      %v3713 = vpop.f32.mrf.mxu0
      %v3714 = vadd.f32 0.0, %v3713
      %v3715 = vpop.f32.mrf.mxu0
      %3716 = vmatprep.mubr.f32.mxu0 0.0
      %3717 = vmatmul.mubr.f32.gmra.mxu0 %v3589
      %v3718 = vpop.f32.mrf.mxu0
      %v3719 = vadd.f32 0.0, %v3718
      %v3720 = vpop.f32.mrf.mxu0
      %3721 = vmatprep.mubr.f32.mxu0 0.0
      %3722 = vmatmul.mubr.f32.gmra.mxu0 %v3592
      %v3723 = vpop.f32.mrf.mxu0
      %v3724 = vadd.f32 0.0, %v3723
      %v3725 = vpop.f32.mrf.mxu0
      %3726 = vmatprep.mubr.f32.mxu0 0.0
      %3727 = vmatmul.mubr.f32.gmra.mxu0 %v3595
      %v3728 = vpop.f32.mrf.mxu0
      %v3729 = vadd.f32 0.0, %v3728
      %v3730 = vpop.f32.mrf.mxu0
      %3731 = vmatprep.mubr.f32.mxu0 0.0
      %3732 = vmatmul.mubr.f32.gmra.mxu0 %v3598
      %v3733 = vpop.f32.mrf.mxu0
      %v3734 = vadd.f32 0.0, %v3733
      %v3735 = vpop.f32.mrf.mxu0
      %3736 = vmatprep.mubr.f32.mxu0 0.0
      %3737 = vmatmul.mubr.f32.gmra.mxu0 %v3601
      %v3738 = vpop.f32.mrf.mxu0
      %v3739 = vadd.f32 0.0, %v3738
      %v3740 = vpop.f32.mrf.mxu0
      %3741 = vmatprep.mubr.f32.mxu0 0.0
      %3742 = vmatmul.mubr.f32.gmra.mxu0 %v3604
      %v3743 = vpop.f32.mrf.mxu0
      %v3744 = vadd.f32 0.0, %v3743
      %v3745 = vpop.f32.mrf.mxu0
      %3746 = vmatprep.mubr.f32.mxu0 0.0
      %3747 = vmatmul.mubr.f32.gmra.mxu0 %v3607
      %v3748 = vpop.f32.mrf.mxu0
      %v3749 = vadd.f32 0.0, %v3748
      %v3750 = vpop.f32.mrf.mxu0
      %3751 = vmatprep.mubr.f32.mxu0 0.0
      %3752 = vmatmul.mubr.f32.gmra.mxu0 %v3610
      %v3753 = vpop.f32.mrf.mxu0
      %v3754 = vadd.f32 0.0, %v3753
      %v3755 = vpop.f32.mrf.mxu0
      %3756 = vdwg.mxu0
      %v3757 = vadd.f32 %v3468, %v3679
      %v3758 = vadd.f32 %v3473, %v3684
      %v3759 = vadd.f32 %v3478, %v3689
      %v3760 = vadd.f32 %v3483, %v3694
      %v3761 = vadd.f32 %v3488, %v3699
      %v3762 = vadd.f32 %v3493, %v3704
      %v3763 = vadd.f32 %v3498, %v3709
      %v3764 = vadd.f32 %v3503, %v3714
      %v3765 = vadd.f32 %v3508, %v3719
      %v3766 = vadd.f32 %v3513, %v3724
      %v3767 = vadd.f32 %v3518, %v3729
      %v3768 = vadd.f32 %v3523, %v3734
      %v3769 = vadd.f32 %v3528, %v3739
      %v3770 = vadd.f32 %v3533, %v3744
      %v3771 = vadd.f32 %v3538, %v3749
      %v3772 = vadd.f32 %v3543, %v3754
      %v3773 = vld [vmem:[%s2851] sm:$0xff]
      %v3774 = vld [vmem:[%s2851 + $0x10] sm:$0xff]
      %v3775 = vld [vmem:[%s2851 + $0x20] sm:$0xff]
      %v3776 = vld [vmem:[%s2851 + $0x30] sm:$0xff]
      %v3777 = vld [vmem:[%s2851 + $0x40] sm:$0xff]
      %v3778 = vld [vmem:[%s2851 + $0x50] sm:$0xff]
      %v3779 = vld [vmem:[%s2851 + $0x60] sm:$0xff]
      %v3780 = vld [vmem:[%s2851 + $0x70] sm:$0xff]
      %v3781 = vld [vmem:[%s2851 + $0xa0] sm:$0xff]
      %v3782 = vld [vmem:[%s2851 + $0xb0] sm:$0xff]
      %v3783 = vld [vmem:[%s2851 + $0xc0] sm:$0xff]
      %v3784 = vld [vmem:[%s2851 + $0xd0] sm:$0xff]
      %v3785 = vld [vmem:[%s2851 + $0xe0] sm:$0xff]
      %v3786 = vld [vmem:[%s2851 + $0xf0] sm:$0xff]
      %v3787 = vld [vmem:[%s2851 + $0x100] sm:$0xff]
      %v3788 = vld [vmem:[%s2851 + $0x110] sm:$0xff]
      %v3789 = vld [vmem:[%s5 + $0x30] sm:$0xff]
      %v3790 = vld [vmem:[%s5 + $0x38] sm:$0xff]
      %v3792 = vsel %vm2540, %v3773, 0
      %v3795 = vsel %vm2540, %v3774, 0
      %v3798 = vsel %vm2540, %v3775, 0
      %v3801 = vsel %vm2540, %v3776, 0
      %v3804 = vsel %vm2540, %v3777, 0
      %v3807 = vsel %vm2540, %v3778, 0
      %v3810 = vsel %vm2540, %v3779, 0
      %v3813 = vsel %vm2540, %v3780, 0
      %v3816 = vsel %vm2540, %v3781, 0
      %v3819 = vsel %vm2540, %v3782, 0
      %v3822 = vsel %vm2540, %v3783, 0
      %v3825 = vsel %vm2540, %v3784, 0
      %v3828 = vsel %vm2540, %v3785, 0
      %v3831 = vsel %vm2540, %v3786, 0
      %v3834 = vsel %vm2540, %v3787, 0
      %v3837 = vsel %vm2540, %v3788, 0
      %3839 = vmatprep.subr.mxu0 0.0
      %3840 = vmatpush1.msra.mxu0 0.0
      %3841 = vmatprep.subr.mxu0 0.0
      %3842 = vmatpush1.msra.mxu0 0.0
      %3843 = vmatprep.subr.mxu0 0.0
      %3844 = vmatpush1.msra.mxu0 0.0
      %3845 = vmatprep.subr.mxu0 0.0
      %3846 = vmatpush1.msra.mxu0 0.0
      %3847 = vmatprep.subr.mxu0 0.0
      %3848 = vmatpush1.msra.mxu0 0.0
      %3849 = vmatprep.subr.mxu0 0.0
      %3850 = vmatpush1.msra.mxu0 0.0
      %3851 = vmatprep.subr.mxu0 0.0
      %3852 = vmatpush1.msra.mxu0 0.0
      %3853 = vmatprep.subr.mxu0 0.0
      %3854 = vmatpush1.msra.mxu0 0.0
      %3855 = vmatprep.subr.mxu0 0.0
      %3856 = vmatpush1.msra.mxu0 0.0
      %3857 = vmatprep.subr.mxu0 0.0
      %3858 = vmatpush1.msra.mxu0 0.0
      %3859 = vmatprep.subr.mxu0 0.0
      %3860 = vmatpush1.msra.mxu0 0.0
      %3861 = vmatprep.subr.mxu0 0.0
      %3862 = vmatpush1.msra.mxu0 0.0
      %3863 = vmatprep.subr.mxu0 0.0
      %3864 = vmatpush1.msra.mxu0 0.0
      %3865 = vmatprep.subr.mxu0 0.0
      %3866 = vmatpush1.msra.mxu0 0.0
      %3867 = vmatprep.subr.mxu0 0.0
      %3868 = vmatpush1.msra.mxu0 %v3790
      %3869 = vmatprep.subr.mxu0 0.0
      %3870 = vmatpush1.msra.mxu0 %v3789
      %3871 = vmatprep.subr.mxu0 0.0
      %3872 = vmatpush2.msra.mxu0 0.0
      %3873 = vmatprep.subr.mxu0 0.0
      %3874 = vmatpush2.msra.mxu0 0.0
      %3875 = vmatprep.subr.mxu0 0.0
      %3876 = vmatpush2.msra.mxu0 0.0
      %3877 = vmatprep.subr.mxu0 0.0
      %3878 = vmatpush2.msra.mxu0 0.0
      %3879 = vmatprep.subr.mxu0 0.0
      %3880 = vmatpush2.msra.mxu0 0.0
      %3881 = vmatprep.subr.mxu0 0.0
      %3882 = vmatpush2.msra.mxu0 0.0
      %3883 = vmatprep.subr.mxu0 0.0
      %3884 = vmatpush2.msra.mxu0 0.0
      %3885 = vmatprep.subr.mxu0 0.0
      %3886 = vmatpush2.msra.mxu0 0.0
      %3887 = vmatprep.subr.mxu0 0.0
      %3888 = vmatpush2.msra.mxu0 0.0
      %3889 = vmatprep.subr.mxu0 0.0
      %3890 = vmatpush2.msra.mxu0 0.0
      %3891 = vmatprep.subr.mxu0 0.0
      %3892 = vmatpush2.msra.mxu0 0.0
      %3893 = vmatprep.subr.mxu0 0.0
      %3894 = vmatpush2.msra.mxu0 0.0
      %3895 = vmatprep.subr.mxu0 0.0
      %3896 = vmatpush2.msra.mxu0 0.0
      %3897 = vmatprep.subr.mxu0 0.0
      %3898 = vmatpush2.msra.mxu0 0.0
      %3899 = vmatprep.subr.mxu0 0.0
      %3900 = vmatpush2.msra.mxu0 0.0
      %3901 = vmatprep.subr.mxu0 0.0
      %3902 = vmatpush2.msra.mxu0 0.0
      %3903 = vmatprep.mubr.f32.mxu0 0.0
      %3904 = vmatmul.mubr.f32.gmra.mxu0 %v3792
      %v3905 = vpop.f32.mrf.mxu0
      %v3906 = vadd.f32 0.0, %v3905
      %v3907 = vpop.f32.mrf.mxu0
      %3908 = vmatprep.mubr.f32.mxu0 0.0
      %3909 = vmatmul.mubr.f32.gmra.mxu0 %v3795
      %v3910 = vpop.f32.mrf.mxu0
      %v3911 = vadd.f32 0.0, %v3910
      %v3912 = vpop.f32.mrf.mxu0
      %3913 = vmatprep.mubr.f32.mxu0 0.0
      %3914 = vmatmul.mubr.f32.gmra.mxu0 %v3798
      %v3915 = vpop.f32.mrf.mxu0
      %v3916 = vadd.f32 0.0, %v3915
      %v3917 = vpop.f32.mrf.mxu0
      %3918 = vmatprep.mubr.f32.mxu0 0.0
      %3919 = vmatmul.mubr.f32.gmra.mxu0 %v3801
      %v3920 = vpop.f32.mrf.mxu0
      %v3921 = vadd.f32 0.0, %v3920
      %v3922 = vpop.f32.mrf.mxu0
      %3923 = vmatprep.mubr.f32.mxu0 0.0
      %3924 = vmatmul.mubr.f32.gmra.mxu0 %v3804
      %v3925 = vpop.f32.mrf.mxu0
      %v3926 = vadd.f32 0.0, %v3925
      %v3927 = vpop.f32.mrf.mxu0
      %3928 = vmatprep.mubr.f32.mxu0 0.0
      %3929 = vmatmul.mubr.f32.gmra.mxu0 %v3807
      %v3930 = vpop.f32.mrf.mxu0
      %v3931 = vadd.f32 0.0, %v3930
      %v3932 = vpop.f32.mrf.mxu0
      %3933 = vmatprep.mubr.f32.mxu0 0.0
      %3934 = vmatmul.mubr.f32.gmra.mxu0 %v3810
      %v3935 = vpop.f32.mrf.mxu0
      %v3936 = vadd.f32 0.0, %v3935
      %v3937 = vpop.f32.mrf.mxu0
      %3938 = vmatprep.mubr.f32.mxu0 0.0
      %3939 = vmatmul.mubr.f32.gmra.mxu0 %v3813
      %v3940 = vpop.f32.mrf.mxu0
      %v3941 = vadd.f32 0.0, %v3940
      %v3942 = vpop.f32.mrf.mxu0
      %3943 = vmatprep.mubr.f32.mxu0 0.0
      %3944 = vmatmul.mubr.f32.gmra.mxu0 %v3816
      %v3945 = vpop.f32.mrf.mxu0
      %v3946 = vadd.f32 0.0, %v3945
      %v3947 = vpop.f32.mrf.mxu0
      %3948 = vmatprep.mubr.f32.mxu0 0.0
      %3949 = vmatmul.mubr.f32.gmra.mxu0 %v3819
      %v3950 = vpop.f32.mrf.mxu0
      %v3951 = vadd.f32 0.0, %v3950
      %v3952 = vpop.f32.mrf.mxu0
      %3953 = vmatprep.mubr.f32.mxu0 0.0
      %3954 = vmatmul.mubr.f32.gmra.mxu0 %v3822
      %v3955 = vpop.f32.mrf.mxu0
      %v3956 = vadd.f32 0.0, %v3955
      %v3957 = vpop.f32.mrf.mxu0
      %3958 = vmatprep.mubr.f32.mxu0 0.0
      %3959 = vmatmul.mubr.f32.gmra.mxu0 %v3825
      %v3960 = vpop.f32.mrf.mxu0
      %v3961 = vadd.f32 0.0, %v3960
      %v3962 = vpop.f32.mrf.mxu0
      %3963 = vmatprep.mubr.f32.mxu0 0.0
      %3964 = vmatmul.mubr.f32.gmra.mxu0 %v3828
      %v3965 = vpop.f32.mrf.mxu0
      %v3966 = vadd.f32 0.0, %v3965
      %v3967 = vpop.f32.mrf.mxu0
      %3968 = vmatprep.mubr.f32.mxu0 0.0
      %3969 = vmatmul.mubr.f32.gmra.mxu0 %v3831
      %v3970 = vpop.f32.mrf.mxu0
      %v3971 = vadd.f32 0.0, %v3970
      %v3972 = vpop.f32.mrf.mxu0
      %3973 = vmatprep.mubr.f32.mxu0 0.0
      %3974 = vmatmul.mubr.f32.gmra.mxu0 %v3834
      %v3975 = vpop.f32.mrf.mxu0
      %v3976 = vadd.f32 0.0, %v3975
      %v3977 = vpop.f32.mrf.mxu0
      %3978 = vmatprep.mubr.f32.mxu0 0.0
      %3979 = vmatmul.mubr.f32.gmra.mxu0 %v3837
      %v3980 = vpop.f32.mrf.mxu0
      %v3981 = vadd.f32 0.0, %v3980
      %v3982 = vpop.f32.mrf.mxu0
      %3983 = vdwg.mxu0
      %v3984 = vadd.f32 %v3757, %v3906
      %v3985 = vadd.f32 %v3758, %v3911
      %v3986 = vadd.f32 %v3759, %v3916
      %v3987 = vadd.f32 %v3760, %v3921
      %v3988 = vadd.f32 %v3761, %v3926
      %v3989 = vadd.f32 %v3762, %v3931
      %v3990 = vadd.f32 %v3763, %v3936
      %v3991 = vadd.f32 %v3764, %v3941
      %v3992 = vadd.f32 %v3765, %v3946
      %v3993 = vadd.f32 %v3766, %v3951
      %v3994 = vadd.f32 %v3767, %v3956
      %v3995 = vadd.f32 %v3768, %v3961
      %v3996 = vadd.f32 %v3769, %v3966
      %v3997 = vadd.f32 %v3770, %v3971
      %v3998 = vadd.f32 %v3771, %v3976
      %v3999 = vadd.f32 %v3772, %v3981
      %v4000 = vld [vmem:[%s2851 + $0x1] sm:$0xff]
      %v4001 = vld [vmem:[%s2851 + $0x11] sm:$0xff]
      %v4002 = vld [vmem:[%s2851 + $0x21] sm:$0xff]
      %v4003 = vld [vmem:[%s2851 + $0x31] sm:$0xff]
      %v4004 = vld [vmem:[%s2851 + $0x41] sm:$0xff]
      %v4005 = vld [vmem:[%s2851 + $0x51] sm:$0xff]
      %v4006 = vld [vmem:[%s2851 + $0x61] sm:$0xff]
      %v4007 = vld [vmem:[%s2851 + $0x71] sm:$0xff]
      %v4008 = vld [vmem:[%s2851 + $0xa1] sm:$0xff]
      %v4009 = vld [vmem:[%s2851 + $0xb1] sm:$0xff]
      %v4010 = vld [vmem:[%s2851 + $0xc1] sm:$0xff]
      %v4011 = vld [vmem:[%s2851 + $0xd1] sm:$0xff]
      %v4012 = vld [vmem:[%s2851 + $0xe1] sm:$0xff]
      %v4013 = vld [vmem:[%s2851 + $0xf1] sm:$0xff]
      %v4014 = vld [vmem:[%s2851 + $0x101] sm:$0xff]
      %v4015 = vld [vmem:[%s2851 + $0x111] sm:$0xff]
      %v4016 = vld [vmem:[%s5 + $0x40] sm:$0xff]
      %v4017 = vld [vmem:[%s5 + $0x48] sm:$0xff]
      %v4019 = vsel %vm2540, %v4000, 0
      %v4022 = vsel %vm2540, %v4001, 0
      %v4025 = vsel %vm2540, %v4002, 0
      %v4028 = vsel %vm2540, %v4003, 0
      %v4031 = vsel %vm2540, %v4004, 0
      %v4034 = vsel %vm2540, %v4005, 0
      %v4037 = vsel %vm2540, %v4006, 0
      %v4040 = vsel %vm2540, %v4007, 0
      %v4043 = vsel %vm2540, %v4008, 0
      %v4046 = vsel %vm2540, %v4009, 0
      %v4049 = vsel %vm2540, %v4010, 0
      %v4052 = vsel %vm2540, %v4011, 0
      %v4055 = vsel %vm2540, %v4012, 0
      %v4058 = vsel %vm2540, %v4013, 0
      %v4061 = vsel %vm2540, %v4014, 0
      %v4064 = vsel %vm2540, %v4015, 0
      %4066 = vmatprep.subr.mxu0 0.0
      %4067 = vmatpush1.msra.mxu0 0.0
      %4068 = vmatprep.subr.mxu0 0.0
      %4069 = vmatpush1.msra.mxu0 0.0
      %4070 = vmatprep.subr.mxu0 0.0
      %4071 = vmatpush1.msra.mxu0 0.0
      %4072 = vmatprep.subr.mxu0 0.0
      %4073 = vmatpush1.msra.mxu0 0.0
      %4074 = vmatprep.subr.mxu0 0.0
      %4075 = vmatpush1.msra.mxu0 0.0
      %4076 = vmatprep.subr.mxu0 0.0
      %4077 = vmatpush1.msra.mxu0 0.0
      %4078 = vmatprep.subr.mxu0 0.0
      %4079 = vmatpush1.msra.mxu0 0.0
      %4080 = vmatprep.subr.mxu0 0.0
      %4081 = vmatpush1.msra.mxu0 0.0
      %4082 = vmatprep.subr.mxu0 0.0
      %4083 = vmatpush1.msra.mxu0 0.0
      %4084 = vmatprep.subr.mxu0 0.0
      %4085 = vmatpush1.msra.mxu0 0.0
      %4086 = vmatprep.subr.mxu0 0.0
      %4087 = vmatpush1.msra.mxu0 0.0
      %4088 = vmatprep.subr.mxu0 0.0
      %4089 = vmatpush1.msra.mxu0 0.0
      %4090 = vmatprep.subr.mxu0 0.0
      %4091 = vmatpush1.msra.mxu0 0.0
      %4092 = vmatprep.subr.mxu0 0.0
      %4093 = vmatpush1.msra.mxu0 0.0
      %4094 = vmatprep.subr.mxu0 0.0
      %4095 = vmatpush1.msra.mxu0 %v4017
      %4096 = vmatprep.subr.mxu0 0.0
      %4097 = vmatpush1.msra.mxu0 %v4016
      %4098 = vmatprep.subr.mxu0 0.0
      %4099 = vmatpush2.msra.mxu0 0.0
      %4100 = vmatprep.subr.mxu0 0.0
      %4101 = vmatpush2.msra.mxu0 0.0
      %4102 = vmatprep.subr.mxu0 0.0
      %4103 = vmatpush2.msra.mxu0 0.0
      %4104 = vmatprep.subr.mxu0 0.0
      %4105 = vmatpush2.msra.mxu0 0.0
      %4106 = vmatprep.subr.mxu0 0.0
      %4107 = vmatpush2.msra.mxu0 0.0
      %4108 = vmatprep.subr.mxu0 0.0
      %4109 = vmatpush2.msra.mxu0 0.0
      %4110 = vmatprep.subr.mxu0 0.0
      %4111 = vmatpush2.msra.mxu0 0.0
      %4112 = vmatprep.subr.mxu0 0.0
      %4113 = vmatpush2.msra.mxu0 0.0
      %4114 = vmatprep.subr.mxu0 0.0
      %4115 = vmatpush2.msra.mxu0 0.0
      %4116 = vmatprep.subr.mxu0 0.0
      %4117 = vmatpush2.msra.mxu0 0.0
      %4118 = vmatprep.subr.mxu0 0.0
      %4119 = vmatpush2.msra.mxu0 0.0
      %4120 = vmatprep.subr.mxu0 0.0
      %4121 = vmatpush2.msra.mxu0 0.0
      %4122 = vmatprep.subr.mxu0 0.0
      %4123 = vmatpush2.msra.mxu0 0.0
      %4124 = vmatprep.subr.mxu0 0.0
      %4125 = vmatpush2.msra.mxu0 0.0
      %4126 = vmatprep.subr.mxu0 0.0
      %4127 = vmatpush2.msra.mxu0 0.0
      %4128 = vmatprep.subr.mxu0 0.0
      %4129 = vmatpush2.msra.mxu0 0.0
      %4130 = vmatprep.mubr.f32.mxu0 0.0
      %4131 = vmatmul.mubr.f32.gmra.mxu0 %v4019
      %v4132 = vpop.f32.mrf.mxu0
      %v4133 = vadd.f32 0.0, %v4132
      %v4134 = vpop.f32.mrf.mxu0
      %4135 = vmatprep.mubr.f32.mxu0 0.0
      %4136 = vmatmul.mubr.f32.gmra.mxu0 %v4022
      %v4137 = vpop.f32.mrf.mxu0
      %v4138 = vadd.f32 0.0, %v4137
      %v4139 = vpop.f32.mrf.mxu0
      %4140 = vmatprep.mubr.f32.mxu0 0.0
      %4141 = vmatmul.mubr.f32.gmra.mxu0 %v4025
      %v4142 = vpop.f32.mrf.mxu0
      %v4143 = vadd.f32 0.0, %v4142
      %v4144 = vpop.f32.mrf.mxu0
      %4145 = vmatprep.mubr.f32.mxu0 0.0
      %4146 = vmatmul.mubr.f32.gmra.mxu0 %v4028
      %v4147 = vpop.f32.mrf.mxu0
      %v4148 = vadd.f32 0.0, %v4147
      %v4149 = vpop.f32.mrf.mxu0
      %4150 = vmatprep.mubr.f32.mxu0 0.0
      %4151 = vmatmul.mubr.f32.gmra.mxu0 %v4031
      %v4152 = vpop.f32.mrf.mxu0
      %v4153 = vadd.f32 0.0, %v4152
      %v4154 = vpop.f32.mrf.mxu0
      %4155 = vmatprep.mubr.f32.mxu0 0.0
      %4156 = vmatmul.mubr.f32.gmra.mxu0 %v4034
      %v4157 = vpop.f32.mrf.mxu0
      %v4158 = vadd.f32 0.0, %v4157
      %v4159 = vpop.f32.mrf.mxu0
      %4160 = vmatprep.mubr.f32.mxu0 0.0
      %4161 = vmatmul.mubr.f32.gmra.mxu0 %v4037
      %v4162 = vpop.f32.mrf.mxu0
      %v4163 = vadd.f32 0.0, %v4162
      %v4164 = vpop.f32.mrf.mxu0
      %4165 = vmatprep.mubr.f32.mxu0 0.0
      %4166 = vmatmul.mubr.f32.gmra.mxu0 %v4040
      %v4167 = vpop.f32.mrf.mxu0
      %v4168 = vadd.f32 0.0, %v4167
      %v4169 = vpop.f32.mrf.mxu0
      %4170 = vmatprep.mubr.f32.mxu0 0.0
      %4171 = vmatmul.mubr.f32.gmra.mxu0 %v4043
      %v4172 = vpop.f32.mrf.mxu0
      %v4173 = vadd.f32 0.0, %v4172
      %v4174 = vpop.f32.mrf.mxu0
      %4175 = vmatprep.mubr.f32.mxu0 0.0
      %4176 = vmatmul.mubr.f32.gmra.mxu0 %v4046
      %v4177 = vpop.f32.mrf.mxu0
      %v4178 = vadd.f32 0.0, %v4177
      %v4179 = vpop.f32.mrf.mxu0
      %4180 = vmatprep.mubr.f32.mxu0 0.0
      %4181 = vmatmul.mubr.f32.gmra.mxu0 %v4049
      %v4182 = vpop.f32.mrf.mxu0
      %v4183 = vadd.f32 0.0, %v4182
      %v4184 = vpop.f32.mrf.mxu0
      %4185 = vmatprep.mubr.f32.mxu0 0.0
      %4186 = vmatmul.mubr.f32.gmra.mxu0 %v4052
      %v4187 = vpop.f32.mrf.mxu0
      %v4188 = vadd.f32 0.0, %v4187
      %v4189 = vpop.f32.mrf.mxu0
      %4190 = vmatprep.mubr.f32.mxu0 0.0
      %4191 = vmatmul.mubr.f32.gmra.mxu0 %v4055
      %v4192 = vpop.f32.mrf.mxu0
      %v4193 = vadd.f32 0.0, %v4192
      %v4194 = vpop.f32.mrf.mxu0
      %4195 = vmatprep.mubr.f32.mxu0 0.0
      %4196 = vmatmul.mubr.f32.gmra.mxu0 %v4058
      %v4197 = vpop.f32.mrf.mxu0
      %v4198 = vadd.f32 0.0, %v4197
      %v4199 = vpop.f32.mrf.mxu0
      %4200 = vmatprep.mubr.f32.mxu0 0.0
      %4201 = vmatmul.mubr.f32.gmra.mxu0 %v4061
      %v4202 = vpop.f32.mrf.mxu0
      %v4203 = vadd.f32 0.0, %v4202
      %v4204 = vpop.f32.mrf.mxu0
      %4205 = vmatprep.mubr.f32.mxu0 0.0
      %4206 = vmatmul.mubr.f32.gmra.mxu0 %v4064
      %v4207 = vpop.f32.mrf.mxu0
      %v4208 = vadd.f32 0.0, %v4207
      %v4209 = vpop.f32.mrf.mxu0
      %4210 = vdwg.mxu0
      %v4211 = vadd.f32 %v3984, %v4133
      %v4212 = vadd.f32 %v3985, %v4138
      %v4213 = vadd.f32 %v3986, %v4143
      %v4214 = vadd.f32 %v3987, %v4148
      %v4215 = vadd.f32 %v3988, %v4153
      %v4216 = vadd.f32 %v3989, %v4158
      %v4217 = vadd.f32 %v3990, %v4163
      %v4218 = vadd.f32 %v3991, %v4168
      %v4219 = vadd.f32 %v3992, %v4173
      %v4220 = vadd.f32 %v3993, %v4178
      %v4221 = vadd.f32 %v3994, %v4183
      %v4222 = vadd.f32 %v3995, %v4188
      %v4223 = vadd.f32 %v3996, %v4193
      %v4224 = vadd.f32 %v3997, %v4198
      %v4225 = vadd.f32 %v3998, %v4203
      %v4226 = vadd.f32 %v3999, %v4208
      %v4227 = vld [vmem:[%s2851 + $0x2] sm:$0xff]
      %v4228 = vld [vmem:[%s2851 + $0x12] sm:$0xff]
      %v4229 = vld [vmem:[%s2851 + $0x22] sm:$0xff]
      %v4230 = vld [vmem:[%s2851 + $0x32] sm:$0xff]
      %v4231 = vld [vmem:[%s2851 + $0x42] sm:$0xff]
      %v4232 = vld [vmem:[%s2851 + $0x52] sm:$0xff]
      %v4233 = vld [vmem:[%s2851 + $0x62] sm:$0xff]
      %v4234 = vld [vmem:[%s2851 + $0x72] sm:$0xff]
      %v4235 = vld [vmem:[%s2851 + $0xa2] sm:$0xff]
      %v4236 = vld [vmem:[%s2851 + $0xb2] sm:$0xff]
      %v4237 = vld [vmem:[%s2851 + $0xc2] sm:$0xff]
      %v4238 = vld [vmem:[%s2851 + $0xd2] sm:$0xff]
      %v4239 = vld [vmem:[%s2851 + $0xe2] sm:$0xff]
      %v4240 = vld [vmem:[%s2851 + $0xf2] sm:$0xff]
      %v4241 = vld [vmem:[%s2851 + $0x102] sm:$0xff]
      %v4242 = vld [vmem:[%s2851 + $0x112] sm:$0xff]
      %v4243 = vld [vmem:[%s5 + $0x50] sm:$0xff]
      %v4244 = vld [vmem:[%s5 + $0x58] sm:$0xff]
      %v4246 = vsel %vm2540, %v4227, 0
      %v4249 = vsel %vm2540, %v4228, 0
      %v4252 = vsel %vm2540, %v4229, 0
      %v4255 = vsel %vm2540, %v4230, 0
      %v4258 = vsel %vm2540, %v4231, 0
      %v4261 = vsel %vm2540, %v4232, 0
      %v4264 = vsel %vm2540, %v4233, 0
      %v4267 = vsel %vm2540, %v4234, 0
      %v4270 = vsel %vm2540, %v4235, 0
      %v4273 = vsel %vm2540, %v4236, 0
      %v4276 = vsel %vm2540, %v4237, 0
      %v4279 = vsel %vm2540, %v4238, 0
      %v4282 = vsel %vm2540, %v4239, 0
      %v4285 = vsel %vm2540, %v4240, 0
      %v4288 = vsel %vm2540, %v4241, 0
      %v4291 = vsel %vm2540, %v4242, 0
      %4293 = vmatprep.subr.mxu0 0.0
      %4294 = vmatpush1.msra.mxu0 0.0
      %4295 = vmatprep.subr.mxu0 0.0
      %4296 = vmatpush1.msra.mxu0 0.0
      %4297 = vmatprep.subr.mxu0 0.0
      %4298 = vmatpush1.msra.mxu0 0.0
      %4299 = vmatprep.subr.mxu0 0.0
      %4300 = vmatpush1.msra.mxu0 0.0
      %4301 = vmatprep.subr.mxu0 0.0
      %4302 = vmatpush1.msra.mxu0 0.0
      %4303 = vmatprep.subr.mxu0 0.0
      %4304 = vmatpush1.msra.mxu0 0.0
      %4305 = vmatprep.subr.mxu0 0.0
      %4306 = vmatpush1.msra.mxu0 0.0
      %4307 = vmatprep.subr.mxu0 0.0
      %4308 = vmatpush1.msra.mxu0 0.0
      %4309 = vmatprep.subr.mxu0 0.0
      %4310 = vmatpush1.msra.mxu0 0.0
      %4311 = vmatprep.subr.mxu0 0.0
      %4312 = vmatpush1.msra.mxu0 0.0
      %4313 = vmatprep.subr.mxu0 0.0
      %4314 = vmatpush1.msra.mxu0 0.0
      %4315 = vmatprep.subr.mxu0 0.0
      %4316 = vmatpush1.msra.mxu0 0.0
      %4317 = vmatprep.subr.mxu0 0.0
      %4318 = vmatpush1.msra.mxu0 0.0
      %4319 = vmatprep.subr.mxu0 0.0
      %4320 = vmatpush1.msra.mxu0 0.0
      %4321 = vmatprep.subr.mxu0 0.0
      %4322 = vmatpush1.msra.mxu0 %v4244
      %4323 = vmatprep.subr.mxu0 0.0
      %4324 = vmatpush1.msra.mxu0 %v4243
      %4325 = vmatprep.subr.mxu0 0.0
      %4326 = vmatpush2.msra.mxu0 0.0
      %4327 = vmatprep.subr.mxu0 0.0
      %4328 = vmatpush2.msra.mxu0 0.0
      %4329 = vmatprep.subr.mxu0 0.0
      %4330 = vmatpush2.msra.mxu0 0.0
      %4331 = vmatprep.subr.mxu0 0.0
      %4332 = vmatpush2.msra.mxu0 0.0
      %4333 = vmatprep.subr.mxu0 0.0
      %4334 = vmatpush2.msra.mxu0 0.0
      %4335 = vmatprep.subr.mxu0 0.0
      %4336 = vmatpush2.msra.mxu0 0.0
      %4337 = vmatprep.subr.mxu0 0.0
      %4338 = vmatpush2.msra.mxu0 0.0
      %4339 = vmatprep.subr.mxu0 0.0
      %4340 = vmatpush2.msra.mxu0 0.0
      %4341 = vmatprep.subr.mxu0 0.0
      %4342 = vmatpush2.msra.mxu0 0.0
      %4343 = vmatprep.subr.mxu0 0.0
      %4344 = vmatpush2.msra.mxu0 0.0
      %4345 = vmatprep.subr.mxu0 0.0
      %4346 = vmatpush2.msra.mxu0 0.0
      %4347 = vmatprep.subr.mxu0 0.0
      %4348 = vmatpush2.msra.mxu0 0.0
      %4349 = vmatprep.subr.mxu0 0.0
      %4350 = vmatpush2.msra.mxu0 0.0
      %4351 = vmatprep.subr.mxu0 0.0
      %4352 = vmatpush2.msra.mxu0 0.0
      %4353 = vmatprep.subr.mxu0 0.0
      %4354 = vmatpush2.msra.mxu0 0.0
      %4355 = vmatprep.subr.mxu0 0.0
      %4356 = vmatpush2.msra.mxu0 0.0
      %4357 = vmatprep.mubr.f32.mxu0 0.0
      %4358 = vmatmul.mubr.f32.gmra.mxu0 %v4246
      %v4359 = vpop.f32.mrf.mxu0
      %v4360 = vadd.f32 0.0, %v4359
      %v4361 = vpop.f32.mrf.mxu0
      %4362 = vmatprep.mubr.f32.mxu0 0.0
      %4363 = vmatmul.mubr.f32.gmra.mxu0 %v4249
      %v4364 = vpop.f32.mrf.mxu0
      %v4365 = vadd.f32 0.0, %v4364
      %v4366 = vpop.f32.mrf.mxu0
      %4367 = vmatprep.mubr.f32.mxu0 0.0
      %4368 = vmatmul.mubr.f32.gmra.mxu0 %v4252
      %v4369 = vpop.f32.mrf.mxu0
      %v4370 = vadd.f32 0.0, %v4369
      %v4371 = vpop.f32.mrf.mxu0
      %4372 = vmatprep.mubr.f32.mxu0 0.0
      %4373 = vmatmul.mubr.f32.gmra.mxu0 %v4255
      %v4374 = vpop.f32.mrf.mxu0
      %v4375 = vadd.f32 0.0, %v4374
      %v4376 = vpop.f32.mrf.mxu0
      %4377 = vmatprep.mubr.f32.mxu0 0.0
      %4378 = vmatmul.mubr.f32.gmra.mxu0 %v4258
      %v4379 = vpop.f32.mrf.mxu0
      %v4380 = vadd.f32 0.0, %v4379
      %v4381 = vpop.f32.mrf.mxu0
      %4382 = vmatprep.mubr.f32.mxu0 0.0
      %4383 = vmatmul.mubr.f32.gmra.mxu0 %v4261
      %v4384 = vpop.f32.mrf.mxu0
      %v4385 = vadd.f32 0.0, %v4384
      %v4386 = vpop.f32.mrf.mxu0
      %4387 = vmatprep.mubr.f32.mxu0 0.0
      %4388 = vmatmul.mubr.f32.gmra.mxu0 %v4264
      %v4389 = vpop.f32.mrf.mxu0
      %v4390 = vadd.f32 0.0, %v4389
      %v4391 = vpop.f32.mrf.mxu0
      %4392 = vmatprep.mubr.f32.mxu0 0.0
      %4393 = vmatmul.mubr.f32.gmra.mxu0 %v4267
      %v4394 = vpop.f32.mrf.mxu0
      %v4395 = vadd.f32 0.0, %v4394
      %v4396 = vpop.f32.mrf.mxu0
      %4397 = vmatprep.mubr.f32.mxu0 0.0
      %4398 = vmatmul.mubr.f32.gmra.mxu0 %v4270
      %v4399 = vpop.f32.mrf.mxu0
      %v4400 = vadd.f32 0.0, %v4399
      %v4401 = vpop.f32.mrf.mxu0
      %4402 = vmatprep.mubr.f32.mxu0 0.0
      %4403 = vmatmul.mubr.f32.gmra.mxu0 %v4273
      %v4404 = vpop.f32.mrf.mxu0
      %v4405 = vadd.f32 0.0, %v4404
      %v4406 = vpop.f32.mrf.mxu0
      %4407 = vmatprep.mubr.f32.mxu0 0.0
      %4408 = vmatmul.mubr.f32.gmra.mxu0 %v4276
      %v4409 = vpop.f32.mrf.mxu0
      %v4410 = vadd.f32 0.0, %v4409
      %v4411 = vpop.f32.mrf.mxu0
      %4412 = vmatprep.mubr.f32.mxu0 0.0
      %4413 = vmatmul.mubr.f32.gmra.mxu0 %v4279
      %v4414 = vpop.f32.mrf.mxu0
      %v4415 = vadd.f32 0.0, %v4414
      %v4416 = vpop.f32.mrf.mxu0
      %4417 = vmatprep.mubr.f32.mxu0 0.0
      %4418 = vmatmul.mubr.f32.gmra.mxu0 %v4282
      %v4419 = vpop.f32.mrf.mxu0
      %v4420 = vadd.f32 0.0, %v4419
      %v4421 = vpop.f32.mrf.mxu0
      %4422 = vmatprep.mubr.f32.mxu0 0.0
      %4423 = vmatmul.mubr.f32.gmra.mxu0 %v4285
      %v4424 = vpop.f32.mrf.mxu0
      %v4425 = vadd.f32 0.0, %v4424
      %v4426 = vpop.f32.mrf.mxu0
      %4427 = vmatprep.mubr.f32.mxu0 0.0
      %4428 = vmatmul.mubr.f32.gmra.mxu0 %v4288
      %v4429 = vpop.f32.mrf.mxu0
      %v4430 = vadd.f32 0.0, %v4429
      %v4431 = vpop.f32.mrf.mxu0
      %4432 = vmatprep.mubr.f32.mxu0 0.0
      %4433 = vmatmul.mubr.f32.gmra.mxu0 %v4291
      %v4434 = vpop.f32.mrf.mxu0
      %v4435 = vadd.f32 0.0, %v4434
      %v4436 = vpop.f32.mrf.mxu0
      %4437 = vdwg.mxu0
      %v4438 = vadd.f32 %v4211, %v4360
      %v4439 = vadd.f32 %v4212, %v4365
      %v4440 = vadd.f32 %v4213, %v4370
      %v4441 = vadd.f32 %v4214, %v4375
      %v4442 = vadd.f32 %v4215, %v4380
      %v4443 = vadd.f32 %v4216, %v4385
      %v4444 = vadd.f32 %v4217, %v4390
      %v4445 = vadd.f32 %v4218, %v4395
      %v4446 = vadd.f32 %v4219, %v4400
      %v4447 = vadd.f32 %v4220, %v4405
      %v4448 = vadd.f32 %v4221, %v4410
      %v4449 = vadd.f32 %v4222, %v4415
      %v4450 = vadd.f32 %v4223, %v4420
      %v4451 = vadd.f32 %v4224, %v4425
      %v4452 = vadd.f32 %v4225, %v4430
      %v4453 = vadd.f32 %v4226, %v4435
      %s4454 = scalar_lea.vmem [#allocation3], 32
      %v4455 = vld [vmem:[%s4454] sm:$0xff]
      %v4456 = vld [vmem:[%s4454 + $0x10] sm:$0xff]
      %v4457 = vld [vmem:[%s4454 + $0x20] sm:$0xff]
      %v4458 = vld [vmem:[%s4454 + $0x30] sm:$0xff]
      %v4459 = vld [vmem:[%s4454 + $0x40] sm:$0xff]
      %v4460 = vld [vmem:[%s4454 + $0x50] sm:$0xff]
      %v4461 = vld [vmem:[%s4454 + $0x60] sm:$0xff]
      %v4462 = vld [vmem:[%s4454 + $0x70] sm:$0xff]
      %v4463 = vld [vmem:[%s4454 + $0xa0] sm:$0xff]
      %v4464 = vld [vmem:[%s4454 + $0xb0] sm:$0xff]
      %v4465 = vld [vmem:[%s4454 + $0xc0] sm:$0xff]
      %v4466 = vld [vmem:[%s4454 + $0xd0] sm:$0xff]
      %v4467 = vld [vmem:[%s4454 + $0xe0] sm:$0xff]
      %v4468 = vld [vmem:[%s4454 + $0xf0] sm:$0xff]
      %v4469 = vld [vmem:[%s4454 + $0x100] sm:$0xff]
      %v4470 = vld [vmem:[%s4454 + $0x110] sm:$0xff]
      %v4471 = vld [vmem:[%s5 + $0x60] sm:$0xff]
      %v4472 = vld [vmem:[%s5 + $0x68] sm:$0xff]
      %v4474 = vsel %vm2540, %v4455, 0
      %v4477 = vsel %vm2540, %v4456, 0
      %v4480 = vsel %vm2540, %v4457, 0
      %v4483 = vsel %vm2540, %v4458, 0
      %v4486 = vsel %vm2540, %v4459, 0
      %v4489 = vsel %vm2540, %v4460, 0
      %v4492 = vsel %vm2540, %v4461, 0
      %v4495 = vsel %vm2540, %v4462, 0
      %v4498 = vsel %vm2540, %v4463, 0
      %v4501 = vsel %vm2540, %v4464, 0
      %v4504 = vsel %vm2540, %v4465, 0
      %v4507 = vsel %vm2540, %v4466, 0
      %v4510 = vsel %vm2540, %v4467, 0
      %v4513 = vsel %vm2540, %v4468, 0
      %v4516 = vsel %vm2540, %v4469, 0
      %v4519 = vsel %vm2540, %v4470, 0
      %4521 = vmatprep.subr.mxu0 0.0
      %4522 = vmatpush1.msra.mxu0 0.0
      %4523 = vmatprep.subr.mxu0 0.0
      %4524 = vmatpush1.msra.mxu0 0.0
      %4525 = vmatprep.subr.mxu0 0.0
      %4526 = vmatpush1.msra.mxu0 0.0
      %4527 = vmatprep.subr.mxu0 0.0
      %4528 = vmatpush1.msra.mxu0 0.0
      %4529 = vmatprep.subr.mxu0 0.0
      %4530 = vmatpush1.msra.mxu0 0.0
      %4531 = vmatprep.subr.mxu0 0.0
      %4532 = vmatpush1.msra.mxu0 0.0
      %4533 = vmatprep.subr.mxu0 0.0
      %4534 = vmatpush1.msra.mxu0 0.0
      %4535 = vmatprep.subr.mxu0 0.0
      %4536 = vmatpush1.msra.mxu0 0.0
      %4537 = vmatprep.subr.mxu0 0.0
      %4538 = vmatpush1.msra.mxu0 0.0
      %4539 = vmatprep.subr.mxu0 0.0
      %4540 = vmatpush1.msra.mxu0 0.0
      %4541 = vmatprep.subr.mxu0 0.0
      %4542 = vmatpush1.msra.mxu0 0.0
      %4543 = vmatprep.subr.mxu0 0.0
      %4544 = vmatpush1.msra.mxu0 0.0
      %4545 = vmatprep.subr.mxu0 0.0
      %4546 = vmatpush1.msra.mxu0 0.0
      %4547 = vmatprep.subr.mxu0 0.0
      %4548 = vmatpush1.msra.mxu0 0.0
      %4549 = vmatprep.subr.mxu0 0.0
      %4550 = vmatpush1.msra.mxu0 %v4472
      %4551 = vmatprep.subr.mxu0 0.0
      %4552 = vmatpush1.msra.mxu0 %v4471
      %4553 = vmatprep.subr.mxu0 0.0
      %4554 = vmatpush2.msra.mxu0 0.0
      %4555 = vmatprep.subr.mxu0 0.0
      %4556 = vmatpush2.msra.mxu0 0.0
      %4557 = vmatprep.subr.mxu0 0.0
      %4558 = vmatpush2.msra.mxu0 0.0
      %4559 = vmatprep.subr.mxu0 0.0
      %4560 = vmatpush2.msra.mxu0 0.0
      %4561 = vmatprep.subr.mxu0 0.0
      %4562 = vmatpush2.msra.mxu0 0.0
      %4563 = vmatprep.subr.mxu0 0.0
      %4564 = vmatpush2.msra.mxu0 0.0
      %4565 = vmatprep.subr.mxu0 0.0
      %4566 = vmatpush2.msra.mxu0 0.0
      %4567 = vmatprep.subr.mxu0 0.0
      %4568 = vmatpush2.msra.mxu0 0.0
      %4569 = vmatprep.subr.mxu0 0.0
      %4570 = vmatpush2.msra.mxu0 0.0
      %4571 = vmatprep.subr.mxu0 0.0
      %4572 = vmatpush2.msra.mxu0 0.0
      %4573 = vmatprep.subr.mxu0 0.0
      %4574 = vmatpush2.msra.mxu0 0.0
      %4575 = vmatprep.subr.mxu0 0.0
      %4576 = vmatpush2.msra.mxu0 0.0
      %4577 = vmatprep.subr.mxu0 0.0
      %4578 = vmatpush2.msra.mxu0 0.0
      %4579 = vmatprep.subr.mxu0 0.0
      %4580 = vmatpush2.msra.mxu0 0.0
      %4581 = vmatprep.subr.mxu0 0.0
      %4582 = vmatpush2.msra.mxu0 0.0
      %4583 = vmatprep.subr.mxu0 0.0
      %4584 = vmatpush2.msra.mxu0 0.0
      %4585 = vmatprep.mubr.f32.mxu0 0.0
      %4586 = vmatmul.mubr.f32.gmra.mxu0 %v4474
      %v4587 = vpop.f32.mrf.mxu0
      %v4588 = vadd.f32 0.0, %v4587
      %v4589 = vpop.f32.mrf.mxu0
      %4590 = vmatprep.mubr.f32.mxu0 0.0
      %4591 = vmatmul.mubr.f32.gmra.mxu0 %v4477
      %v4592 = vpop.f32.mrf.mxu0
      %v4593 = vadd.f32 0.0, %v4592
      %v4594 = vpop.f32.mrf.mxu0
      %4595 = vmatprep.mubr.f32.mxu0 0.0
      %4596 = vmatmul.mubr.f32.gmra.mxu0 %v4480
      %v4597 = vpop.f32.mrf.mxu0
      %v4598 = vadd.f32 0.0, %v4597
      %v4599 = vpop.f32.mrf.mxu0
      %4600 = vmatprep.mubr.f32.mxu0 0.0
      %4601 = vmatmul.mubr.f32.gmra.mxu0 %v4483
      %v4602 = vpop.f32.mrf.mxu0
      %v4603 = vadd.f32 0.0, %v4602
      %v4604 = vpop.f32.mrf.mxu0
      %4605 = vmatprep.mubr.f32.mxu0 0.0
      %4606 = vmatmul.mubr.f32.gmra.mxu0 %v4486
      %v4607 = vpop.f32.mrf.mxu0
      %v4608 = vadd.f32 0.0, %v4607
      %v4609 = vpop.f32.mrf.mxu0
      %4610 = vmatprep.mubr.f32.mxu0 0.0
      %4611 = vmatmul.mubr.f32.gmra.mxu0 %v4489
      %v4612 = vpop.f32.mrf.mxu0
      %v4613 = vadd.f32 0.0, %v4612
      %v4614 = vpop.f32.mrf.mxu0
      %4615 = vmatprep.mubr.f32.mxu0 0.0
      %4616 = vmatmul.mubr.f32.gmra.mxu0 %v4492
      %v4617 = vpop.f32.mrf.mxu0
      %v4618 = vadd.f32 0.0, %v4617
      %v4619 = vpop.f32.mrf.mxu0
      %4620 = vmatprep.mubr.f32.mxu0 0.0
      %4621 = vmatmul.mubr.f32.gmra.mxu0 %v4495
      %v4622 = vpop.f32.mrf.mxu0
      %v4623 = vadd.f32 0.0, %v4622
      %v4624 = vpop.f32.mrf.mxu0
      %4625 = vmatprep.mubr.f32.mxu0 0.0
      %4626 = vmatmul.mubr.f32.gmra.mxu0 %v4498
      %v4627 = vpop.f32.mrf.mxu0
      %v4628 = vadd.f32 0.0, %v4627
      %v4629 = vpop.f32.mrf.mxu0
      %4630 = vmatprep.mubr.f32.mxu0 0.0
      %4631 = vmatmul.mubr.f32.gmra.mxu0 %v4501
      %v4632 = vpop.f32.mrf.mxu0
      %v4633 = vadd.f32 0.0, %v4632
      %v4634 = vpop.f32.mrf.mxu0
      %4635 = vmatprep.mubr.f32.mxu0 0.0
      %4636 = vmatmul.mubr.f32.gmra.mxu0 %v4504
      %v4637 = vpop.f32.mrf.mxu0
      %v4638 = vadd.f32 0.0, %v4637
      %v4639 = vpop.f32.mrf.mxu0
      %4640 = vmatprep.mubr.f32.mxu0 0.0
      %4641 = vmatmul.mubr.f32.gmra.mxu0 %v4507
      %v4642 = vpop.f32.mrf.mxu0
      %v4643 = vadd.f32 0.0, %v4642
      %v4644 = vpop.f32.mrf.mxu0
      %4645 = vmatprep.mubr.f32.mxu0 0.0
      %4646 = vmatmul.mubr.f32.gmra.mxu0 %v4510
      %v4647 = vpop.f32.mrf.mxu0
      %v4648 = vadd.f32 0.0, %v4647
      %v4649 = vpop.f32.mrf.mxu0
      %4650 = vmatprep.mubr.f32.mxu0 0.0
      %4651 = vmatmul.mubr.f32.gmra.mxu0 %v4513
      %v4652 = vpop.f32.mrf.mxu0
      %v4653 = vadd.f32 0.0, %v4652
      %v4654 = vpop.f32.mrf.mxu0
      %4655 = vmatprep.mubr.f32.mxu0 0.0
      %4656 = vmatmul.mubr.f32.gmra.mxu0 %v4516
      %v4657 = vpop.f32.mrf.mxu0
      %v4658 = vadd.f32 0.0, %v4657
      %v4659 = vpop.f32.mrf.mxu0
      %4660 = vmatprep.mubr.f32.mxu0 0.0
      %4661 = vmatmul.mubr.f32.gmra.mxu0 %v4519
      %v4662 = vpop.f32.mrf.mxu0
      %v4663 = vadd.f32 0.0, %v4662
      %v4664 = vpop.f32.mrf.mxu0
      %4665 = vdwg.mxu0
      %v4666 = vadd.f32 %v4438, %v4588
      %v4667 = vadd.f32 %v4439, %v4593
      %v4668 = vadd.f32 %v4440, %v4598
      %v4669 = vadd.f32 %v4441, %v4603
      %v4670 = vadd.f32 %v4442, %v4608
      %v4671 = vadd.f32 %v4443, %v4613
      %v4672 = vadd.f32 %v4444, %v4618
      %v4673 = vadd.f32 %v4445, %v4623
      %v4674 = vadd.f32 %v4446, %v4628
      %v4675 = vadd.f32 %v4447, %v4633
      %v4676 = vadd.f32 %v4448, %v4638
      %v4677 = vadd.f32 %v4449, %v4643
      %v4678 = vadd.f32 %v4450, %v4648
      %v4679 = vadd.f32 %v4451, %v4653
      %v4680 = vadd.f32 %v4452, %v4658
      %v4681 = vadd.f32 %v4453, %v4663
      %v4682 = vld [vmem:[%s4454 + $0x1] sm:$0xff]
      %v4683 = vld [vmem:[%s4454 + $0x11] sm:$0xff]
      %v4684 = vld [vmem:[%s4454 + $0x21] sm:$0xff]
      %v4685 = vld [vmem:[%s4454 + $0x31] sm:$0xff]
      %v4686 = vld [vmem:[%s4454 + $0x41] sm:$0xff]
      %v4687 = vld [vmem:[%s4454 + $0x51] sm:$0xff]
      %v4688 = vld [vmem:[%s4454 + $0x61] sm:$0xff]
      %v4689 = vld [vmem:[%s4454 + $0x71] sm:$0xff]
      %v4690 = vld [vmem:[%s4454 + $0xa1] sm:$0xff]
      %v4691 = vld [vmem:[%s4454 + $0xb1] sm:$0xff]
      %v4692 = vld [vmem:[%s4454 + $0xc1] sm:$0xff]
      %v4693 = vld [vmem:[%s4454 + $0xd1] sm:$0xff]
      %v4694 = vld [vmem:[%s4454 + $0xe1] sm:$0xff]
      %v4695 = vld [vmem:[%s4454 + $0xf1] sm:$0xff]
      %v4696 = vld [vmem:[%s4454 + $0x101] sm:$0xff]
      %v4697 = vld [vmem:[%s4454 + $0x111] sm:$0xff]
      %v4698 = vld [vmem:[%s5 + $0x70] sm:$0xff]
      %v4699 = vld [vmem:[%s5 + $0x78] sm:$0xff]
      %v4701 = vsel %vm2540, %v4682, 0
      %v4704 = vsel %vm2540, %v4683, 0
      %v4707 = vsel %vm2540, %v4684, 0
      %v4710 = vsel %vm2540, %v4685, 0
      %v4713 = vsel %vm2540, %v4686, 0
      %v4716 = vsel %vm2540, %v4687, 0
      %v4719 = vsel %vm2540, %v4688, 0
      %v4722 = vsel %vm2540, %v4689, 0
      %v4725 = vsel %vm2540, %v4690, 0
      %v4728 = vsel %vm2540, %v4691, 0
      %v4731 = vsel %vm2540, %v4692, 0
      %v4734 = vsel %vm2540, %v4693, 0
      %v4737 = vsel %vm2540, %v4694, 0
      %v4740 = vsel %vm2540, %v4695, 0
      %v4743 = vsel %vm2540, %v4696, 0
      %v4746 = vsel %vm2540, %v4697, 0
      %4748 = vmatprep.subr.mxu0 0.0
      %4749 = vmatpush1.msra.mxu0 0.0
      %4750 = vmatprep.subr.mxu0 0.0
      %4751 = vmatpush1.msra.mxu0 0.0
      %4752 = vmatprep.subr.mxu0 0.0
      %4753 = vmatpush1.msra.mxu0 0.0
      %4754 = vmatprep.subr.mxu0 0.0
      %4755 = vmatpush1.msra.mxu0 0.0
      %4756 = vmatprep.subr.mxu0 0.0
      %4757 = vmatpush1.msra.mxu0 0.0
      %4758 = vmatprep.subr.mxu0 0.0
      %4759 = vmatpush1.msra.mxu0 0.0
      %4760 = vmatprep.subr.mxu0 0.0
      %4761 = vmatpush1.msra.mxu0 0.0
      %4762 = vmatprep.subr.mxu0 0.0
      %4763 = vmatpush1.msra.mxu0 0.0
      %4764 = vmatprep.subr.mxu0 0.0
      %4765 = vmatpush1.msra.mxu0 0.0
      %4766 = vmatprep.subr.mxu0 0.0
      %4767 = vmatpush1.msra.mxu0 0.0
      %4768 = vmatprep.subr.mxu0 0.0
      %4769 = vmatpush1.msra.mxu0 0.0
      %4770 = vmatprep.subr.mxu0 0.0
      %4771 = vmatpush1.msra.mxu0 0.0
      %4772 = vmatprep.subr.mxu0 0.0
      %4773 = vmatpush1.msra.mxu0 0.0
      %4774 = vmatprep.subr.mxu0 0.0
      %4775 = vmatpush1.msra.mxu0 0.0
      %4776 = vmatprep.subr.mxu0 0.0
      %4777 = vmatpush1.msra.mxu0 %v4699
      %4778 = vmatprep.subr.mxu0 0.0
      %4779 = vmatpush1.msra.mxu0 %v4698
      %4780 = vmatprep.subr.mxu0 0.0
      %4781 = vmatpush2.msra.mxu0 0.0
      %4782 = vmatprep.subr.mxu0 0.0
      %4783 = vmatpush2.msra.mxu0 0.0
      %4784 = vmatprep.subr.mxu0 0.0
      %4785 = vmatpush2.msra.mxu0 0.0
      %4786 = vmatprep.subr.mxu0 0.0
      %4787 = vmatpush2.msra.mxu0 0.0
      %4788 = vmatprep.subr.mxu0 0.0
      %4789 = vmatpush2.msra.mxu0 0.0
      %4790 = vmatprep.subr.mxu0 0.0
      %4791 = vmatpush2.msra.mxu0 0.0
      %4792 = vmatprep.subr.mxu0 0.0
      %4793 = vmatpush2.msra.mxu0 0.0
      %4794 = vmatprep.subr.mxu0 0.0
      %4795 = vmatpush2.msra.mxu0 0.0
      %4796 = vmatprep.subr.mxu0 0.0
      %4797 = vmatpush2.msra.mxu0 0.0
      %4798 = vmatprep.subr.mxu0 0.0
      %4799 = vmatpush2.msra.mxu0 0.0
      %4800 = vmatprep.subr.mxu0 0.0
      %4801 = vmatpush2.msra.mxu0 0.0
      %4802 = vmatprep.subr.mxu0 0.0
      %4803 = vmatpush2.msra.mxu0 0.0
      %4804 = vmatprep.subr.mxu0 0.0
      %4805 = vmatpush2.msra.mxu0 0.0
      %4806 = vmatprep.subr.mxu0 0.0
      %4807 = vmatpush2.msra.mxu0 0.0
      %4808 = vmatprep.subr.mxu0 0.0
      %4809 = vmatpush2.msra.mxu0 0.0
      %4810 = vmatprep.subr.mxu0 0.0
      %4811 = vmatpush2.msra.mxu0 0.0
      %4812 = vmatprep.mubr.f32.mxu0 0.0
      %4813 = vmatmul.mubr.f32.gmra.mxu0 %v4701
      %v4814 = vpop.f32.mrf.mxu0
      %v4815 = vadd.f32 0.0, %v4814
      %v4816 = vpop.f32.mrf.mxu0
      %4817 = vmatprep.mubr.f32.mxu0 0.0
      %4818 = vmatmul.mubr.f32.gmra.mxu0 %v4704
      %v4819 = vpop.f32.mrf.mxu0
      %v4820 = vadd.f32 0.0, %v4819
      %v4821 = vpop.f32.mrf.mxu0
      %4822 = vmatprep.mubr.f32.mxu0 0.0
      %4823 = vmatmul.mubr.f32.gmra.mxu0 %v4707
      %v4824 = vpop.f32.mrf.mxu0
      %v4825 = vadd.f32 0.0, %v4824
      %v4826 = vpop.f32.mrf.mxu0
      %4827 = vmatprep.mubr.f32.mxu0 0.0
      %4828 = vmatmul.mubr.f32.gmra.mxu0 %v4710
      %v4829 = vpop.f32.mrf.mxu0
      %v4830 = vadd.f32 0.0, %v4829
      %v4831 = vpop.f32.mrf.mxu0
      %4832 = vmatprep.mubr.f32.mxu0 0.0
      %4833 = vmatmul.mubr.f32.gmra.mxu0 %v4713
      %v4834 = vpop.f32.mrf.mxu0
      %v4835 = vadd.f32 0.0, %v4834
      %v4836 = vpop.f32.mrf.mxu0
      %4837 = vmatprep.mubr.f32.mxu0 0.0
      %4838 = vmatmul.mubr.f32.gmra.mxu0 %v4716
      %v4839 = vpop.f32.mrf.mxu0
      %v4840 = vadd.f32 0.0, %v4839
      %v4841 = vpop.f32.mrf.mxu0
      %4842 = vmatprep.mubr.f32.mxu0 0.0
      %4843 = vmatmul.mubr.f32.gmra.mxu0 %v4719
      %v4844 = vpop.f32.mrf.mxu0
      %v4845 = vadd.f32 0.0, %v4844
      %v4846 = vpop.f32.mrf.mxu0
      %4847 = vmatprep.mubr.f32.mxu0 0.0
      %4848 = vmatmul.mubr.f32.gmra.mxu0 %v4722
      %v4849 = vpop.f32.mrf.mxu0
      %v4850 = vadd.f32 0.0, %v4849
      %v4851 = vpop.f32.mrf.mxu0
      %4852 = vmatprep.mubr.f32.mxu0 0.0
      %4853 = vmatmul.mubr.f32.gmra.mxu0 %v4725
      %v4854 = vpop.f32.mrf.mxu0
      %v4855 = vadd.f32 0.0, %v4854
      %v4856 = vpop.f32.mrf.mxu0
      %4857 = vmatprep.mubr.f32.mxu0 0.0
      %4858 = vmatmul.mubr.f32.gmra.mxu0 %v4728
      %v4859 = vpop.f32.mrf.mxu0
      %v4860 = vadd.f32 0.0, %v4859
      %v4861 = vpop.f32.mrf.mxu0
      %4862 = vmatprep.mubr.f32.mxu0 0.0
      %4863 = vmatmul.mubr.f32.gmra.mxu0 %v4731
      %v4864 = vpop.f32.mrf.mxu0
      %v4865 = vadd.f32 0.0, %v4864
      %v4866 = vpop.f32.mrf.mxu0
      %4867 = vmatprep.mubr.f32.mxu0 0.0
      %4868 = vmatmul.mubr.f32.gmra.mxu0 %v4734
      %v4869 = vpop.f32.mrf.mxu0
      %v4870 = vadd.f32 0.0, %v4869
      %v4871 = vpop.f32.mrf.mxu0
      %4872 = vmatprep.mubr.f32.mxu0 0.0
      %4873 = vmatmul.mubr.f32.gmra.mxu0 %v4737
      %v4874 = vpop.f32.mrf.mxu0
      %v4875 = vadd.f32 0.0, %v4874
      %v4876 = vpop.f32.mrf.mxu0
      %4877 = vmatprep.mubr.f32.mxu0 0.0
      %4878 = vmatmul.mubr.f32.gmra.mxu0 %v4740
      %v4879 = vpop.f32.mrf.mxu0
      %v4880 = vadd.f32 0.0, %v4879
      %v4881 = vpop.f32.mrf.mxu0
      %4882 = vmatprep.mubr.f32.mxu0 0.0
      %4883 = vmatmul.mubr.f32.gmra.mxu0 %v4743
      %v4884 = vpop.f32.mrf.mxu0
      %v4885 = vadd.f32 0.0, %v4884
      %v4886 = vpop.f32.mrf.mxu0
      %4887 = vmatprep.mubr.f32.mxu0 0.0
      %4888 = vmatmul.mubr.f32.gmra.mxu0 %v4746
      %v4889 = vpop.f32.mrf.mxu0
      %v4890 = vadd.f32 0.0, %v4889
      %v4891 = vpop.f32.mrf.mxu0
      %4892 = vdwg.mxu0
      %v4893 = vadd.f32 %v4666, %v4815
      %v4894 = vadd.f32 %v4667, %v4820
      %v4895 = vadd.f32 %v4668, %v4825
      %v4896 = vadd.f32 %v4669, %v4830
      %v4897 = vadd.f32 %v4670, %v4835
      %v4898 = vadd.f32 %v4671, %v4840
      %v4899 = vadd.f32 %v4672, %v4845
      %v4900 = vadd.f32 %v4673, %v4850
      %v4901 = vadd.f32 %v4674, %v4855
      %v4902 = vadd.f32 %v4675, %v4860
      %v4903 = vadd.f32 %v4676, %v4865
      %v4904 = vadd.f32 %v4677, %v4870
      %v4905 = vadd.f32 %v4678, %v4875
      %v4906 = vadd.f32 %v4679, %v4880
      %v4907 = vadd.f32 %v4680, %v4885
      %v4908 = vadd.f32 %v4681, %v4890
      %v4909 = vld [vmem:[%s4454 + $0x2] sm:$0xff]
      %v4910 = vld [vmem:[%s4454 + $0x12] sm:$0xff]
      %v4911 = vld [vmem:[%s4454 + $0x22] sm:$0xff]
      %v4912 = vld [vmem:[%s4454 + $0x32] sm:$0xff]
      %v4913 = vld [vmem:[%s4454 + $0x42] sm:$0xff]
      %v4914 = vld [vmem:[%s4454 + $0x52] sm:$0xff]
      %v4915 = vld [vmem:[%s4454 + $0x62] sm:$0xff]
      %v4916 = vld [vmem:[%s4454 + $0x72] sm:$0xff]
      %v4917 = vld [vmem:[%s4454 + $0xa2] sm:$0xff]
      %v4918 = vld [vmem:[%s4454 + $0xb2] sm:$0xff]
      %v4919 = vld [vmem:[%s4454 + $0xc2] sm:$0xff]
      %v4920 = vld [vmem:[%s4454 + $0xd2] sm:$0xff]
      %v4921 = vld [vmem:[%s4454 + $0xe2] sm:$0xff]
      %v4922 = vld [vmem:[%s4454 + $0xf2] sm:$0xff]
      %v4923 = vld [vmem:[%s4454 + $0x102] sm:$0xff]
      %v4924 = vld [vmem:[%s4454 + $0x112] sm:$0xff]
      %v4925 = vld [vmem:[%s5 + $0x80] sm:$0xff]
      %v4926 = vld [vmem:[%s5 + $0x88] sm:$0xff]
      %v4928 = vsel %vm2540, %v4909, 0
      %v4931 = vsel %vm2540, %v4910, 0
      %v4934 = vsel %vm2540, %v4911, 0
      %v4937 = vsel %vm2540, %v4912, 0
      %v4940 = vsel %vm2540, %v4913, 0
      %v4943 = vsel %vm2540, %v4914, 0
      %v4946 = vsel %vm2540, %v4915, 0
      %v4949 = vsel %vm2540, %v4916, 0
      %v4952 = vsel %vm2540, %v4917, 0
      %v4955 = vsel %vm2540, %v4918, 0
      %v4958 = vsel %vm2540, %v4919, 0
      %v4961 = vsel %vm2540, %v4920, 0
      %v4964 = vsel %vm2540, %v4921, 0
      %v4967 = vsel %vm2540, %v4922, 0
      %v4970 = vsel %vm2540, %v4923, 0
      %v4973 = vsel %vm2540, %v4924, 0
      %4975 = vmatprep.subr.mxu0 0.0
      %4976 = vmatpush1.msra.mxu0 0.0
      %4977 = vmatprep.subr.mxu0 0.0
      %4978 = vmatpush1.msra.mxu0 0.0
      %4979 = vmatprep.subr.mxu0 0.0
      %4980 = vmatpush1.msra.mxu0 0.0
      %4981 = vmatprep.subr.mxu0 0.0
      %4982 = vmatpush1.msra.mxu0 0.0
      %4983 = vmatprep.subr.mxu0 0.0
      %4984 = vmatpush1.msra.mxu0 0.0
      %4985 = vmatprep.subr.mxu0 0.0
      %4986 = vmatpush1.msra.mxu0 0.0
      %4987 = vmatprep.subr.mxu0 0.0
      %4988 = vmatpush1.msra.mxu0 0.0
      %4989 = vmatprep.subr.mxu0 0.0
      %4990 = vmatpush1.msra.mxu0 0.0
      %4991 = vmatprep.subr.mxu0 0.0
      %4992 = vmatpush1.msra.mxu0 0.0
      %4993 = vmatprep.subr.mxu0 0.0
      %4994 = vmatpush1.msra.mxu0 0.0
      %4995 = vmatprep.subr.mxu0 0.0
      %4996 = vmatpush1.msra.mxu0 0.0
      %4997 = vmatprep.subr.mxu0 0.0
      %4998 = vmatpush1.msra.mxu0 0.0
      %4999 = vmatprep.subr.mxu0 0.0
      %5000 = vmatpush1.msra.mxu0 0.0
      %5001 = vmatprep.subr.mxu0 0.0
      %5002 = vmatpush1.msra.mxu0 0.0
      %5003 = vmatprep.subr.mxu0 0.0
      %5004 = vmatpush1.msra.mxu0 %v4926
      %5005 = vmatprep.subr.mxu0 0.0
      %5006 = vmatpush1.msra.mxu0 %v4925
      %5007 = vmatprep.subr.mxu0 0.0
      %5008 = vmatpush2.msra.mxu0 0.0
      %5009 = vmatprep.subr.mxu0 0.0
      %5010 = vmatpush2.msra.mxu0 0.0
      %5011 = vmatprep.subr.mxu0 0.0
      %5012 = vmatpush2.msra.mxu0 0.0
      %5013 = vmatprep.subr.mxu0 0.0
      %5014 = vmatpush2.msra.mxu0 0.0
      %5015 = vmatprep.subr.mxu0 0.0
      %5016 = vmatpush2.msra.mxu0 0.0
      %5017 = vmatprep.subr.mxu0 0.0
      %5018 = vmatpush2.msra.mxu0 0.0
      %5019 = vmatprep.subr.mxu0 0.0
      %5020 = vmatpush2.msra.mxu0 0.0
      %5021 = vmatprep.subr.mxu0 0.0
      %5022 = vmatpush2.msra.mxu0 0.0
      %5023 = vmatprep.subr.mxu0 0.0
      %5024 = vmatpush2.msra.mxu0 0.0
      %5025 = vmatprep.subr.mxu0 0.0
      %5026 = vmatpush2.msra.mxu0 0.0
      %5027 = vmatprep.subr.mxu0 0.0
      %5028 = vmatpush2.msra.mxu0 0.0
      %5029 = vmatprep.subr.mxu0 0.0
      %5030 = vmatpush2.msra.mxu0 0.0
      %5031 = vmatprep.subr.mxu0 0.0
      %5032 = vmatpush2.msra.mxu0 0.0
      %5033 = vmatprep.subr.mxu0 0.0
      %5034 = vmatpush2.msra.mxu0 0.0
      %5035 = vmatprep.subr.mxu0 0.0
      %5036 = vmatpush2.msra.mxu0 0.0
      %5037 = vmatprep.subr.mxu0 0.0
      %5038 = vmatpush2.msra.mxu0 0.0
      %5039 = vmatprep.mubr.f32.mxu0 0.0
      %5040 = vmatmul.mubr.f32.gmra.mxu0 %v4928
      %v5041 = vpop.f32.mrf.mxu0
      %v5042 = vadd.f32 0.0, %v5041
      %v5043 = vpop.f32.mrf.mxu0
      %5044 = vmatprep.mubr.f32.mxu0 0.0
      %5045 = vmatmul.mubr.f32.gmra.mxu0 %v4931
      %v5046 = vpop.f32.mrf.mxu0
      %v5047 = vadd.f32 0.0, %v5046
      %v5048 = vpop.f32.mrf.mxu0
      %5049 = vmatprep.mubr.f32.mxu0 0.0
      %5050 = vmatmul.mubr.f32.gmra.mxu0 %v4934
      %v5051 = vpop.f32.mrf.mxu0
      %v5052 = vadd.f32 0.0, %v5051
      %v5053 = vpop.f32.mrf.mxu0
      %5054 = vmatprep.mubr.f32.mxu0 0.0
      %5055 = vmatmul.mubr.f32.gmra.mxu0 %v4937
      %v5056 = vpop.f32.mrf.mxu0
      %v5057 = vadd.f32 0.0, %v5056
      %v5058 = vpop.f32.mrf.mxu0
      %5059 = vmatprep.mubr.f32.mxu0 0.0
      %5060 = vmatmul.mubr.f32.gmra.mxu0 %v4940
      %v5061 = vpop.f32.mrf.mxu0
      %v5062 = vadd.f32 0.0, %v5061
      %v5063 = vpop.f32.mrf.mxu0
      %5064 = vmatprep.mubr.f32.mxu0 0.0
      %5065 = vmatmul.mubr.f32.gmra.mxu0 %v4943
      %v5066 = vpop.f32.mrf.mxu0
      %v5067 = vadd.f32 0.0, %v5066
      %v5068 = vpop.f32.mrf.mxu0
      %5069 = vmatprep.mubr.f32.mxu0 0.0
      %5070 = vmatmul.mubr.f32.gmra.mxu0 %v4946
      %v5071 = vpop.f32.mrf.mxu0
      %v5072 = vadd.f32 0.0, %v5071
      %v5073 = vpop.f32.mrf.mxu0
      %5074 = vmatprep.mubr.f32.mxu0 0.0
      %5075 = vmatmul.mubr.f32.gmra.mxu0 %v4949
      %v5076 = vpop.f32.mrf.mxu0
      %v5077 = vadd.f32 0.0, %v5076
      %v5078 = vpop.f32.mrf.mxu0
      %5079 = vmatprep.mubr.f32.mxu0 0.0
      %5080 = vmatmul.mubr.f32.gmra.mxu0 %v4952
      %v5081 = vpop.f32.mrf.mxu0
      %v5082 = vadd.f32 0.0, %v5081
      %v5083 = vpop.f32.mrf.mxu0
      %5084 = vmatprep.mubr.f32.mxu0 0.0
      %5085 = vmatmul.mubr.f32.gmra.mxu0 %v4955
      %v5086 = vpop.f32.mrf.mxu0
      %v5087 = vadd.f32 0.0, %v5086
      %v5088 = vpop.f32.mrf.mxu0
      %5089 = vmatprep.mubr.f32.mxu0 0.0
      %5090 = vmatmul.mubr.f32.gmra.mxu0 %v4958
      %v5091 = vpop.f32.mrf.mxu0
      %v5092 = vadd.f32 0.0, %v5091
      %v5093 = vpop.f32.mrf.mxu0
      %5094 = vmatprep.mubr.f32.mxu0 0.0
      %5095 = vmatmul.mubr.f32.gmra.mxu0 %v4961
      %v5096 = vpop.f32.mrf.mxu0
      %v5097 = vadd.f32 0.0, %v5096
      %v5098 = vpop.f32.mrf.mxu0
      %5099 = vmatprep.mubr.f32.mxu0 0.0
      %5100 = vmatmul.mubr.f32.gmra.mxu0 %v4964
      %v5101 = vpop.f32.mrf.mxu0
      %v5102 = vadd.f32 0.0, %v5101
      %v5103 = vpop.f32.mrf.mxu0
      %5104 = vmatprep.mubr.f32.mxu0 0.0
      %5105 = vmatmul.mubr.f32.gmra.mxu0 %v4967
      %v5106 = vpop.f32.mrf.mxu0
      %v5107 = vadd.f32 0.0, %v5106
      %v5108 = vpop.f32.mrf.mxu0
      %5109 = vmatprep.mubr.f32.mxu0 0.0
      %5110 = vmatmul.mubr.f32.gmra.mxu0 %v4970
      %v5111 = vpop.f32.mrf.mxu0
      %v5112 = vadd.f32 0.0, %v5111
      %v5113 = vpop.f32.mrf.mxu0
      %5114 = vmatprep.mubr.f32.mxu0 0.0
      %5115 = vmatmul.mubr.f32.gmra.mxu0 %v4973
      %v5116 = vpop.f32.mrf.mxu0
      %v5117 = vadd.f32 0.0, %v5116
      %v5118 = vpop.f32.mrf.mxu0
      %5119 = vdwg.mxu0
      %v5120 = vadd.f32 %v4893, %v5042
      %v5121 = vadd.f32 %v4894, %v5047
      %v5122 = vadd.f32 %v4895, %v5052
      %v5123 = vadd.f32 %v4896, %v5057
      %v5124 = vadd.f32 %v4897, %v5062
      %v5125 = vadd.f32 %v4898, %v5067
      %v5126 = vadd.f32 %v4899, %v5072
      %v5127 = vadd.f32 %v4900, %v5077
      %v5128 = vadd.f32 %v4901, %v5082
      %v5129 = vadd.f32 %v4902, %v5087
      %v5130 = vadd.f32 %v4903, %v5092
      %v5131 = vadd.f32 %v4904, %v5097
      %v5132 = vadd.f32 %v4905, %v5102
      %v5133 = vadd.f32 %v4906, %v5107
      %v5134 = vadd.f32 %v4907, %v5112
      %v5135 = vadd.f32 %v4908, %v5117
      %v5136 = vld [vmem:[%s6] sm:$0x1]
      %v5137 = vld [vmem:[%s7] sm:$0x1]
      %v5138 = vld [vmem:[%s8] sm:$0xff]
      %v5139 = vld [vmem:[%s8 + $0x8] sm:$0xff]
      %v5140 = vsel %vm2540, %v5120, 0.0
      %v5141 = vsel %vm2540, %v5121, 0.0
      %v5142 = vadd.f32 %v5140, %v5141
      %v5143 = vsel %vm2540, %v5122, 0.0
      %v5144 = vadd.f32 %v5142, %v5143
      %v5145 = vsel %vm2540, %v5123, 0.0
      %v5146 = vadd.f32 %v5144, %v5145
      %v5147 = vsel %vm2540, %v5124, 0.0
      %v5148 = vadd.f32 %v5146, %v5147
      %v5149 = vsel %vm2540, %v5125, 0.0
      %v5150 = vadd.f32 %v5148, %v5149
      %v5151 = vsel %vm2540, %v5126, 0.0
      %v5152 = vadd.f32 %v5150, %v5151
      %v5153 = vsel %vm2540, %v5127, 0.0
      %v5154 = vadd.f32 %v5152, %v5153
      %v5155 = vrot.slane %v5154, 4
      %v5156 = vadd.f32 %v5154, %v5155
      %v5157 = vrot.slane %v5156, 2
      %v5158 = vadd.f32 %v5156, %v5157
      %v5159 = vrot.slane %v5158, 1
      %v5160 = vadd.f32 %v5158, %v5159
      %v5161 = vmul.f32 %v5120, %v5120
      %v5162 = vmul.f32 %v5121, %v5121
      %v5163 = vmul.f32 %v5122, %v5122
      %v5164 = vmul.f32 %v5123, %v5123
      %v5165 = vmul.f32 %v5124, %v5124
      %v5166 = vmul.f32 %v5125, %v5125
      %v5167 = vmul.f32 %v5126, %v5126
      %v5168 = vmul.f32 %v5127, %v5127
      %v5169 = vsel %vm2540, %v5161, 0.0
      %v5170 = vsel %vm2540, %v5162, 0.0
      %v5171 = vadd.f32 %v5169, %v5170
      %v5172 = vsel %vm2540, %v5163, 0.0
      %v5173 = vadd.f32 %v5171, %v5172
      %v5174 = vsel %vm2540, %v5164, 0.0
      %v5175 = vadd.f32 %v5173, %v5174
      %v5176 = vsel %vm2540, %v5165, 0.0
      %v5177 = vadd.f32 %v5175, %v5176
      %v5178 = vsel %vm2540, %v5166, 0.0
      %v5179 = vadd.f32 %v5177, %v5178
      %v5180 = vsel %vm2540, %v5167, 0.0
      %v5181 = vadd.f32 %v5179, %v5180
      %v5182 = vsel %vm2540, %v5168, 0.0
      %v5183 = vadd.f32 %v5181, %v5182
      %v5184 = vrot.slane %v5183, 4
      %v5185 = vadd.f32 %v5183, %v5184
      %v5186 = vrot.slane %v5185, 2
      %v5187 = vadd.f32 %v5185, %v5186
      %v5188 = vrot.slane %v5187, 1
      %v5189 = vadd.f32 %v5187, %v5188
      %v5191 = vsel %vm2540, %v5160, 0
      %5193 = vmatprep.subr.mxu0 0.0
      %5194 = vmatpush1.msra.mxu0 0.0
      %5195 = vmatprep.subr.mxu0 0.0
      %5196 = vmatpush1.msra.mxu0 0.0
      %5197 = vmatprep.subr.mxu0 0.0
      %5198 = vmatpush1.msra.mxu0 0.0
      %5199 = vmatprep.subr.mxu0 0.0
      %5200 = vmatpush1.msra.mxu0 0.0
      %5201 = vmatprep.subr.mxu0 0.0
      %5202 = vmatpush1.msra.mxu0 0.0
      %5203 = vmatprep.subr.mxu0 0.0
      %5204 = vmatpush1.msra.mxu0 0.0
      %5205 = vmatprep.subr.mxu0 0.0
      %5206 = vmatpush1.msra.mxu0 0.0
      %5207 = vmatprep.subr.mxu0 0.0
      %5208 = vmatpush1.msra.mxu0 0.0
      %5209 = vmatprep.subr.mxu0 0.0
      %5210 = vmatpush1.msra.mxu0 0.0
      %5211 = vmatprep.subr.mxu0 0.0
      %5212 = vmatpush1.msra.mxu0 0.0
      %5213 = vmatprep.subr.mxu0 0.0
      %5214 = vmatpush1.msra.mxu0 0.0
      %5215 = vmatprep.subr.mxu0 0.0
      %5216 = vmatpush1.msra.mxu0 0.0
      %5217 = vmatprep.subr.mxu0 0.0
      %5218 = vmatpush1.msra.mxu0 0.0
      %5219 = vmatprep.subr.mxu0 0.0
      %5220 = vmatpush1.msra.mxu0 0.0
      %5221 = vmatprep.subr.mxu0 0.0
      %5222 = vmatpush1.msra.mxu0 %v5139
      %5223 = vmatprep.subr.mxu0 0.0
      %5224 = vmatpush1.msra.mxu0 %v5138
      %5225 = vmatprep.subr.mxu0 0.0
      %5226 = vmatpush2.msra.mxu0 0.0
      %5227 = vmatprep.subr.mxu0 0.0
      %5228 = vmatpush2.msra.mxu0 0.0
      %5229 = vmatprep.subr.mxu0 0.0
      %5230 = vmatpush2.msra.mxu0 0.0
      %5231 = vmatprep.subr.mxu0 0.0
      %5232 = vmatpush2.msra.mxu0 0.0
      %5233 = vmatprep.subr.mxu0 0.0
      %5234 = vmatpush2.msra.mxu0 0.0
      %5235 = vmatprep.subr.mxu0 0.0
      %5236 = vmatpush2.msra.mxu0 0.0
      %5237 = vmatprep.subr.mxu0 0.0
      %5238 = vmatpush2.msra.mxu0 0.0
      %5239 = vmatprep.subr.mxu0 0.0
      %5240 = vmatpush2.msra.mxu0 0.0
      %5241 = vmatprep.subr.mxu0 0.0
      %5242 = vmatpush2.msra.mxu0 0.0
      %5243 = vmatprep.subr.mxu0 0.0
      %5244 = vmatpush2.msra.mxu0 0.0
      %5245 = vmatprep.subr.mxu0 0.0
      %5246 = vmatpush2.msra.mxu0 0.0
      %5247 = vmatprep.subr.mxu0 0.0
      %5248 = vmatpush2.msra.mxu0 0.0
      %5249 = vmatprep.subr.mxu0 0.0
      %5250 = vmatpush2.msra.mxu0 0.0
      %5251 = vmatprep.subr.mxu0 0.0
      %5252 = vmatpush2.msra.mxu0 0.0
      %5253 = vmatprep.subr.mxu0 0.0
      %5254 = vmatpush2.msra.mxu0 0.0
      %5255 = vmatprep.subr.mxu0 0.0
      %5256 = vmatpush2.msra.mxu0 0.0
      %5257 = vmatprep.mubr.f32.mxu0 0.0
      %5258 = vmatmul.mubr.f32.gmra.mxu0 %v5191
      %v5259 = vpop.f32.mrf.mxu0
      %v5260 = vadd.f32 0.0, %v5259
      %v5261 = vpop.f32.mrf.mxu0
      %5262 = vdwg.mxu0
      %v5264 = vsel %vm2540, %v5189, 0
      %5266 = vmatprep.subr.mxu0 0.0
      %5267 = vmatpush1.msra.mxu0 0.0
      %5268 = vmatprep.subr.mxu0 0.0
      %5269 = vmatpush1.msra.mxu0 0.0
      %5270 = vmatprep.subr.mxu0 0.0
      %5271 = vmatpush1.msra.mxu0 0.0
      %5272 = vmatprep.subr.mxu0 0.0
      %5273 = vmatpush1.msra.mxu0 0.0
      %5274 = vmatprep.subr.mxu0 0.0
      %5275 = vmatpush1.msra.mxu0 0.0
      %5276 = vmatprep.subr.mxu0 0.0
      %5277 = vmatpush1.msra.mxu0 0.0
      %5278 = vmatprep.subr.mxu0 0.0
      %5279 = vmatpush1.msra.mxu0 0.0
      %5280 = vmatprep.subr.mxu0 0.0
      %5281 = vmatpush1.msra.mxu0 0.0
      %5282 = vmatprep.subr.mxu0 0.0
      %5283 = vmatpush1.msra.mxu0 0.0
      %5284 = vmatprep.subr.mxu0 0.0
      %5285 = vmatpush1.msra.mxu0 0.0
      %5286 = vmatprep.subr.mxu0 0.0
      %5287 = vmatpush1.msra.mxu0 0.0
      %5288 = vmatprep.subr.mxu0 0.0
      %5289 = vmatpush1.msra.mxu0 0.0
      %5290 = vmatprep.subr.mxu0 0.0
      %5291 = vmatpush1.msra.mxu0 0.0
      %5292 = vmatprep.subr.mxu0 0.0
      %5293 = vmatpush1.msra.mxu0 0.0
      %5294 = vmatprep.subr.mxu0 0.0
      %5295 = vmatpush1.msra.mxu0 %v5139
      %5296 = vmatprep.subr.mxu0 0.0
      %5297 = vmatpush1.msra.mxu0 %v5138
      %5298 = vmatprep.subr.mxu0 0.0
      %5299 = vmatpush2.msra.mxu0 0.0
      %5300 = vmatprep.subr.mxu0 0.0
      %5301 = vmatpush2.msra.mxu0 0.0
      %5302 = vmatprep.subr.mxu0 0.0
      %5303 = vmatpush2.msra.mxu0 0.0
      %5304 = vmatprep.subr.mxu0 0.0
      %5305 = vmatpush2.msra.mxu0 0.0
      %5306 = vmatprep.subr.mxu0 0.0
      %5307 = vmatpush2.msra.mxu0 0.0
      %5308 = vmatprep.subr.mxu0 0.0
      %5309 = vmatpush2.msra.mxu0 0.0
      %5310 = vmatprep.subr.mxu0 0.0
      %5311 = vmatpush2.msra.mxu0 0.0
      %5312 = vmatprep.subr.mxu0 0.0
      %5313 = vmatpush2.msra.mxu0 0.0
      %5314 = vmatprep.subr.mxu0 0.0
      %5315 = vmatpush2.msra.mxu0 0.0
      %5316 = vmatprep.subr.mxu0 0.0
      %5317 = vmatpush2.msra.mxu0 0.0
      %5318 = vmatprep.subr.mxu0 0.0
      %5319 = vmatpush2.msra.mxu0 0.0
      %5320 = vmatprep.subr.mxu0 0.0
      %5321 = vmatpush2.msra.mxu0 0.0
      %5322 = vmatprep.subr.mxu0 0.0
      %5323 = vmatpush2.msra.mxu0 0.0
      %5324 = vmatprep.subr.mxu0 0.0
      %5325 = vmatpush2.msra.mxu0 0.0
      %5326 = vmatprep.subr.mxu0 0.0
      %5327 = vmatpush2.msra.mxu0 0.0
      %5328 = vmatprep.subr.mxu0 0.0
      %5329 = vmatpush2.msra.mxu0 0.0
      %5330 = vmatprep.mubr.f32.mxu0 0.0
      %5331 = vmatmul.mubr.f32.gmra.mxu0 %v5264
      %v5332 = vpop.f32.mrf.mxu0
      %v5333 = vadd.f32 0.0, %v5332
      %v5334 = vpop.f32.mrf.mxu0
      %5335 = vdwg.mxu0
      %v5336 = vmul.f32 %v5260, 0.0078125
      %v5337 = vmul.f32 %v5333, 0.0078125
      %v5338 = vmul.f32 %v5336, %v5336
      %v5339 = vsub.f32 %v5337, %v5338
      %v5340 = vadd.f32 %v5339, 1e-05
      %v5341 = vrsqrt.pop %v5340
      %v5342 = vmul.f32 %v5341, %v5136
      %v5343 = vmul.f32 %v5336, %v5342
      %v5344 = vsub.f32 %v5137, %v5343
      %v5345 = vlaneseq
      %v5346 = vshrl.u32 %v5345, 7
      %v5347 = vsub.s32 0, %v5346
      %v5348 = vrot.slane %v5342, %v5347
      %v5349 = vmul.f32 %v5120, %v5348
      %v5350 = vmul.f32 %v5121, %v5348
      %v5351 = vmul.f32 %v5122, %v5348
      %v5352 = vmul.f32 %v5123, %v5348
      %v5353 = vmul.f32 %v5124, %v5348
      %v5354 = vmul.f32 %v5125, %v5348
      %v5355 = vmul.f32 %v5126, %v5348
      %v5356 = vmul.f32 %v5127, %v5348
      %v5358 = vlaneseq
      %v5359 = vshrl.u32 %v5358, 7
      %v5360 = vsub.s32 0, %v5359
      %v5361 = vrot.slane %v5344, %v5360
      %v5363 = vadd.f32 %v5349, %v5361
      %v5364 = vadd.f32 %v5350, %v5361
      %v5365 = vadd.f32 %v5351, %v5361
      %v5366 = vadd.f32 %v5352, %v5361
      %v5367 = vadd.f32 %v5353, %v5361
      %v5368 = vadd.f32 %v5354, %v5361
      %v5369 = vadd.f32 %v5355, %v5361
      %v5370 = vadd.f32 %v5356, %v5361
      %vm5371 = vcmp.ge.f32.partialorder %v5363, 0.0
      %vm5372 = vcmp.ge.f32.partialorder %v5364, 0.0
      %vm5373 = vcmp.ge.f32.partialorder %v5365, 0.0
      %vm5374 = vcmp.ge.f32.partialorder %v5366, 0.0
      %vm5375 = vcmp.ge.f32.partialorder %v5367, 0.0
      %vm5376 = vcmp.ge.f32.partialorder %v5368, 0.0
      %vm5377 = vcmp.ge.f32.partialorder %v5369, 0.0
      %vm5378 = vcmp.ge.f32.partialorder %v5370, 0.0
      %v5379 = vmul.f32 %v5363, 0.01
      %v5380 = vmul.f32 %v5364, 0.01
      %v5381 = vmul.f32 %v5365, 0.01
      %v5382 = vmul.f32 %v5366, 0.01
      %v5383 = vmul.f32 %v5367, 0.01
      %v5384 = vmul.f32 %v5368, 0.01
      %v5385 = vmul.f32 %v5369, 0.01
      %v5386 = vmul.f32 %v5370, 0.01
      %v5387 = vsel %vm5371, %v5363, %v5379
      %v5388 = vsel %vm5372, %v5364, %v5380
      %v5389 = vsel %vm5373, %v5365, %v5381
      %v5390 = vsel %vm5374, %v5366, %v5382
      %v5391 = vsel %vm5375, %v5367, %v5383
      %v5392 = vsel %vm5376, %v5368, %v5384
      %v5393 = vsel %vm5377, %v5369, %v5385
      %v5394 = vsel %vm5378, %v5370, %v5386
      %v5403 = vrot.slane %v5388, 7
      %vm5404 = vcmask 1041409
      %v5405 = vsel %vm5404, %v5403, %v5387
      %v5406 = vrot.slane %v5389, 6
      %vm5407 = vcmask 1042434
      %v5408 = vsel %vm5407, %v5406, %v5405
      %v5409 = vrot.slane %v5390, 5
      %vm5410 = vcmask 1043459
      %v5411 = vsel %vm5410, %v5409, %v5408
      %v5412 = vrot.slane %v5391, 4
      %vm5413 = vcmask 1044484
      %v5414 = vsel %vm5413, %v5412, %v5411
      %v5415 = vrot.slane %v5392, 3
      %vm5416 = vcmask 1045509
      %v5417 = vsel %vm5416, %v5415, %v5414
      %v5418 = vrot.slane %v5393, 2
      %vm5419 = vcmask 1046534
      %v5420 = vsel %vm5419, %v5418, %v5417
      %v5421 = vrot.slane %v5394, 1
      %vm5422 = vcmask 1047559
      %v5423 = vsel %vm5422, %v5421, %v5420
      %v5425 = vrot.slane %v5387, 1
      %v5426 = vsel %vm5404, %v5388, %v5425
      %v5427 = vrot.slane %v5389, 7
      %v5428 = vsel %vm5407, %v5427, %v5426
      %v5429 = vrot.slane %v5390, 6
      %v5430 = vsel %vm5410, %v5429, %v5428
      %v5431 = vrot.slane %v5391, 5
      %v5432 = vsel %vm5413, %v5431, %v5430
      %v5433 = vrot.slane %v5392, 4
      %v5434 = vsel %vm5416, %v5433, %v5432
      %v5435 = vrot.slane %v5393, 3
      %v5436 = vsel %vm5419, %v5435, %v5434
      %v5437 = vrot.slane %v5394, 2
      %v5438 = vsel %vm5422, %v5437, %v5436
      %5439 = vrot.lane.b32.xlu0 %v5438, 16
      %v5440 = vpop.permute.xlu0 %5439
      %v5442 = vrot.slane %v5387, 2
      %v5443 = vrot.slane %v5388, 1
      %v5444 = vsel %vm5404, %v5443, %v5442
      %v5445 = vsel %vm5407, %v5389, %v5444
      %v5446 = vrot.slane %v5390, 7
      %v5447 = vsel %vm5410, %v5446, %v5445
      %v5448 = vrot.slane %v5391, 6
      %v5449 = vsel %vm5413, %v5448, %v5447
      %v5450 = vrot.slane %v5392, 5
      %v5451 = vsel %vm5416, %v5450, %v5449
      %v5452 = vrot.slane %v5393, 4
      %v5453 = vsel %vm5419, %v5452, %v5451
      %v5454 = vrot.slane %v5394, 3
      %v5455 = vsel %vm5422, %v5454, %v5453
      %5456 = vrot.lane.b32.xlu0 %v5455, 32
      %v5457 = vpop.permute.xlu0 %5456
      %v5459 = vrot.slane %v5387, 3
      %v5460 = vrot.slane %v5388, 2
      %v5461 = vsel %vm5404, %v5460, %v5459
      %v5462 = vrot.slane %v5389, 1
      %v5463 = vsel %vm5407, %v5462, %v5461
      %v5464 = vsel %vm5410, %v5390, %v5463
      %v5465 = vrot.slane %v5391, 7
      %v5466 = vsel %vm5413, %v5465, %v5464
      %v5467 = vrot.slane %v5392, 6
      %v5468 = vsel %vm5416, %v5467, %v5466
      %v5469 = vrot.slane %v5393, 5
      %v5470 = vsel %vm5419, %v5469, %v5468
      %v5471 = vrot.slane %v5394, 4
      %v5472 = vsel %vm5422, %v5471, %v5470
      %5473 = vrot.lane.b32.xlu0 %v5472, 48
      %v5474 = vpop.permute.xlu0 %5473
      %v5476 = vrot.slane %v5387, 4
      %v5477 = vrot.slane %v5388, 3
      %v5478 = vsel %vm5404, %v5477, %v5476
      %v5479 = vrot.slane %v5389, 2
      %v5480 = vsel %vm5407, %v5479, %v5478
      %v5481 = vrot.slane %v5390, 1
      %v5482 = vsel %vm5410, %v5481, %v5480
      %v5483 = vsel %vm5413, %v5391, %v5482
      %v5484 = vrot.slane %v5392, 7
      %v5485 = vsel %vm5416, %v5484, %v5483
      %v5486 = vrot.slane %v5393, 6
      %v5487 = vsel %vm5419, %v5486, %v5485
      %v5488 = vrot.slane %v5394, 5
      %v5489 = vsel %vm5422, %v5488, %v5487
      %5490 = vrot.lane.b32.xlu0 %v5489, 64
      %v5491 = vpop.permute.xlu0 %5490
      %v5493 = vrot.slane %v5387, 5
      %v5494 = vrot.slane %v5388, 4
      %v5495 = vsel %vm5404, %v5494, %v5493
      %v5496 = vrot.slane %v5389, 3
      %v5497 = vsel %vm5407, %v5496, %v5495
      %v5498 = vrot.slane %v5390, 2
      %v5499 = vsel %vm5410, %v5498, %v5497
      %v5500 = vrot.slane %v5391, 1
      %v5501 = vsel %vm5413, %v5500, %v5499
      %v5502 = vsel %vm5416, %v5392, %v5501
      %v5503 = vrot.slane %v5393, 7
      %v5504 = vsel %vm5419, %v5503, %v5502
      %v5505 = vrot.slane %v5394, 6
      %v5506 = vsel %vm5422, %v5505, %v5504
      %5507 = vrot.lane.b32.xlu0 %v5506, 80
      %v5508 = vpop.permute.xlu0 %5507
      %v5510 = vrot.slane %v5387, 6
      %v5511 = vrot.slane %v5388, 5
      %v5512 = vsel %vm5404, %v5511, %v5510
      %v5513 = vrot.slane %v5389, 4
      %v5514 = vsel %vm5407, %v5513, %v5512
      %v5515 = vrot.slane %v5390, 3
      %v5516 = vsel %vm5410, %v5515, %v5514
      %v5517 = vrot.slane %v5391, 2
      %v5518 = vsel %vm5413, %v5517, %v5516
      %v5519 = vrot.slane %v5392, 1
      %v5520 = vsel %vm5416, %v5519, %v5518
      %v5521 = vsel %vm5419, %v5393, %v5520
      %v5522 = vrot.slane %v5394, 7
      %v5523 = vsel %vm5422, %v5522, %v5521
      %5524 = vrot.lane.b32.xlu0 %v5523, 96
      %v5525 = vpop.permute.xlu0 %5524
      %v5527 = vrot.slane %v5387, 7
      %v5528 = vrot.slane %v5388, 6
      %v5529 = vsel %vm5404, %v5528, %v5527
      %v5530 = vrot.slane %v5389, 5
      %v5531 = vsel %vm5407, %v5530, %v5529
      %v5532 = vrot.slane %v5390, 4
      %v5533 = vsel %vm5410, %v5532, %v5531
      %v5534 = vrot.slane %v5391, 3
      %v5535 = vsel %vm5413, %v5534, %v5533
      %v5536 = vrot.slane %v5392, 2
      %v5537 = vsel %vm5416, %v5536, %v5535
      %v5538 = vrot.slane %v5393, 1
      %v5539 = vsel %vm5419, %v5538, %v5537
      %v5540 = vsel %vm5422, %v5394, %v5539
      %5541 = vrot.lane.b32.xlu0 %v5540, 112
      %v5542 = vpop.permute.xlu0 %5541
      %v5544 = vsel %vm2540, %v5423, %v5440
      %vm5545 = vcmask 261120
      %v5546 = vsel %vm5545, %v5544, %v5457
      %vm5547 = vcmask 392192
      %v5548 = vsel %vm5547, %v5546, %v5474
      %vm5549 = vcmask 523264
      %v5550 = vsel %vm5549, %v5548, %v5491
      %vm5551 = vcmask 654336
      %v5552 = vsel %vm5551, %v5550, %v5508
      %vm5553 = vcmask 785408
      %v5554 = vsel %vm5553, %v5552, %v5525
      %vm5555 = vcmask 916480
      %v5556 = vsel %vm5555, %v5554, %v5542
      %5557 = vst [vmem:[%s337] sm:$0xff] %v5556
      %v5558 = vsel %vm2540, %v5128, 0.0
      %v5559 = vsel %vm2540, %v5129, 0.0
      %v5560 = vadd.f32 %v5558, %v5559
      %v5561 = vsel %vm2540, %v5130, 0.0
      %v5562 = vadd.f32 %v5560, %v5561
      %v5563 = vsel %vm2540, %v5131, 0.0
      %v5564 = vadd.f32 %v5562, %v5563
      %v5565 = vsel %vm2540, %v5132, 0.0
      %v5566 = vadd.f32 %v5564, %v5565
      %v5567 = vsel %vm2540, %v5133, 0.0
      %v5568 = vadd.f32 %v5566, %v5567
      %v5569 = vsel %vm2540, %v5134, 0.0
      %v5570 = vadd.f32 %v5568, %v5569
      %v5571 = vsel %vm2540, %v5135, 0.0
      %v5572 = vadd.f32 %v5570, %v5571
      %v5573 = vrot.slane %v5572, 4
      %v5574 = vadd.f32 %v5572, %v5573
      %v5575 = vrot.slane %v5574, 2
      %v5576 = vadd.f32 %v5574, %v5575
      %v5577 = vrot.slane %v5576, 1
      %v5578 = vadd.f32 %v5576, %v5577
      %v5579 = vmul.f32 %v5128, %v5128
      %v5580 = vmul.f32 %v5129, %v5129
      %v5581 = vmul.f32 %v5130, %v5130
      %v5582 = vmul.f32 %v5131, %v5131
      %v5583 = vmul.f32 %v5132, %v5132
      %v5584 = vmul.f32 %v5133, %v5133
      %v5585 = vmul.f32 %v5134, %v5134
      %v5586 = vmul.f32 %v5135, %v5135
      %v5587 = vsel %vm2540, %v5579, 0.0
      %v5588 = vsel %vm2540, %v5580, 0.0
      %v5589 = vadd.f32 %v5587, %v5588
      %v5590 = vsel %vm2540, %v5581, 0.0
      %v5591 = vadd.f32 %v5589, %v5590
      %v5592 = vsel %vm2540, %v5582, 0.0
      %v5593 = vadd.f32 %v5591, %v5592
      %v5594 = vsel %vm2540, %v5583, 0.0
      %v5595 = vadd.f32 %v5593, %v5594
      %v5596 = vsel %vm2540, %v5584, 0.0
      %v5597 = vadd.f32 %v5595, %v5596
      %v5598 = vsel %vm2540, %v5585, 0.0
      %v5599 = vadd.f32 %v5597, %v5598
      %v5600 = vsel %vm2540, %v5586, 0.0
      %v5601 = vadd.f32 %v5599, %v5600
      %v5602 = vrot.slane %v5601, 4
      %v5603 = vadd.f32 %v5601, %v5602
      %v5604 = vrot.slane %v5603, 2
      %v5605 = vadd.f32 %v5603, %v5604
      %v5606 = vrot.slane %v5605, 1
      %v5607 = vadd.f32 %v5605, %v5606
      %v5609 = vsel %vm2540, %v5578, 0
      %5611 = vmatprep.subr.mxu0 0.0
      %5612 = vmatpush1.msra.mxu0 0.0
      %5613 = vmatprep.subr.mxu0 0.0
      %5614 = vmatpush1.msra.mxu0 0.0
      %5615 = vmatprep.subr.mxu0 0.0
      %5616 = vmatpush1.msra.mxu0 0.0
      %5617 = vmatprep.subr.mxu0 0.0
      %5618 = vmatpush1.msra.mxu0 0.0
      %5619 = vmatprep.subr.mxu0 0.0
      %5620 = vmatpush1.msra.mxu0 0.0
      %5621 = vmatprep.subr.mxu0 0.0
      %5622 = vmatpush1.msra.mxu0 0.0
      %5623 = vmatprep.subr.mxu0 0.0
      %5624 = vmatpush1.msra.mxu0 0.0
      %5625 = vmatprep.subr.mxu0 0.0
      %5626 = vmatpush1.msra.mxu0 0.0
      %5627 = vmatprep.subr.mxu0 0.0
      %5628 = vmatpush1.msra.mxu0 0.0
      %5629 = vmatprep.subr.mxu0 0.0
      %5630 = vmatpush1.msra.mxu0 0.0
      %5631 = vmatprep.subr.mxu0 0.0
      %5632 = vmatpush1.msra.mxu0 0.0
      %5633 = vmatprep.subr.mxu0 0.0
      %5634 = vmatpush1.msra.mxu0 0.0
      %5635 = vmatprep.subr.mxu0 0.0
      %5636 = vmatpush1.msra.mxu0 0.0
      %5637 = vmatprep.subr.mxu0 0.0
      %5638 = vmatpush1.msra.mxu0 0.0
      %5639 = vmatprep.subr.mxu0 0.0
      %5640 = vmatpush1.msra.mxu0 %v5139
      %5641 = vmatprep.subr.mxu0 0.0
      %5642 = vmatpush1.msra.mxu0 %v5138
      %5643 = vmatprep.subr.mxu0 0.0
      %5644 = vmatpush2.msra.mxu0 0.0
      %5645 = vmatprep.subr.mxu0 0.0
      %5646 = vmatpush2.msra.mxu0 0.0
      %5647 = vmatprep.subr.mxu0 0.0
      %5648 = vmatpush2.msra.mxu0 0.0
      %5649 = vmatprep.subr.mxu0 0.0
      %5650 = vmatpush2.msra.mxu0 0.0
      %5651 = vmatprep.subr.mxu0 0.0
      %5652 = vmatpush2.msra.mxu0 0.0
      %5653 = vmatprep.subr.mxu0 0.0
      %5654 = vmatpush2.msra.mxu0 0.0
      %5655 = vmatprep.subr.mxu0 0.0
      %5656 = vmatpush2.msra.mxu0 0.0
      %5657 = vmatprep.subr.mxu0 0.0
      %5658 = vmatpush2.msra.mxu0 0.0
      %5659 = vmatprep.subr.mxu0 0.0
      %5660 = vmatpush2.msra.mxu0 0.0
      %5661 = vmatprep.subr.mxu0 0.0
      %5662 = vmatpush2.msra.mxu0 0.0
      %5663 = vmatprep.subr.mxu0 0.0
      %5664 = vmatpush2.msra.mxu0 0.0
      %5665 = vmatprep.subr.mxu0 0.0
      %5666 = vmatpush2.msra.mxu0 0.0
      %5667 = vmatprep.subr.mxu0 0.0
      %5668 = vmatpush2.msra.mxu0 0.0
      %5669 = vmatprep.subr.mxu0 0.0
      %5670 = vmatpush2.msra.mxu0 0.0
      %5671 = vmatprep.subr.mxu0 0.0
      %5672 = vmatpush2.msra.mxu0 0.0
      %5673 = vmatprep.subr.mxu0 0.0
      %5674 = vmatpush2.msra.mxu0 0.0
      %5675 = vmatprep.mubr.f32.mxu0 0.0
      %5676 = vmatmul.mubr.f32.gmra.mxu0 %v5609
      %v5677 = vpop.f32.mrf.mxu0
      %v5678 = vadd.f32 0.0, %v5677
      %v5679 = vpop.f32.mrf.mxu0
      %5680 = vdwg.mxu0
      %v5682 = vsel %vm2540, %v5607, 0
      %5684 = vmatprep.subr.mxu0 0.0
      %5685 = vmatpush1.msra.mxu0 0.0
      %5686 = vmatprep.subr.mxu0 0.0
      %5687 = vmatpush1.msra.mxu0 0.0
      %5688 = vmatprep.subr.mxu0 0.0
      %5689 = vmatpush1.msra.mxu0 0.0
      %5690 = vmatprep.subr.mxu0 0.0
      %5691 = vmatpush1.msra.mxu0 0.0
      %5692 = vmatprep.subr.mxu0 0.0
      %5693 = vmatpush1.msra.mxu0 0.0
      %5694 = vmatprep.subr.mxu0 0.0
      %5695 = vmatpush1.msra.mxu0 0.0
      %5696 = vmatprep.subr.mxu0 0.0
      %5697 = vmatpush1.msra.mxu0 0.0
      %5698 = vmatprep.subr.mxu0 0.0
      %5699 = vmatpush1.msra.mxu0 0.0
      %5700 = vmatprep.subr.mxu0 0.0
      %5701 = vmatpush1.msra.mxu0 0.0
      %5702 = vmatprep.subr.mxu0 0.0
      %5703 = vmatpush1.msra.mxu0 0.0
      %5704 = vmatprep.subr.mxu0 0.0
      %5705 = vmatpush1.msra.mxu0 0.0
      %5706 = vmatprep.subr.mxu0 0.0
      %5707 = vmatpush1.msra.mxu0 0.0
      %5708 = vmatprep.subr.mxu0 0.0
      %5709 = vmatpush1.msra.mxu0 0.0
      %5710 = vmatprep.subr.mxu0 0.0
      %5711 = vmatpush1.msra.mxu0 0.0
      %5712 = vmatprep.subr.mxu0 0.0
      %5713 = vmatpush1.msra.mxu0 %v5139
      %5714 = vmatprep.subr.mxu0 0.0
      %5715 = vmatpush1.msra.mxu0 %v5138
      %5716 = vmatprep.subr.mxu0 0.0
      %5717 = vmatpush2.msra.mxu0 0.0
      %5718 = vmatprep.subr.mxu0 0.0
      %5719 = vmatpush2.msra.mxu0 0.0
      %5720 = vmatprep.subr.mxu0 0.0
      %5721 = vmatpush2.msra.mxu0 0.0
      %5722 = vmatprep.subr.mxu0 0.0
      %5723 = vmatpush2.msra.mxu0 0.0
      %5724 = vmatprep.subr.mxu0 0.0
      %5725 = vmatpush2.msra.mxu0 0.0
      %5726 = vmatprep.subr.mxu0 0.0
      %5727 = vmatpush2.msra.mxu0 0.0
      %5728 = vmatprep.subr.mxu0 0.0
      %5729 = vmatpush2.msra.mxu0 0.0
      %5730 = vmatprep.subr.mxu0 0.0
      %5731 = vmatpush2.msra.mxu0 0.0
      %5732 = vmatprep.subr.mxu0 0.0
      %5733 = vmatpush2.msra.mxu0 0.0
      %5734 = vmatprep.subr.mxu0 0.0
      %5735 = vmatpush2.msra.mxu0 0.0
      %5736 = vmatprep.subr.mxu0 0.0
      %5737 = vmatpush2.msra.mxu0 0.0
      %5738 = vmatprep.subr.mxu0 0.0
      %5739 = vmatpush2.msra.mxu0 0.0
      %5740 = vmatprep.subr.mxu0 0.0
      %5741 = vmatpush2.msra.mxu0 0.0
      %5742 = vmatprep.subr.mxu0 0.0
      %5743 = vmatpush2.msra.mxu0 0.0
      %5744 = vmatprep.subr.mxu0 0.0
      %5745 = vmatpush2.msra.mxu0 0.0
      %5746 = vmatprep.subr.mxu0 0.0
      %5747 = vmatpush2.msra.mxu0 0.0
      %5748 = vmatprep.mubr.f32.mxu0 0.0
      %5749 = vmatmul.mubr.f32.gmra.mxu0 %v5682
      %v5750 = vpop.f32.mrf.mxu0
      %v5751 = vadd.f32 0.0, %v5750
      %v5752 = vpop.f32.mrf.mxu0
      %5753 = vdwg.mxu0
      %v5754 = vmul.f32 %v5678, 0.0078125
      %v5755 = vmul.f32 %v5751, 0.0078125
      %v5756 = vmul.f32 %v5754, %v5754
      %v5757 = vsub.f32 %v5755, %v5756
      %v5758 = vadd.f32 %v5757, 1e-05
      %v5759 = vrsqrt.pop %v5758
      %v5760 = vmul.f32 %v5759, %v5136
      %v5761 = vmul.f32 %v5754, %v5760
      %v5762 = vsub.f32 %v5137, %v5761
      %v5763 = vlaneseq
      %v5764 = vshrl.u32 %v5763, 7
      %v5765 = vsub.s32 0, %v5764
      %v5766 = vrot.slane %v5760, %v5765
      %v5767 = vmul.f32 %v5128, %v5766
      %v5768 = vmul.f32 %v5129, %v5766
      %v5769 = vmul.f32 %v5130, %v5766
      %v5770 = vmul.f32 %v5131, %v5766
      %v5771 = vmul.f32 %v5132, %v5766
      %v5772 = vmul.f32 %v5133, %v5766
      %v5773 = vmul.f32 %v5134, %v5766
      %v5774 = vmul.f32 %v5135, %v5766
      %v5776 = vlaneseq
      %v5777 = vshrl.u32 %v5776, 7
      %v5778 = vsub.s32 0, %v5777
      %v5779 = vrot.slane %v5762, %v5778
      %v5781 = vadd.f32 %v5767, %v5779
      %v5782 = vadd.f32 %v5768, %v5779
      %v5783 = vadd.f32 %v5769, %v5779
      %v5784 = vadd.f32 %v5770, %v5779
      %v5785 = vadd.f32 %v5771, %v5779
      %v5786 = vadd.f32 %v5772, %v5779
      %v5787 = vadd.f32 %v5773, %v5779
      %v5788 = vadd.f32 %v5774, %v5779
      %vm5789 = vcmp.ge.f32.partialorder %v5781, 0.0
      %vm5790 = vcmp.ge.f32.partialorder %v5782, 0.0
      %vm5791 = vcmp.ge.f32.partialorder %v5783, 0.0
      %vm5792 = vcmp.ge.f32.partialorder %v5784, 0.0
      %vm5793 = vcmp.ge.f32.partialorder %v5785, 0.0
      %vm5794 = vcmp.ge.f32.partialorder %v5786, 0.0
      %vm5795 = vcmp.ge.f32.partialorder %v5787, 0.0
      %vm5796 = vcmp.ge.f32.partialorder %v5788, 0.0
      %v5797 = vmul.f32 %v5781, 0.01
      %v5798 = vmul.f32 %v5782, 0.01
      %v5799 = vmul.f32 %v5783, 0.01
      %v5800 = vmul.f32 %v5784, 0.01
      %v5801 = vmul.f32 %v5785, 0.01
      %v5802 = vmul.f32 %v5786, 0.01
      %v5803 = vmul.f32 %v5787, 0.01
      %v5804 = vmul.f32 %v5788, 0.01
      %v5805 = vsel %vm5789, %v5781, %v5797
      %v5806 = vsel %vm5790, %v5782, %v5798
      %v5807 = vsel %vm5791, %v5783, %v5799
      %v5808 = vsel %vm5792, %v5784, %v5800
      %v5809 = vsel %vm5793, %v5785, %v5801
      %v5810 = vsel %vm5794, %v5786, %v5802
      %v5811 = vsel %vm5795, %v5787, %v5803
      %v5812 = vsel %vm5796, %v5788, %v5804
      %v5821 = vrot.slane %v5806, 7
      %v5822 = vsel %vm5404, %v5821, %v5805
      %v5823 = vrot.slane %v5807, 6
      %v5824 = vsel %vm5407, %v5823, %v5822
      %v5825 = vrot.slane %v5808, 5
      %v5826 = vsel %vm5410, %v5825, %v5824
      %v5827 = vrot.slane %v5809, 4
      %v5828 = vsel %vm5413, %v5827, %v5826
      %v5829 = vrot.slane %v5810, 3
      %v5830 = vsel %vm5416, %v5829, %v5828
      %v5831 = vrot.slane %v5811, 2
      %v5832 = vsel %vm5419, %v5831, %v5830
      %v5833 = vrot.slane %v5812, 1
      %v5834 = vsel %vm5422, %v5833, %v5832
      %v5836 = vrot.slane %v5805, 1
      %v5837 = vsel %vm5404, %v5806, %v5836
      %v5838 = vrot.slane %v5807, 7
      %v5839 = vsel %vm5407, %v5838, %v5837
      %v5840 = vrot.slane %v5808, 6
      %v5841 = vsel %vm5410, %v5840, %v5839
      %v5842 = vrot.slane %v5809, 5
      %v5843 = vsel %vm5413, %v5842, %v5841
      %v5844 = vrot.slane %v5810, 4
      %v5845 = vsel %vm5416, %v5844, %v5843
      %v5846 = vrot.slane %v5811, 3
      %v5847 = vsel %vm5419, %v5846, %v5845
      %v5848 = vrot.slane %v5812, 2
      %v5849 = vsel %vm5422, %v5848, %v5847
      %5850 = vrot.lane.b32.xlu0 %v5849, 16
      %v5851 = vpop.permute.xlu0 %5850
      %v5853 = vrot.slane %v5805, 2
      %v5854 = vrot.slane %v5806, 1
      %v5855 = vsel %vm5404, %v5854, %v5853
      %v5856 = vsel %vm5407, %v5807, %v5855
      %v5857 = vrot.slane %v5808, 7
      %v5858 = vsel %vm5410, %v5857, %v5856
      %v5859 = vrot.slane %v5809, 6
      %v5860 = vsel %vm5413, %v5859, %v5858
      %v5861 = vrot.slane %v5810, 5
      %v5862 = vsel %vm5416, %v5861, %v5860
      %v5863 = vrot.slane %v5811, 4
      %v5864 = vsel %vm5419, %v5863, %v5862
      %v5865 = vrot.slane %v5812, 3
      %v5866 = vsel %vm5422, %v5865, %v5864
      %5867 = vrot.lane.b32.xlu0 %v5866, 32
      %v5868 = vpop.permute.xlu0 %5867
      %v5870 = vrot.slane %v5805, 3
      %v5871 = vrot.slane %v5806, 2
      %v5872 = vsel %vm5404, %v5871, %v5870
      %v5873 = vrot.slane %v5807, 1
      %v5874 = vsel %vm5407, %v5873, %v5872
      %v5875 = vsel %vm5410, %v5808, %v5874
      %v5876 = vrot.slane %v5809, 7
      %v5877 = vsel %vm5413, %v5876, %v5875
      %v5878 = vrot.slane %v5810, 6
      %v5879 = vsel %vm5416, %v5878, %v5877
      %v5880 = vrot.slane %v5811, 5
      %v5881 = vsel %vm5419, %v5880, %v5879
      %v5882 = vrot.slane %v5812, 4
      %v5883 = vsel %vm5422, %v5882, %v5881
      %5884 = vrot.lane.b32.xlu0 %v5883, 48
      %v5885 = vpop.permute.xlu0 %5884
      %v5887 = vrot.slane %v5805, 4
      %v5888 = vrot.slane %v5806, 3
      %v5889 = vsel %vm5404, %v5888, %v5887
      %v5890 = vrot.slane %v5807, 2
      %v5891 = vsel %vm5407, %v5890, %v5889
      %v5892 = vrot.slane %v5808, 1
      %v5893 = vsel %vm5410, %v5892, %v5891
      %v5894 = vsel %vm5413, %v5809, %v5893
      %v5895 = vrot.slane %v5810, 7
      %v5896 = vsel %vm5416, %v5895, %v5894
      %v5897 = vrot.slane %v5811, 6
      %v5898 = vsel %vm5419, %v5897, %v5896
      %v5899 = vrot.slane %v5812, 5
      %v5900 = vsel %vm5422, %v5899, %v5898
      %5901 = vrot.lane.b32.xlu0 %v5900, 64
      %v5902 = vpop.permute.xlu0 %5901
      %v5904 = vrot.slane %v5805, 5
      %v5905 = vrot.slane %v5806, 4
      %v5906 = vsel %vm5404, %v5905, %v5904
      %v5907 = vrot.slane %v5807, 3
      %v5908 = vsel %vm5407, %v5907, %v5906
      %v5909 = vrot.slane %v5808, 2
      %v5910 = vsel %vm5410, %v5909, %v5908
      %v5911 = vrot.slane %v5809, 1
      %v5912 = vsel %vm5413, %v5911, %v5910
      %v5913 = vsel %vm5416, %v5810, %v5912
      %v5914 = vrot.slane %v5811, 7
      %v5915 = vsel %vm5419, %v5914, %v5913
      %v5916 = vrot.slane %v5812, 6
      %v5917 = vsel %vm5422, %v5916, %v5915
      %5918 = vrot.lane.b32.xlu0 %v5917, 80
      %v5919 = vpop.permute.xlu0 %5918
      %v5921 = vrot.slane %v5805, 6
      %v5922 = vrot.slane %v5806, 5
      %v5923 = vsel %vm5404, %v5922, %v5921
      %v5924 = vrot.slane %v5807, 4
      %v5925 = vsel %vm5407, %v5924, %v5923
      %v5926 = vrot.slane %v5808, 3
      %v5927 = vsel %vm5410, %v5926, %v5925
      %v5928 = vrot.slane %v5809, 2
      %v5929 = vsel %vm5413, %v5928, %v5927
      %v5930 = vrot.slane %v5810, 1
      %v5931 = vsel %vm5416, %v5930, %v5929
      %v5932 = vsel %vm5419, %v5811, %v5931
      %v5933 = vrot.slane %v5812, 7
      %v5934 = vsel %vm5422, %v5933, %v5932
      %5935 = vrot.lane.b32.xlu0 %v5934, 96
      %v5936 = vpop.permute.xlu0 %5935
      %v5938 = vrot.slane %v5805, 7
      %v5939 = vrot.slane %v5806, 6
      %v5940 = vsel %vm5404, %v5939, %v5938
      %v5941 = vrot.slane %v5807, 5
      %v5942 = vsel %vm5407, %v5941, %v5940
      %v5943 = vrot.slane %v5808, 4
      %v5944 = vsel %vm5410, %v5943, %v5942
      %v5945 = vrot.slane %v5809, 3
      %v5946 = vsel %vm5413, %v5945, %v5944
      %v5947 = vrot.slane %v5810, 2
      %v5948 = vsel %vm5416, %v5947, %v5946
      %v5949 = vrot.slane %v5811, 1
      %v5950 = vsel %vm5419, %v5949, %v5948
      %v5951 = vsel %vm5422, %v5812, %v5950
      %5952 = vrot.lane.b32.xlu0 %v5951, 112
      %v5953 = vpop.permute.xlu0 %5952
      %v5955 = vsel %vm2540, %v5834, %v5851
      %v5956 = vsel %vm5545, %v5955, %v5868
      %v5957 = vsel %vm5547, %v5956, %v5885
      %v5958 = vsel %vm5549, %v5957, %v5902
      %v5959 = vsel %vm5551, %v5958, %v5919
      %v5960 = vsel %vm5553, %v5959, %v5936
      %v5961 = vsel %vm5555, %v5960, %v5953
      %s5962 = scalar_lea.vmem %s337, 8
      %5963 = vst [vmem:[%s5962] sm:$0xff] %v5961
      %s5964 = smul.u32 2, %s20
      %p5965 = scmp.lt.s32.totalorder %s5964, 3
      %s5966 = scalar_select %p5965, %s5964, 3
      %s5967 = smul.addr %s5966, 8
      %s5968 = scalar_lea.vmem %s9, %s5967
      // Predicated region
      $region57: #{down_forward.1} parent=55 // pred_check
        %p5969 = pneg %p232
      $region58: #{down_forward.1} parent=55 // pred_check_branch
        %5971 = sbr.rel (%p5969) target = $region60
      $region59: #{down_forward.1} parent=55 // pred_region
        %s5972 = smul.u32 2, %s20
      $region60: #{down_forward.1} parent=55 // pred_fallthru
        _
    $region56: #{down_forward.1} parent=5 // pred_fallthru
      _
    %p5973 = scmp.le.s32.totalorder 2, %s15
    // Predicated region
    $region61: #{down_forward.1} parent=5 // pred_check
      %p5974 = pneg %p5973
    $region62: #{down_forward.1} parent=5 // pred_check_branch
      %5976 = sbr.rel (%p5974) target = $region64
    $region63: #{down_forward.1} parent=5 // pred_region
      %s5977 = ssub.s32 %s15, 2
      // Predicated region
      $region65: #{down_forward.1} parent=63 // pred_check
        %p5978 = pneg %p238
      $region66: #{down_forward.1} parent=63 // pred_check_branch
        %5980 = sbr.rel (%p5978) target = $region68
      $region67: #{down_forward.1} parent=63 // pred_region
        %s5981 = smul.u32 2, %s21
        %p5982 = scmp.lt.s32.totalorder %s5981, 3
        %s5983 = scalar_select %p5982, %s5981, 3
        %s5984 = smul.addr %s5983, 8
        %s5985 = scalar_lea.vmem %s9, %s5984
      $region68: #{down_forward.1} parent=63 // pred_fallthru
        _
    $region64: #{down_forward.1} parent=5 // pred_fallthru
      _
  $region6: #{down_forward.1} parent=0 // loop_footer
    %s19 = sadd.s32 1, %s15
  $region7: #{down_forward.1} parent=0 // loop_footer_branch
    %14 = sbr.rel target = $region3
  $region8: #{down_forward.1} parent=0 // loop_exit
    _

</llo_original>
